<compile_context>
chip_gen: v6e
topology: v6e:2x2x1
jax: 0.10.0
libtpu: 0.0.40
codegen_flags: <defaults>
</compile_context>

<pallas_src>
import functools

import numpy as np
import jax
import jax.numpy as jnp
from jax.experimental import pallas as pl
from jax.experimental.pallas import tpu as pltpu

LANE = 128
_CONV_STRIDES = (4, 2, 1)


def _round_up(n, m):
    return ((n + m - 1) // m) * m


def _pad_to(a, shape):
    return jnp.pad(a, [(0, s - d) for d, s in zip(a.shape, shape)])


# ----------------------------------------------------------------------------
# Fused forward kernel: one grid step == one batch element.
# ----------------------------------------------------------------------------
def _qlearner_kernel(p1_ref, w1_ref, b1_ref,
                     sel2_ref, w2_ref, b2_ref,
                     sel3_ref, w3_ref, b3_ref,
                     wf1_ref, bf1_ref, wf2_ref, bf2_ref,
                     o_ref):
    f32 = jnp.float32
    dot = functools.partial(jnp.dot, preferred_element_type=f32)

    # conv1: single lane-dense GEMM on the pre-gathered im2col block.
    a1 = jnp.maximum(dot(p1_ref[0], w1_ref[...]) + b1_ref[...], 0.0)   # (M1,128)

    # conv2: per-kernel-offset accumulation; row gather expressed as a constant
    # 0/1 selection matmul so everything is contiguous slices + MXU matmuls.
    acc2 = jnp.zeros((sel2_ref.shape[1], w2_ref.shape[2]), f32)
    for o in range(sel2_ref.shape[0]):
        acc2 = acc2 + dot(dot(sel2_ref[o], a1), w2_ref[o])
    a2 = jnp.maximum(acc2 + b2_ref[...], 0.0)                          # (M2,128)

    # conv3: same scheme.
    acc3 = jnp.zeros((sel3_ref.shape[1], w3_ref.shape[2]), f32)
    for o in range(sel3_ref.shape[0]):
        acc3 = acc3 + dot(dot(sel3_ref[o], a2), w3_ref[o])
    a3 = jnp.maximum(acc3 + b3_ref[...], 0.0)                          # (M3,128)

    # fc1: accumulate over conv3 spatial positions (the NCHW flatten never
    # leaves VMEM; fc1 weights were pre-permuted to match at prep time).
    h = jnp.zeros((1, wf1_ref.shape[2]), f32)
    for p in range(wf1_ref.shape[0]):
        h = h + dot(a3[p:p + 1, :], wf1_ref[p])
    h = jnp.maximum(h + bf1_ref[...], 0.0)                             # (1,512)

    # fc2: output padded to 128 lanes; wrapper slices the real actions out.
    o_ref[0] = (dot(h, wf2_ref[...]) + bf2_ref[...]).astype(o_ref.dtype)


# ----------------------------------------------------------------------------
# One-time parameter transformation (review item: no per-forward .T / reshape)
# ----------------------------------------------------------------------------
def _make_sel(ih, iw, kh, kw, s):
    """sel[o, p, r] = 1 iff input row r feeds output position p at offset o."""
    oh = (ih - kh) // s + 1
    ow = (iw - kw) // s + 1
    sel = np.zeros((kh * kw, oh * ow, ih * iw), np.float32)
    for ki in range(kh):
        for kj in range(kw):
            o = ki * kw + kj
            for t in range(oh):
                for u in range(ow):
                    sel[o, t * ow + u, (s * t + ki) * iw + (s * u + kj)] = 1.0
    return jnp.asarray(sel)


def prepare_params(params, h, w):
    s1, s2, s3 = _CONV_STRIDES
    c1o, cin, k1h, k1w = params["c1_w"].shape
    c2o, _, k2h, k2w = params["c2_w"].shape
    c3o, _, k3h, k3w = params["c3_w"].shape
    num_actions, fc_hidden = params["fc2_w"].shape

    oh1, ow1 = (h - k1h) // s1 + 1, (w - k1w) // s1 + 1
    oh2, ow2 = (oh1 - k2h) // s2 + 1, (ow1 - k2w) // s2 + 1
    oh3, ow3 = (oh2 - k3h) // s3 + 1, (ow2 - k3w) // s3 + 1
    assert min(oh1, ow1, oh2, ow2, oh3, ow3) >= 1, "input too small"
    m1, m2, m3 = oh1 * ow1, oh2 * ow2, oh3 * ow3
    k1 = cin * k1h * k1w
    c1p, c2p, c3p = (_round_up(c, LANE) for c in (c1o, c2o, c3o))
    nap = _round_up(num_actions, LANE)
    assert params["fc1_w"].shape[1] == c3o * m3

    f32 = jnp.float32
    w1m = _pad_to(params["c1_w"].astype(f32).transpose(2, 3, 1, 0)
                  .reshape(k1, c1o), (k1, c1p))
    b1m = _pad_to(params["c1_b"].astype(f32).reshape(1, c1o), (1, c1p))
    w2m = _pad_to(params["c2_w"].astype(f32).transpose(2, 3, 1, 0)
                  .reshape(k2h * k2w, c1o, c2o), (k2h * k2w, c1p, c2p))
    b2m = _pad_to(params["c2_b"].astype(f32).reshape(1, c2o), (1, c2p))
    w3m = _pad_to(params["c3_w"].astype(f32).transpose(2, 3, 1, 0)
                  .reshape(k3h * k3w, c2o, c3o), (k3h * k3w, c2p, c3p))
    b3m = _pad_to(params["c3_b"].astype(f32).reshape(1, c3o), (1, c3p))
    # fc1_w is (512, c3o*m3) with PyTorch NCHW flatten order c*m3 + p.
    wf1 = _pad_to(jnp.transpose(params["fc1_w"].astype(f32)
                                .reshape(fc_hidden, c3o, m3), (2, 1, 0)),
                  (m3, c3p, fc_hidden))
    bf1 = params["fc1_b"].astype(f32).reshape(1, fc_hidden)
    wf2 = _pad_to(params["fc2_w"].astype(f32).T, (fc_hidden, nap))
    bf2 = _pad_to(params["fc2_b"].astype(f32).reshape(1, num_actions), (1, nap))

    sel2 = _make_sel(oh1, ow1, k2h, k2w, s2)      # (k2h*k2w, m2, m1)
    sel3 = _make_sel(oh2, ow2, k3h, k3w, s3)      # (k3h*k3w, m3, m2)

    cfg = dict(m1=m1, k1=k1, k1h=k1h, k1w=k1w, s1=s1,
               nap=nap, num_actions=num_actions)
    tensors = (w1m, b1m, sel2, w2m, b2m, sel3, w3m, b3m, wf1, bf1, wf2, bf2)
    return cfg, tensors


# ----------------------------------------------------------------------------
# Glue: NHWC channel-minor im2col of the *network input* only.
# ----------------------------------------------------------------------------
def _im2col_nhwc(x, kh, kw, s):
    B, H, W, C = x.shape
    oh = (H - kh) // s + 1
    ow = (W - kw) // s + 1
    cols = []
    for ki in range(kh):
        for kj in range(kw):
            cols.append(x[:, ki:ki + s * (oh - 1) + 1:s,
                          kj:kj + s * (ow - 1) + 1:s, :])
    p = jnp.stack(cols, axis=3)                       # (B, oh, ow, kh*kw, C)
    return p.reshape(B, oh * ow, kh * kw * C)         # col = (ki*kw+kj)*C + c


def make_qlearner_forward(cfg, tensors):
    def _const_map(rank):
        return lambda b: (0,) * rank

    @jax.jit
    def forward(x):
        B = x.shape[0]
        x_nhwc = jnp.transpose(x.astype(jnp.float32), (0, 2, 3, 1))
        p1 = _im2col_nhwc(x_nhwc, cfg["k1h"], cfg["k1w"], cfg["s1"])
        assert p1.shape == (B, cfg["m1"], cfg["k1"])

        in_specs = [pl.BlockSpec((1, cfg["m1"], cfg["k1"]),
                                 lambda b: (b, 0, 0))]
        for t in tensors:                             # resident full-array blocks
            in_specs.append(pl.BlockSpec(tuple(t.shape), _const_map(t.ndim)))

        out = pl.pallas_call(
            _qlearner_kernel,
            out_shape=jax.ShapeDtypeStruct((B, 1, cfg["nap"]), jnp.float32),
            grid=(B,),
            in_specs=in_specs,
            out_specs=pl.BlockSpec((1, 1, cfg["nap"]), lambda b: (b, 0, 0)),
            compiler_params=pltpu.CompilerParams(
                dimension_semantics=("parallel",),
                vmem_limit_bytes=32 * 1024 * 1024),
        )(p1, *tensors)
        return out[:, 0, :cfg["num_actions"]]

    return forward


# ----------------------------------------------------------------------------
# PyTorch-layout parameter init (mirrors nn.Conv2d / nn.Linear defaults)
# ----------------------------------------------------------------------------
def conv_out_hw(h, w):
    h = (h - 8) // 4 + 1; w = (w - 8) // 4 + 1
    h = (h - 4) // 2 + 1; w = (w - 4) // 2 + 1
    h = (h - 3) // 1 + 1; w = (w - 3) // 1 + 1
    return h, w


def init_params(key, in_channels, h, w, num_actions):
    oh, ow = conv_out_hw(h, w)
    feat = 64 * oh * ow
    shapes = {
        "c1_w": (32, in_channels, 8, 8), "c1_b": (32,),
        "c2_w": (64, 32, 4, 4),          "c2_b": (64,),
        "c3_w": (64, 64, 3, 3),          "c3_b": (64,),
        "fc1_w": (512, feat),            "fc1_b": (512,),
        "fc2_w": (num_actions, 512),     "fc2_b": (num_actions,),
    }
    fan_in = {"c1": in_channels * 64, "c2": 32 * 16, "c3": 64 * 9,
              "fc1": feat, "fc2": 512}
    params = {}
    keys = jax.random.split(key, len(shapes))
    for k_rng, (name, shp) in zip(keys, sorted(shapes.items())):
        bound = 1.0 / jnp.sqrt(jnp.float32(fan_in[name.split("_")[0]]))
        params[name] = jax.random.uniform(k_rng, shp, jnp.float32,
                                          minval=-bound, maxval=bound)
    return params


# ----------------------------------------------------------------------------
# Pure-JAX (XLA conv) reference for correctness check
# ----------------------------------------------------------------------------
def qlearner_forward_ref(params, x):
    def conv(x, w, b, s):
        y = jax.lax.conv_general_dilated(
            x, w, (s, s), "VALID", dimension_numbers=("NCHW", "OIHW", "NCHW"))
        return jnp.maximum(y + b[None, :, None, None], 0.0)
    x = conv(x, params["c1_w"], params["c1_b"], 4)
    x = conv(x, params["c2_w"], params["c2_b"], 2)
    x = conv(x, params["c3_w"], params["c3_b"], 1)
    x = x.reshape(x.shape[0], -1)
    x = jnp.maximum(x @ params["fc1_w"].T + params["fc1_b"], 0.0)
    return x @ params["fc2_w"].T + params["fc2_b"]


if __name__ == "__main__":
    # 4 stacked frames, 40x40 observations, 6 actions, batch of 2.
    B, C, H, W = 2, 4, 40, 40
    NUM_ACTIONS = 6

    key = jax.random.PRNGKey(0)
    k_params, k_x = jax.random.split(key)
    params = init_params(k_params, C, H, W, NUM_ACTIONS)
    x = jax.random.uniform(k_x, (B, C, H, W), jnp.float32)

    cfg, tensors = prepare_params(params, H, W)        # one-time transform
    forward = make_qlearner_forward(cfg, tensors)

    q_values = jax.block_until_ready(forward(x))
    assert q_values.shape == (B, NUM_ACTIONS), q_values.shape
    assert q_values.dtype == jnp.float32

    ref = jax.block_until_ready(qlearner_forward_ref(params, x))
    assert jnp.allclose(q_values, ref, rtol=1e-4, atol=1e-4), (
        float(jnp.max(jnp.abs(q_values - ref))))

    # TODO(synk): act()'s epsilon-greedy branch uses host-side python RNG /
    # control flow and the env/replay buffer; not part of the tensor forward.
    print("KERNEL_OK")
</pallas_src>

<mosaic_0001>
module attributes {stable_mosaic.version = 11 : i64} {
  func.func @_qlearner_kernel(%arg0: i32, %arg1: memref<1x81x256xf32, #tpu.memory_space<vmem>>, %arg2: memref<256x128xf32, #tpu.memory_space<vmem>>, %arg3: memref<1x128xf32, #tpu.memory_space<vmem>>, %arg4: memref<16x9x81xf32, #tpu.memory_space<vmem>>, %arg5: memref<16x128x128xf32, #tpu.memory_space<vmem>>, %arg6: memref<1x128xf32, #tpu.memory_space<vmem>>, %arg7: memref<9x1x9xf32, #tpu.memory_space<vmem>>, %arg8: memref<9x128x128xf32, #tpu.memory_space<vmem>>, %arg9: memref<1x128xf32, #tpu.memory_space<vmem>>, %arg10: memref<1x128x512xf32, #tpu.memory_space<vmem>>, %arg11: memref<1x512xf32, #tpu.memory_space<vmem>>, %arg12: memref<512x128xf32, #tpu.memory_space<vmem>>, %arg13: memref<1x128xf32, #tpu.memory_space<vmem>>, %arg14: memref<1x1x128xf32, #tpu.memory_space<vmem>>) attributes {dimension_semantics = [#tpu.dimension_semantics<parallel>], iteration_bounds = array<i64: 2>, scalar_prefetch = 0 : i64, scratch_operands = 0 : i64, tpu.core_type = #tpu.core_type<tc>, window_params = [{transform_indices = @transform_0, window_bounds = array<i64: 1, 81, 256>}, {pipeline_mode = #tpu.pipeline_mode<synchronous>, transform_indices = @transform_1, window_bounds = array<i64: 256, 128>}, {pipeline_mode = #tpu.pipeline_mode<synchronous>, transform_indices = @transform_2, window_bounds = array<i64: 1, 128>}, {pipeline_mode = #tpu.pipeline_mode<synchronous>, transform_indices = @transform_3, window_bounds = array<i64: 16, 9, 81>}, {pipeline_mode = #tpu.pipeline_mode<synchronous>, transform_indices = @transform_4, window_bounds = array<i64: 16, 128, 128>}, {pipeline_mode = #tpu.pipeline_mode<synchronous>, transform_indices = @transform_5, window_bounds = array<i64: 1, 128>}, {pipeline_mode = #tpu.pipeline_mode<synchronous>, transform_indices = @transform_6, window_bounds = array<i64: 9, 1, 9>}, {pipeline_mode = #tpu.pipeline_mode<synchronous>, transform_indices = @transform_7, window_bounds = array<i64: 9, 128, 128>}, {pipeline_mode = #tpu.pipeline_mode<synchronous>, transform_indices = @transform_8, window_bounds = array<i64: 1, 128>}, {pipeline_mode = #tpu.pipeline_mode<synchronous>, transform_indices = @transform_9, window_bounds = array<i64: 1, 128, 512>}, {pipeline_mode = #tpu.pipeline_mode<synchronous>, transform_indices = @transform_10, window_bounds = array<i64: 1, 512>}, {pipeline_mode = #tpu.pipeline_mode<synchronous>, transform_indices = @transform_11, window_bounds = array<i64: 512, 128>}, {pipeline_mode = #tpu.pipeline_mode<synchronous>, transform_indices = @transform_12, window_bounds = array<i64: 1, 128>}, {transform_indices = @transform_13, window_bounds = array<i64: 1, 1, 128>}]} {
    %c0 = arith.constant 0 : index
    %c0_0 = arith.constant 0 : index
    %c0_1 = arith.constant 0 : index
    %0 = vector.load %arg1[%c0, %c0_0, %c0_1] : memref<1x81x256xf32, #tpu.memory_space<vmem>>, vector<1x81x256xf32>
    %1 = vector.shape_cast %0 : vector<1x81x256xf32> to vector<81x256xf32>
    %c0_2 = arith.constant 0 : index
    %c0_3 = arith.constant 0 : index
    %2 = vector.load %arg2[%c0_2, %c0_3] : memref<256x128xf32, #tpu.memory_space<vmem>>, vector<256x128xf32>
    %cst = arith.constant dense<0.000000e+00> : vector<81x128xf32>
    %3 = tpu.matmul %1, %2, %cst {dimension_numbers = #tpu.dot_dimension_numbers<[1], [0], [0], [1], [0, 0, 1, 1], [], []>} : vector<81x256xf32>, vector<256x128xf32>, vector<81x128xf32> -> vector<81x128xf32>
    %c0_4 = arith.constant 0 : index
    %c0_5 = arith.constant 0 : index
    %4 = vector.load %arg3[%c0_4, %c0_5] : memref<1x128xf32, #tpu.memory_space<vmem>>, vector<1x128xf32>
    %5 = vector.broadcast %4 : vector<1x128xf32> to vector<81x128xf32>
    %6 = arith.addf %3, %5 : vector<81x128xf32>
    %cst_6 = arith.constant 0.000000e+00 : f32
    %7 = vector.broadcast %cst_6 : f32 to vector<81x128xf32>
    %8 = arith.maximumf %6, %7 : vector<81x128xf32>
    %cst_7 = arith.constant 0.000000e+00 : f32
    %9 = vector.broadcast %cst_7 : f32 to vector<9x128xf32>
    %c0_8 = arith.constant 0 : index
    %c0_9 = arith.constant 0 : index
    %c0_10 = arith.constant 0 : index
    %10 = vector.load %arg4[%c0_8, %c0_9, %c0_10] : memref<16x9x81xf32, #tpu.memory_space<vmem>>, vector<1x9x81xf32>
    %11 = vector.shape_cast %10 : vector<1x9x81xf32> to vector<9x81xf32>
    %cst_11 = arith.constant dense<0.000000e+00> : vector<9x128xf32>
    %12 = tpu.matmul %11, %8, %cst_11 {dimension_numbers = #tpu.dot_dimension_numbers<[1], [0], [0], [1], [0, 0, 1, 1], [], []>} : vector<9x81xf32>, vector<81x128xf32>, vector<9x128xf32> -> vector<9x128xf32>
    %c0_12 = arith.constant 0 : index
    %c0_13 = arith.constant 0 : index
    %c0_14 = arith.constant 0 : index
    %13 = vector.load %arg5[%c0_12, %c0_13, %c0_14] : memref<16x128x128xf32, #tpu.memory_space<vmem>>, vector<1x128x128xf32>
    %14 = vector.shape_cast %13 : vector<1x128x128xf32> to vector<128x128xf32>
    %cst_15 = arith.constant dense<0.000000e+00> : vector<9x128xf32>
    %15 = tpu.matmul %12, %14, %cst_15 {dimension_numbers = #tpu.dot_dimension_numbers<[1], [0], [0], [1], [0, 0, 1, 1], [], []>} : vector<9x128xf32>, vector<128x128xf32>, vector<9x128xf32> -> vector<9x128xf32>
    %16 = arith.addf %9, %15 : vector<9x128xf32>
    %c1 = arith.constant 1 : index
    %c0_16 = arith.constant 0 : index
    %c0_17 = arith.constant 0 : index
    %17 = vector.load %arg4[%c1, %c0_16, %c0_17] : memref<16x9x81xf32, #tpu.memory_space<vmem>>, vector<1x9x81xf32>
    %18 = vector.shape_cast %17 : vector<1x9x81xf32> to vector<9x81xf32>
    %cst_18 = arith.constant dense<0.000000e+00> : vector<9x128xf32>
    %19 = tpu.matmul %18, %8, %cst_18 {dimension_numbers = #tpu.dot_dimension_numbers<[1], [0], [0], [1], [0, 0, 1, 1], [], []>} : vector<9x81xf32>, vector<81x128xf32>, vector<9x128xf32> -> vector<9x128xf32>
    %c1_19 = arith.constant 1 : index
    %c0_20 = arith.constant 0 : index
    %c0_21 = arith.constant 0 : index
    %20 = vector.load %arg5[%c1_19, %c0_20, %c0_21] : memref<16x128x128xf32, #tpu.memory_space<vmem>>, vector<1x128x128xf32>
    %21 = vector.shape_cast %20 : vector<1x128x128xf32> to vector<128x128xf32>
    %cst_22 = arith.constant dense<0.000000e+00> : vector<9x128xf32>
    %22 = tpu.matmul %19, %21, %cst_22 {dimension_numbers = #tpu.dot_dimension_numbers<[1], [0], [0], [1], [0, 0, 1, 1], [], []>} : vector<9x128xf32>, vector<128x128xf32>, vector<9x128xf32> -> vector<9x128xf32>
    %23 = arith.addf %16, %22 : vector<9x128xf32>
    %c2 = arith.constant 2 : index
    %c0_23 = arith.constant 0 : index
    %c0_24 = arith.constant 0 : index
    %24 = vector.load %arg4[%c2, %c0_23, %c0_24] : memref<16x9x81xf32, #tpu.memory_space<vmem>>, vector<1x9x81xf32>
    %25 = vector.shape_cast %24 : vector<1x9x81xf32> to vector<9x81xf32>
    %cst_25 = arith.constant dense<0.000000e+00> : vector<9x128xf32>
    %26 = tpu.matmul %25, %8, %cst_25 {dimension_numbers = #tpu.dot_dimension_numbers<[1], [0], [0], [1], [0, 0, 1, 1], [], []>} : vector<9x81xf32>, vector<81x128xf32>, vector<9x128xf32> -> vector<9x128xf32>
    %c2_26 = arith.constant 2 : index
    %c0_27 = arith.constant 0 : index
    %c0_28 = arith.constant 0 : index
    %27 = vector.load %arg5[%c2_26, %c0_27, %c0_28] : memref<16x128x128xf32, #tpu.memory_space<vmem>>, vector<1x128x128xf32>
    %28 = vector.shape_cast %27 : vector<1x128x128xf32> to vector<128x128xf32>
    %cst_29 = arith.constant dense<0.000000e+00> : vector<9x128xf32>
    %29 = tpu.matmul %26, %28, %cst_29 {dimension_numbers = #tpu.dot_dimension_numbers<[1], [0], [0], [1], [0, 0, 1, 1], [], []>} : vector<9x128xf32>, vector<128x128xf32>, vector<9x128xf32> -> vector<9x128xf32>
    %30 = arith.addf %23, %29 : vector<9x128xf32>
    %c3 = arith.constant 3 : index
    %c0_30 = arith.constant 0 : index
    %c0_31 = arith.constant 0 : index
    %31 = vector.load %arg4[%c3, %c0_30, %c0_31] : memref<16x9x81xf32, #tpu.memory_space<vmem>>, vector<1x9x81xf32>
    %32 = vector.shape_cast %31 : vector<1x9x81xf32> to vector<9x81xf32>
    %cst_32 = arith.constant dense<0.000000e+00> : vector<9x128xf32>
    %33 = tpu.matmul %32, %8, %cst_32 {dimension_numbers = #tpu.dot_dimension_numbers<[1], [0], [0], [1], [0, 0, 1, 1], [], []>} : vector<9x81xf32>, vector<81x128xf32>, vector<9x128xf32> -> vector<9x128xf32>
    %c3_33 = arith.constant 3 : index
    %c0_34 = arith.constant 0 : index
    %c0_35 = arith.constant 0 : index
    %34 = vector.load %arg5[%c3_33, %c0_34, %c0_35] : memref<16x128x128xf32, #tpu.memory_space<vmem>>, vector<1x128x128xf32>
    %35 = vector.shape_cast %34 : vector<1x128x128xf32> to vector<128x128xf32>
    %cst_36 = arith.constant dense<0.000000e+00> : vector<9x128xf32>
    %36 = tpu.matmul %33, %35, %cst_36 {dimension_numbers = #tpu.dot_dimension_numbers<[1], [0], [0], [1], [0, 0, 1, 1], [], []>} : vector<9x128xf32>, vector<128x128xf32>, vector<9x128xf32> -> vector<9x128xf32>
    %37 = arith.addf %30, %36 : vector<9x128xf32>
    %c4 = arith.constant 4 : index
    %c0_37 = arith.constant 0 : index
    %c0_38 = arith.constant 0 : index
    %38 = vector.load %arg4[%c4, %c0_37, %c0_38] : memref<16x9x81xf32, #tpu.memory_space<vmem>>, vector<1x9x81xf32>
    %39 = vector.shape_cast %38 : vector<1x9x81xf32> to vector<9x81xf32>
    %cst_39 = arith.constant dense<0.000000e+00> : vector<9x128xf32>
    %40 = tpu.matmul %39, %8, %cst_39 {dimension_numbers = #tpu.dot_dimension_numbers<[1], [0], [0], [1], [0, 0, 1, 1], [], []>} : vector<9x81xf32>, vector<81x128xf32>, vector<9x128xf32> -> vector<9x128xf32>
    %c4_40 = arith.constant 4 : index
    %c0_41 = arith.constant 0 : index
    %c0_42 = arith.constant 0 : index
    %41 = vector.load %arg5[%c4_40, %c0_41, %c0_42] : memref<16x128x128xf32, #tpu.memory_space<vmem>>, vector<1x128x128xf32>
    %42 = vector.shape_cast %41 : vector<1x128x128xf32> to vector<128x128xf32>
    %cst_43 = arith.constant dense<0.000000e+00> : vector<9x128xf32>
    %43 = tpu.matmul %40, %42, %cst_43 {dimension_numbers = #tpu.dot_dimension_numbers<[1], [0], [0], [1], [0, 0, 1, 1], [], []>} : vector<9x128xf32>, vector<128x128xf32>, vector<9x128xf32> -> vector<9x128xf32>
    %44 = arith.addf %37, %43 : vector<9x128xf32>
    %c5 = arith.constant 5 : index
    %c0_44 = arith.constant 0 : index
    %c0_45 = arith.constant 0 : index
    %45 = vector.load %arg4[%c5, %c0_44, %c0_45] : memref<16x9x81xf32, #tpu.memory_space<vmem>>, vector<1x9x81xf32>
    %46 = vector.shape_cast %45 : vector<1x9x81xf32> to vector<9x81xf32>
    %cst_46 = arith.constant dense<0.000000e+00> : vector<9x128xf32>
    %47 = tpu.matmul %46, %8, %cst_46 {dimension_numbers = #tpu.dot_dimension_numbers<[1], [0], [0], [1], [0, 0, 1, 1], [], []>} : vector<9x81xf32>, vector<81x128xf32>, vector<9x128xf32> -> vector<9x128xf32>
    %c5_47 = arith.constant 5 : index
    %c0_48 = arith.constant 0 : index
    %c0_49 = arith.constant 0 : index
    %48 = vector.load %arg5[%c5_47, %c0_48, %c0_49] : memref<16x128x128xf32, #tpu.memory_space<vmem>>, vector<1x128x128xf32>
    %49 = vector.shape_cast %48 : vector<1x128x128xf32> to vector<128x128xf32>
    %cst_50 = arith.constant dense<0.000000e+00> : vector<9x128xf32>
    %50 = tpu.matmul %47, %49, %cst_50 {dimension_numbers = #tpu.dot_dimension_numbers<[1], [0], [0], [1], [0, 0, 1, 1], [], []>} : vector<9x128xf32>, vector<128x128xf32>, vector<9x128xf32> -> vector<9x128xf32>
    %51 = arith.addf %44, %50 : vector<9x128xf32>
    %c6 = arith.constant 6 : index
    %c0_51 = arith.constant 0 : index
    %c0_52 = arith.constant 0 : index
    %52 = vector.load %arg4[%c6, %c0_51, %c0_52] : memref<16x9x81xf32, #tpu.memory_space<vmem>>, vector<1x9x81xf32>
    %53 = vector.shape_cast %52 : vector<1x9x81xf32> to vector<9x81xf32>
    %cst_53 = arith.constant dense<0.000000e+00> : vector<9x128xf32>
    %54 = tpu.matmul %53, %8, %cst_53 {dimension_numbers = #tpu.dot_dimension_numbers<[1], [0], [0], [1], [0, 0, 1, 1], [], []>} : vector<9x81xf32>, vector<81x128xf32>, vector<9x128xf32> -> vector<9x128xf32>
    %c6_54 = arith.constant 6 : index
    %c0_55 = arith.constant 0 : index
    %c0_56 = arith.constant 0 : index
    %55 = vector.load %arg5[%c6_54, %c0_55, %c0_56] : memref<16x128x128xf32, #tpu.memory_space<vmem>>, vector<1x128x128xf32>
    %56 = vector.shape_cast %55 : vector<1x128x128xf32> to vector<128x128xf32>
    %cst_57 = arith.constant dense<0.000000e+00> : vector<9x128xf32>
    %57 = tpu.matmul %54, %56, %cst_57 {dimension_numbers = #tpu.dot_dimension_numbers<[1], [0], [0], [1], [0, 0, 1, 1], [], []>} : vector<9x128xf32>, vector<128x128xf32>, vector<9x128xf32> -> vector<9x128xf32>
    %58 = arith.addf %51, %57 : vector<9x128xf32>
    %c7 = arith.constant 7 : index
    %c0_58 = arith.constant 0 : index
    %c0_59 = arith.constant 0 : index
    %59 = vector.load %arg4[%c7, %c0_58, %c0_59] : memref<16x9x81xf32, #tpu.memory_space<vmem>>, vector<1x9x81xf32>
    %60 = vector.shape_cast %59 : vector<1x9x81xf32> to vector<9x81xf32>
    %cst_60 = arith.constant dense<0.000000e+00> : vector<9x128xf32>
    %61 = tpu.matmul %60, %8, %cst_60 {dimension_numbers = #tpu.dot_dimension_numbers<[1], [0], [0], [1], [0, 0, 1, 1], [], []>} : vector<9x81xf32>, vector<81x128xf32>, vector<9x128xf32> -> vector<9x128xf32>
    %c7_61 = arith.constant 7 : index
    %c0_62 = arith.constant 0 : index
    %c0_63 = arith.constant 0 : index
    %62 = vector.load %arg5[%c7_61, %c0_62, %c0_63] : memref<16x128x128xf32, #tpu.memory_space<vmem>>, vector<1x128x128xf32>
    %63 = vector.shape_cast %62 : vector<1x128x128xf32> to vector<128x128xf32>
    %cst_64 = arith.constant dense<0.000000e+00> : vector<9x128xf32>
    %64 = tpu.matmul %61, %63, %cst_64 {dimension_numbers = #tpu.dot_dimension_numbers<[1], [0], [0], [1], [0, 0, 1, 1], [], []>} : vector<9x128xf32>, vector<128x128xf32>, vector<9x128xf32> -> vector<9x128xf32>
    %65 = arith.addf %58, %64 : vector<9x128xf32>
    %c8 = arith.constant 8 : index
    %c0_65 = arith.constant 0 : index
    %c0_66 = arith.constant 0 : index
    %66 = vector.load %arg4[%c8, %c0_65, %c0_66] : memref<16x9x81xf32, #tpu.memory_space<vmem>>, vector<1x9x81xf32>
    %67 = vector.shape_cast %66 : vector<1x9x81xf32> to vector<9x81xf32>
    %cst_67 = arith.constant dense<0.000000e+00> : vector<9x128xf32>
    %68 = tpu.matmul %67, %8, %cst_67 {dimension_numbers = #tpu.dot_dimension_numbers<[1], [0], [0], [1], [0, 0, 1, 1], [], []>} : vector<9x81xf32>, vector<81x128xf32>, vector<9x128xf32> -> vector<9x128xf32>
    %c8_68 = arith.constant 8 : index
    %c0_69 = arith.constant 0 : index
    %c0_70 = arith.constant 0 : index
    %69 = vector.load %arg5[%c8_68, %c0_69, %c0_70] : memref<16x128x128xf32, #tpu.memory_space<vmem>>, vector<1x128x128xf32>
    %70 = vector.shape_cast %69 : vector<1x128x128xf32> to vector<128x128xf32>
    %cst_71 = arith.constant dense<0.000000e+00> : vector<9x128xf32>
    %71 = tpu.matmul %68, %70, %cst_71 {dimension_numbers = #tpu.dot_dimension_numbers<[1], [0], [0], [1], [0, 0, 1, 1], [], []>} : vector<9x128xf32>, vector<128x128xf32>, vector<9x128xf32> -> vector<9x128xf32>
    %72 = arith.addf %65, %71 : vector<9x128xf32>
    %c9 = arith.constant 9 : index
    %c0_72 = arith.constant 0 : index
    %c0_73 = arith.constant 0 : index
    %73 = vector.load %arg4[%c9, %c0_72, %c0_73] : memref<16x9x81xf32, #tpu.memory_space<vmem>>, vector<1x9x81xf32>
    %74 = vector.shape_cast %73 : vector<1x9x81xf32> to vector<9x81xf32>
    %cst_74 = arith.constant dense<0.000000e+00> : vector<9x128xf32>
    %75 = tpu.matmul %74, %8, %cst_74 {dimension_numbers = #tpu.dot_dimension_numbers<[1], [0], [0], [1], [0, 0, 1, 1], [], []>} : vector<9x81xf32>, vector<81x128xf32>, vector<9x128xf32> -> vector<9x128xf32>
    %c9_75 = arith.constant 9 : index
    %c0_76 = arith.constant 0 : index
    %c0_77 = arith.constant 0 : index
    %76 = vector.load %arg5[%c9_75, %c0_76, %c0_77] : memref<16x128x128xf32, #tpu.memory_space<vmem>>, vector<1x128x128xf32>
    %77 = vector.shape_cast %76 : vector<1x128x128xf32> to vector<128x128xf32>
    %cst_78 = arith.constant dense<0.000000e+00> : vector<9x128xf32>
    %78 = tpu.matmul %75, %77, %cst_78 {dimension_numbers = #tpu.dot_dimension_numbers<[1], [0], [0], [1], [0, 0, 1, 1], [], []>} : vector<9x128xf32>, vector<128x128xf32>, vector<9x128xf32> -> vector<9x128xf32>
    %79 = arith.addf %72, %78 : vector<9x128xf32>
    %c10 = arith.constant 10 : index
    %c0_79 = arith.constant 0 : index
    %c0_80 = arith.constant 0 : index
    %80 = vector.load %arg4[%c10, %c0_79, %c0_80] : memref<16x9x81xf32, #tpu.memory_space<vmem>>, vector<1x9x81xf32>
    %81 = vector.shape_cast %80 : vector<1x9x81xf32> to vector<9x81xf32>
    %cst_81 = arith.constant dense<0.000000e+00> : vector<9x128xf32>
    %82 = tpu.matmul %81, %8, %cst_81 {dimension_numbers = #tpu.dot_dimension_numbers<[1], [0], [0], [1], [0, 0, 1, 1], [], []>} : vector<9x81xf32>, vector<81x128xf32>, vector<9x128xf32> -> vector<9x128xf32>
    %c10_82 = arith.constant 10 : index
    %c0_83 = arith.constant 0 : index
    %c0_84 = arith.constant 0 : index
    %83 = vector.load %arg5[%c10_82, %c0_83, %c0_84] : memref<16x128x128xf32, #tpu.memory_space<vmem>>, vector<1x128x128xf32>
    %84 = vector.shape_cast %83 : vector<1x128x128xf32> to vector<128x128xf32>
    %cst_85 = arith.constant dense<0.000000e+00> : vector<9x128xf32>
    %85 = tpu.matmul %82, %84, %cst_85 {dimension_numbers = #tpu.dot_dimension_numbers<[1], [0], [0], [1], [0, 0, 1, 1], [], []>} : vector<9x128xf32>, vector<128x128xf32>, vector<9x128xf32> -> vector<9x128xf32>
    %86 = arith.addf %79, %85 : vector<9x128xf32>
    %c11 = arith.constant 11 : index
    %c0_86 = arith.constant 0 : index
    %c0_87 = arith.constant 0 : index
    %87 = vector.load %arg4[%c11, %c0_86, %c0_87] : memref<16x9x81xf32, #tpu.memory_space<vmem>>, vector<1x9x81xf32>
    %88 = vector.shape_cast %87 : vector<1x9x81xf32> to vector<9x81xf32>
    %cst_88 = arith.constant dense<0.000000e+00> : vector<9x128xf32>
    %89 = tpu.matmul %88, %8, %cst_88 {dimension_numbers = #tpu.dot_dimension_numbers<[1], [0], [0], [1], [0, 0, 1, 1], [], []>} : vector<9x81xf32>, vector<81x128xf32>, vector<9x128xf32> -> vector<9x128xf32>
    %c11_89 = arith.constant 11 : index
    %c0_90 = arith.constant 0 : index
    %c0_91 = arith.constant 0 : index
    %90 = vector.load %arg5[%c11_89, %c0_90, %c0_91] : memref<16x128x128xf32, #tpu.memory_space<vmem>>, vector<1x128x128xf32>
    %91 = vector.shape_cast %90 : vector<1x128x128xf32> to vector<128x128xf32>
    %cst_92 = arith.constant dense<0.000000e+00> : vector<9x128xf32>
    %92 = tpu.matmul %89, %91, %cst_92 {dimension_numbers = #tpu.dot_dimension_numbers<[1], [0], [0], [1], [0, 0, 1, 1], [], []>} : vector<9x128xf32>, vector<128x128xf32>, vector<9x128xf32> -> vector<9x128xf32>
    %93 = arith.addf %86, %92 : vector<9x128xf32>
    %c12 = arith.constant 12 : index
    %c0_93 = arith.constant 0 : index
    %c0_94 = arith.constant 0 : index
    %94 = vector.load %arg4[%c12, %c0_93, %c0_94] : memref<16x9x81xf32, #tpu.memory_space<vmem>>, vector<1x9x81xf32>
    %95 = vector.shape_cast %94 : vector<1x9x81xf32> to vector<9x81xf32>
    %cst_95 = arith.constant dense<0.000000e+00> : vector<9x128xf32>
    %96 = tpu.matmul %95, %8, %cst_95 {dimension_numbers = #tpu.dot_dimension_numbers<[1], [0], [0], [1], [0, 0, 1, 1], [], []>} : vector<9x81xf32>, vector<81x128xf32>, vector<9x128xf32> -> vector<9x128xf32>
    %c12_96 = arith.constant 12 : index
    %c0_97 = arith.constant 0 : index
    %c0_98 = arith.constant 0 : index
    %97 = vector.load %arg5[%c12_96, %c0_97, %c0_98] : memref<16x128x128xf32, #tpu.memory_space<vmem>>, vector<1x128x128xf32>
    %98 = vector.shape_cast %97 : vector<1x128x128xf32> to vector<128x128xf32>
    %cst_99 = arith.constant dense<0.000000e+00> : vector<9x128xf32>
    %99 = tpu.matmul %96, %98, %cst_99 {dimension_numbers = #tpu.dot_dimension_numbers<[1], [0], [0], [1], [0, 0, 1, 1], [], []>} : vector<9x128xf32>, vector<128x128xf32>, vector<9x128xf32> -> vector<9x128xf32>
    %100 = arith.addf %93, %99 : vector<9x128xf32>
    %c13 = arith.constant 13 : index
    %c0_100 = arith.constant 0 : index
    %c0_101 = arith.constant 0 : index
    %101 = vector.load %arg4[%c13, %c0_100, %c0_101] : memref<16x9x81xf32, #tpu.memory_space<vmem>>, vector<1x9x81xf32>
    %102 = vector.shape_cast %101 : vector<1x9x81xf32> to vector<9x81xf32>
    %cst_102 = arith.constant dense<0.000000e+00> : vector<9x128xf32>
    %103 = tpu.matmul %102, %8, %cst_102 {dimension_numbers = #tpu.dot_dimension_numbers<[1], [0], [0], [1], [0, 0, 1, 1], [], []>} : vector<9x81xf32>, vector<81x128xf32>, vector<9x128xf32> -> vector<9x128xf32>
    %c13_103 = arith.constant 13 : index
    %c0_104 = arith.constant 0 : index
    %c0_105 = arith.constant 0 : index
    %104 = vector.load %arg5[%c13_103, %c0_104, %c0_105] : memref<16x128x128xf32, #tpu.memory_space<vmem>>, vector<1x128x128xf32>
    %105 = vector.shape_cast %104 : vector<1x128x128xf32> to vector<128x128xf32>
    %cst_106 = arith.constant dense<0.000000e+00> : vector<9x128xf32>
    %106 = tpu.matmul %103, %105, %cst_106 {dimension_numbers = #tpu.dot_dimension_numbers<[1], [0], [0], [1], [0, 0, 1, 1], [], []>} : vector<9x128xf32>, vector<128x128xf32>, vector<9x128xf32> -> vector<9x128xf32>
    %107 = arith.addf %100, %106 : vector<9x128xf32>
    %c14 = arith.constant 14 : index
    %c0_107 = arith.constant 0 : index
    %c0_108 = arith.constant 0 : index
    %108 = vector.load %arg4[%c14, %c0_107, %c0_108] : memref<16x9x81xf32, #tpu.memory_space<vmem>>, vector<1x9x81xf32>
    %109 = vector.shape_cast %108 : vector<1x9x81xf32> to vector<9x81xf32>
    %cst_109 = arith.constant dense<0.000000e+00> : vector<9x128xf32>
    %110 = tpu.matmul %109, %8, %cst_109 {dimension_numbers = #tpu.dot_dimension_numbers<[1], [0], [0], [1], [0, 0, 1, 1], [], []>} : vector<9x81xf32>, vector<81x128xf32>, vector<9x128xf32> -> vector<9x128xf32>
    %c14_110 = arith.constant 14 : index
    %c0_111 = arith.constant 0 : index
    %c0_112 = arith.constant 0 : index
    %111 = vector.load %arg5[%c14_110, %c0_111, %c0_112] : memref<16x128x128xf32, #tpu.memory_space<vmem>>, vector<1x128x128xf32>
    %112 = vector.shape_cast %111 : vector<1x128x128xf32> to vector<128x128xf32>
    %cst_113 = arith.constant dense<0.000000e+00> : vector<9x128xf32>
    %113 = tpu.matmul %110, %112, %cst_113 {dimension_numbers = #tpu.dot_dimension_numbers<[1], [0], [0], [1], [0, 0, 1, 1], [], []>} : vector<9x128xf32>, vector<128x128xf32>, vector<9x128xf32> -> vector<9x128xf32>
    %114 = arith.addf %107, %113 : vector<9x128xf32>
    %c15 = arith.constant 15 : index
    %c0_114 = arith.constant 0 : index
    %c0_115 = arith.constant 0 : index
    %115 = vector.load %arg4[%c15, %c0_114, %c0_115] : memref<16x9x81xf32, #tpu.memory_space<vmem>>, vector<1x9x81xf32>
    %116 = vector.shape_cast %115 : vector<1x9x81xf32> to vector<9x81xf32>
    %cst_116 = arith.constant dense<0.000000e+00> : vector<9x128xf32>
    %117 = tpu.matmul %116, %8, %cst_116 {dimension_numbers = #tpu.dot_dimension_numbers<[1], [0], [0], [1], [0, 0, 1, 1], [], []>} : vector<9x81xf32>, vector<81x128xf32>, vector<9x128xf32> -> vector<9x128xf32>
    %c15_117 = arith.constant 15 : index
    %c0_118 = arith.constant 0 : index
    %c0_119 = arith.constant 0 : index
    %118 = vector.load %arg5[%c15_117, %c0_118, %c0_119] : memref<16x128x128xf32, #tpu.memory_space<vmem>>, vector<1x128x128xf32>
    %119 = vector.shape_cast %118 : vector<1x128x128xf32> to vector<128x128xf32>
    %cst_120 = arith.constant dense<0.000000e+00> : vector<9x128xf32>
    %120 = tpu.matmul %117, %119, %cst_120 {dimension_numbers = #tpu.dot_dimension_numbers<[1], [0], [0], [1], [0, 0, 1, 1], [], []>} : vector<9x128xf32>, vector<128x128xf32>, vector<9x128xf32> -> vector<9x128xf32>
    %121 = arith.addf %114, %120 : vector<9x128xf32>
    %c0_121 = arith.constant 0 : index
    %c0_122 = arith.constant 0 : index
    %122 = vector.load %arg6[%c0_121, %c0_122] : memref<1x128xf32, #tpu.memory_space<vmem>>, vector<1x128xf32>
    %123 = vector.broadcast %122 : vector<1x128xf32> to vector<9x128xf32>
    %124 = arith.addf %121, %123 : vector<9x128xf32>
    %cst_123 = arith.constant 0.000000e+00 : f32
    %125 = vector.broadcast %cst_123 : f32 to vector<9x128xf32>
    %126 = arith.maximumf %124, %125 : vector<9x128xf32>
    %cst_124 = arith.constant 0.000000e+00 : f32
    %127 = vector.broadcast %cst_124 : f32 to vector<1x128xf32>
    %c0_125 = arith.constant 0 : index
    %c0_126 = arith.constant 0 : index
    %c0_127 = arith.constant 0 : index
    %128 = vector.load %arg7[%c0_125, %c0_126, %c0_127] : memref<9x1x9xf32, #tpu.memory_space<vmem>>, vector<1x1x9xf32>
    %129 = vector.shape_cast %128 : vector<1x1x9xf32> to vector<1x9xf32>
    %cst_128 = arith.constant dense<0.000000e+00> : vector<1x128xf32>
    %130 = tpu.matmul %129, %126, %cst_128 {dimension_numbers = #tpu.dot_dimension_numbers<[1], [0], [0], [1], [0, 0, 1, 1], [], []>} : vector<1x9xf32>, vector<9x128xf32>, vector<1x128xf32> -> vector<1x128xf32>
    %c0_129 = arith.constant 0 : index
    %c0_130 = arith.constant 0 : index
    %c0_131 = arith.constant 0 : index
    %131 = vector.load %arg8[%c0_129, %c0_130, %c0_131] : memref<9x128x128xf32, #tpu.memory_space<vmem>>, vector<1x128x128xf32>
    %132 = vector.shape_cast %131 : vector<1x128x128xf32> to vector<128x128xf32>
    %cst_132 = arith.constant dense<0.000000e+00> : vector<1x128xf32>
    %133 = tpu.matmul %130, %132, %cst_132 {dimension_numbers = #tpu.dot_dimension_numbers<[1], [0], [0], [1], [0, 0, 1, 1], [], []>} : vector<1x128xf32>, vector<128x128xf32>, vector<1x128xf32> -> vector<1x128xf32>
    %134 = arith.addf %127, %133 : vector<1x128xf32>
    %c1_133 = arith.constant 1 : index
    %c0_134 = arith.constant 0 : index
    %c0_135 = arith.constant 0 : index
    %135 = vector.load %arg7[%c1_133, %c0_134, %c0_135] : memref<9x1x9xf32, #tpu.memory_space<vmem>>, vector<1x1x9xf32>
    %136 = vector.shape_cast %135 : vector<1x1x9xf32> to vector<1x9xf32>
    %cst_136 = arith.constant dense<0.000000e+00> : vector<1x128xf32>
    %137 = tpu.matmul %136, %126, %cst_136 {dimension_numbers = #tpu.dot_dimension_numbers<[1], [0], [0], [1], [0, 0, 1, 1], [], []>} : vector<1x9xf32>, vector<9x128xf32>, vector<1x128xf32> -> vector<1x128xf32>
    %c1_137 = arith.constant 1 : index
    %c0_138 = arith.constant 0 : index
    %c0_139 = arith.constant 0 : index
    %138 = vector.load %arg8[%c1_137, %c0_138, %c0_139] : memref<9x128x128xf32, #tpu.memory_space<vmem>>, vector<1x128x128xf32>
    %139 = vector.shape_cast %138 : vector<1x128x128xf32> to vector<128x128xf32>
    %cst_140 = arith.constant dense<0.000000e+00> : vector<1x128xf32>
    %140 = tpu.matmul %137, %139, %cst_140 {dimension_numbers = #tpu.dot_dimension_numbers<[1], [0], [0], [1], [0, 0, 1, 1], [], []>} : vector<1x128xf32>, vector<128x128xf32>, vector<1x128xf32> -> vector<1x128xf32>
    %141 = arith.addf %134, %140 : vector<1x128xf32>
    %c2_141 = arith.constant 2 : index
    %c0_142 = arith.constant 0 : index
    %c0_143 = arith.constant 0 : index
    %142 = vector.load %arg7[%c2_141, %c0_142, %c0_143] : memref<9x1x9xf32, #tpu.memory_space<vmem>>, vector<1x1x9xf32>
    %143 = vector.shape_cast %142 : vector<1x1x9xf32> to vector<1x9xf32>
    %cst_144 = arith.constant dense<0.000000e+00> : vector<1x128xf32>
    %144 = tpu.matmul %143, %126, %cst_144 {dimension_numbers = #tpu.dot_dimension_numbers<[1], [0], [0], [1], [0, 0, 1, 1], [], []>} : vector<1x9xf32>, vector<9x128xf32>, vector<1x128xf32> -> vector<1x128xf32>
    %c2_145 = arith.constant 2 : index
    %c0_146 = arith.constant 0 : index
    %c0_147 = arith.constant 0 : index
    %145 = vector.load %arg8[%c2_145, %c0_146, %c0_147] : memref<9x128x128xf32, #tpu.memory_space<vmem>>, vector<1x128x128xf32>
    %146 = vector.shape_cast %145 : vector<1x128x128xf32> to vector<128x128xf32>
    %cst_148 = arith.constant dense<0.000000e+00> : vector<1x128xf32>
    %147 = tpu.matmul %144, %146, %cst_148 {dimension_numbers = #tpu.dot_dimension_numbers<[1], [0], [0], [1], [0, 0, 1, 1], [], []>} : vector<1x128xf32>, vector<128x128xf32>, vector<1x128xf32> -> vector<1x128xf32>
    %148 = arith.addf %141, %147 : vector<1x128xf32>
    %c3_149 = arith.constant 3 : index
    %c0_150 = arith.constant 0 : index
    %c0_151 = arith.constant 0 : index
    %149 = vector.load %arg7[%c3_149, %c0_150, %c0_151] : memref<9x1x9xf32, #tpu.memory_space<vmem>>, vector<1x1x9xf32>
    %150 = vector.shape_cast %149 : vector<1x1x9xf32> to vector<1x9xf32>
    %cst_152 = arith.constant dense<0.000000e+00> : vector<1x128xf32>
    %151 = tpu.matmul %150, %126, %cst_152 {dimension_numbers = #tpu.dot_dimension_numbers<[1], [0], [0], [1], [0, 0, 1, 1], [], []>} : vector<1x9xf32>, vector<9x128xf32>, vector<1x128xf32> -> vector<1x128xf32>
    %c3_153 = arith.constant 3 : index
    %c0_154 = arith.constant 0 : index
    %c0_155 = arith.constant 0 : index
    %152 = vector.load %arg8[%c3_153, %c0_154, %c0_155] : memref<9x128x128xf32, #tpu.memory_space<vmem>>, vector<1x128x128xf32>
    %153 = vector.shape_cast %152 : vector<1x128x128xf32> to vector<128x128xf32>
    %cst_156 = arith.constant dense<0.000000e+00> : vector<1x128xf32>
    %154 = tpu.matmul %151, %153, %cst_156 {dimension_numbers = #tpu.dot_dimension_numbers<[1], [0], [0], [1], [0, 0, 1, 1], [], []>} : vector<1x128xf32>, vector<128x128xf32>, vector<1x128xf32> -> vector<1x128xf32>
    %155 = arith.addf %148, %154 : vector<1x128xf32>
    %c4_157 = arith.constant 4 : index
    %c0_158 = arith.constant 0 : index
    %c0_159 = arith.constant 0 : index
    %156 = vector.load %arg7[%c4_157, %c0_158, %c0_159] : memref<9x1x9xf32, #tpu.memory_space<vmem>>, vector<1x1x9xf32>
    %157 = vector.shape_cast %156 : vector<1x1x9xf32> to vector<1x9xf32>
    %cst_160 = arith.constant dense<0.000000e+00> : vector<1x128xf32>
    %158 = tpu.matmul %157, %126, %cst_160 {dimension_numbers = #tpu.dot_dimension_numbers<[1], [0], [0], [1], [0, 0, 1, 1], [], []>} : vector<1x9xf32>, vector<9x128xf32>, vector<1x128xf32> -> vector<1x128xf32>
    %c4_161 = arith.constant 4 : index
    %c0_162 = arith.constant 0 : index
    %c0_163 = arith.constant 0 : index
    %159 = vector.load %arg8[%c4_161, %c0_162, %c0_163] : memref<9x128x128xf32, #tpu.memory_space<vmem>>, vector<1x128x128xf32>
    %160 = vector.shape_cast %159 : vector<1x128x128xf32> to vector<128x128xf32>
    %cst_164 = arith.constant dense<0.000000e+00> : vector<1x128xf32>
    %161 = tpu.matmul %158, %160, %cst_164 {dimension_numbers = #tpu.dot_dimension_numbers<[1], [0], [0], [1], [0, 0, 1, 1], [], []>} : vector<1x128xf32>, vector<128x128xf32>, vector<1x128xf32> -> vector<1x128xf32>
    %162 = arith.addf %155, %161 : vector<1x128xf32>
    %c5_165 = arith.constant 5 : index
    %c0_166 = arith.constant 0 : index
    %c0_167 = arith.constant 0 : index
    %163 = vector.load %arg7[%c5_165, %c0_166, %c0_167] : memref<9x1x9xf32, #tpu.memory_space<vmem>>, vector<1x1x9xf32>
    %164 = vector.shape_cast %163 : vector<1x1x9xf32> to vector<1x9xf32>
    %cst_168 = arith.constant dense<0.000000e+00> : vector<1x128xf32>
    %165 = tpu.matmul %164, %126, %cst_168 {dimension_numbers = #tpu.dot_dimension_numbers<[1], [0], [0], [1], [0, 0, 1, 1], [], []>} : vector<1x9xf32>, vector<9x128xf32>, vector<1x128xf32> -> vector<1x128xf32>
    %c5_169 = arith.constant 5 : index
    %c0_170 = arith.constant 0 : index
    %c0_171 = arith.constant 0 : index
    %166 = vector.load %arg8[%c5_169, %c0_170, %c0_171] : memref<9x128x128xf32, #tpu.memory_space<vmem>>, vector<1x128x128xf32>
    %167 = vector.shape_cast %166 : vector<1x128x128xf32> to vector<128x128xf32>
    %cst_172 = arith.constant dense<0.000000e+00> : vector<1x128xf32>
    %168 = tpu.matmul %165, %167, %cst_172 {dimension_numbers = #tpu.dot_dimension_numbers<[1], [0], [0], [1], [0, 0, 1, 1], [], []>} : vector<1x128xf32>, vector<128x128xf32>, vector<1x128xf32> -> vector<1x128xf32>
    %169 = arith.addf %162, %168 : vector<1x128xf32>
    %c6_173 = arith.constant 6 : index
    %c0_174 = arith.constant 0 : index
    %c0_175 = arith.constant 0 : index
    %170 = vector.load %arg7[%c6_173, %c0_174, %c0_175] : memref<9x1x9xf32, #tpu.memory_space<vmem>>, vector<1x1x9xf32>
    %171 = vector.shape_cast %170 : vector<1x1x9xf32> to vector<1x9xf32>
    %cst_176 = arith.constant dense<0.000000e+00> : vector<1x128xf32>
    %172 = tpu.matmul %171, %126, %cst_176 {dimension_numbers = #tpu.dot_dimension_numbers<[1], [0], [0], [1], [0, 0, 1, 1], [], []>} : vector<1x9xf32>, vector<9x128xf32>, vector<1x128xf32> -> vector<1x128xf32>
    %c6_177 = arith.constant 6 : index
    %c0_178 = arith.constant 0 : index
    %c0_179 = arith.constant 0 : index
    %173 = vector.load %arg8[%c6_177, %c0_178, %c0_179] : memref<9x128x128xf32, #tpu.memory_space<vmem>>, vector<1x128x128xf32>
    %174 = vector.shape_cast %173 : vector<1x128x128xf32> to vector<128x128xf32>
    %cst_180 = arith.constant dense<0.000000e+00> : vector<1x128xf32>
    %175 = tpu.matmul %172, %174, %cst_180 {dimension_numbers = #tpu.dot_dimension_numbers<[1], [0], [0], [1], [0, 0, 1, 1], [], []>} : vector<1x128xf32>, vector<128x128xf32>, vector<1x128xf32> -> vector<1x128xf32>
    %176 = arith.addf %169, %175 : vector<1x128xf32>
    %c7_181 = arith.constant 7 : index
    %c0_182 = arith.constant 0 : index
    %c0_183 = arith.constant 0 : index
    %177 = vector.load %arg7[%c7_181, %c0_182, %c0_183] : memref<9x1x9xf32, #tpu.memory_space<vmem>>, vector<1x1x9xf32>
    %178 = vector.shape_cast %177 : vector<1x1x9xf32> to vector<1x9xf32>
    %cst_184 = arith.constant dense<0.000000e+00> : vector<1x128xf32>
    %179 = tpu.matmul %178, %126, %cst_184 {dimension_numbers = #tpu.dot_dimension_numbers<[1], [0], [0], [1], [0, 0, 1, 1], [], []>} : vector<1x9xf32>, vector<9x128xf32>, vector<1x128xf32> -> vector<1x128xf32>
    %c7_185 = arith.constant 7 : index
    %c0_186 = arith.constant 0 : index
    %c0_187 = arith.constant 0 : index
    %180 = vector.load %arg8[%c7_185, %c0_186, %c0_187] : memref<9x128x128xf32, #tpu.memory_space<vmem>>, vector<1x128x128xf32>
    %181 = vector.shape_cast %180 : vector<1x128x128xf32> to vector<128x128xf32>
    %cst_188 = arith.constant dense<0.000000e+00> : vector<1x128xf32>
    %182 = tpu.matmul %179, %181, %cst_188 {dimension_numbers = #tpu.dot_dimension_numbers<[1], [0], [0], [1], [0, 0, 1, 1], [], []>} : vector<1x128xf32>, vector<128x128xf32>, vector<1x128xf32> -> vector<1x128xf32>
    %183 = arith.addf %176, %182 : vector<1x128xf32>
    %c8_189 = arith.constant 8 : index
    %c0_190 = arith.constant 0 : index
    %c0_191 = arith.constant 0 : index
    %184 = vector.load %arg7[%c8_189, %c0_190, %c0_191] : memref<9x1x9xf32, #tpu.memory_space<vmem>>, vector<1x1x9xf32>
    %185 = vector.shape_cast %184 : vector<1x1x9xf32> to vector<1x9xf32>
    %cst_192 = arith.constant dense<0.000000e+00> : vector<1x128xf32>
    %186 = tpu.matmul %185, %126, %cst_192 {dimension_numbers = #tpu.dot_dimension_numbers<[1], [0], [0], [1], [0, 0, 1, 1], [], []>} : vector<1x9xf32>, vector<9x128xf32>, vector<1x128xf32> -> vector<1x128xf32>
    %c8_193 = arith.constant 8 : index
    %c0_194 = arith.constant 0 : index
    %c0_195 = arith.constant 0 : index
    %187 = vector.load %arg8[%c8_193, %c0_194, %c0_195] : memref<9x128x128xf32, #tpu.memory_space<vmem>>, vector<1x128x128xf32>
    %188 = vector.shape_cast %187 : vector<1x128x128xf32> to vector<128x128xf32>
    %cst_196 = arith.constant dense<0.000000e+00> : vector<1x128xf32>
    %189 = tpu.matmul %186, %188, %cst_196 {dimension_numbers = #tpu.dot_dimension_numbers<[1], [0], [0], [1], [0, 0, 1, 1], [], []>} : vector<1x128xf32>, vector<128x128xf32>, vector<1x128xf32> -> vector<1x128xf32>
    %190 = arith.addf %183, %189 : vector<1x128xf32>
    %c0_197 = arith.constant 0 : index
    %c0_198 = arith.constant 0 : index
    %191 = vector.load %arg9[%c0_197, %c0_198] : memref<1x128xf32, #tpu.memory_space<vmem>>, vector<1x128xf32>
    %192 = arith.addf %190, %191 : vector<1x128xf32>
    %cst_199 = arith.constant 0.000000e+00 : f32
    %193 = vector.broadcast %cst_199 : f32 to vector<1x128xf32>
    %194 = arith.maximumf %192, %193 : vector<1x128xf32>
    %cst_200 = arith.constant 0.000000e+00 : f32
    %195 = vector.broadcast %cst_200 : f32 to vector<1x512xf32>
    %c0_201 = arith.constant 0 : index
    %c0_202 = arith.constant 0 : index
    %c0_203 = arith.constant 0 : index
    %196 = vector.load %arg10[%c0_201, %c0_202, %c0_203] : memref<1x128x512xf32, #tpu.memory_space<vmem>>, vector<1x128x512xf32>
    %197 = vector.shape_cast %196 : vector<1x128x512xf32> to vector<128x512xf32>
    %cst_204 = arith.constant dense<0.000000e+00> : vector<1x512xf32>
    %198 = tpu.matmul %194, %197, %cst_204 {dimension_numbers = #tpu.dot_dimension_numbers<[1], [0], [0], [1], [0, 0, 1, 1], [], []>} : vector<1x128xf32>, vector<128x512xf32>, vector<1x512xf32> -> vector<1x512xf32>
    %199 = arith.addf %195, %198 : vector<1x512xf32>
    %c0_205 = arith.constant 0 : index
    %c0_206 = arith.constant 0 : index
    %200 = vector.load %arg11[%c0_205, %c0_206] : memref<1x512xf32, #tpu.memory_space<vmem>>, vector<1x512xf32>
    %201 = arith.addf %199, %200 : vector<1x512xf32>
    %cst_207 = arith.constant 0.000000e+00 : f32
    %202 = vector.broadcast %cst_207 : f32 to vector<1x512xf32>
    %203 = arith.maximumf %201, %202 : vector<1x512xf32>
    %c0_208 = arith.constant 0 : index
    %c0_209 = arith.constant 0 : index
    %204 = vector.load %arg12[%c0_208, %c0_209] : memref<512x128xf32, #tpu.memory_space<vmem>>, vector<512x128xf32>
    %cst_210 = arith.constant dense<0.000000e+00> : vector<1x128xf32>
    %205 = tpu.matmul %203, %204, %cst_210 {dimension_numbers = #tpu.dot_dimension_numbers<[1], [0], [0], [1], [0, 0, 1, 1], [], []>} : vector<1x512xf32>, vector<512x128xf32>, vector<1x128xf32> -> vector<1x128xf32>
    %c0_211 = arith.constant 0 : index
    %c0_212 = arith.constant 0 : index
    %206 = vector.load %arg13[%c0_211, %c0_212] : memref<1x128xf32, #tpu.memory_space<vmem>>, vector<1x128xf32>
    %207 = arith.addf %205, %206 : vector<1x128xf32>
    %c0_213 = arith.constant 0 : index
    %c0_214 = arith.constant 0 : index
    %c0_215 = arith.constant 0 : index
    %208 = vector.load %arg14[%c0_213, %c0_214, %c0_215] : memref<1x1x128xf32, #tpu.memory_space<vmem>>, vector<1x1x128xf32>
    %209 = vector.shape_cast %208 : vector<1x1x128xf32> to vector<1x128xf32>
    %210 = vector.shape_cast %207 : vector<1x128xf32> to vector<1x1x128xf32>
    tpu.vector_store %arg14[%c0_213, %c0_214, %c0_215], %210 {strides = array<i32>} : memref<1x1x128xf32, #tpu.memory_space<vmem>>, vector<1x1x128xf32>,
    return
  }
  func.func @transform_0(%arg0: i32) -> (i32, i32, i32) {
    %c0_i32 = arith.constant 0 : i32
    %c0_i32_0 = arith.constant 0 : i32
    %c0_i32_1 = arith.constant 0 : i32
    return %arg0, %c0_i32, %c0_i32_0 : i32, i32, i32
  }
  func.func @transform_1(%arg0: i32) -> (i32, i32) {
    %c0_i32 = arith.constant 0 : i32
    %c0_i32_0 = arith.constant 0 : i32
    %c0_i32_1 = arith.constant 0 : i32
    return %c0_i32, %c0_i32_0 : i32, i32
  }
  func.func @transform_2(%arg0: i32) -> (i32, i32) {
    %c0_i32 = arith.constant 0 : i32
    %c0_i32_0 = arith.constant 0 : i32
    %c0_i32_1 = arith.constant 0 : i32
    return %c0_i32, %c0_i32_0 : i32, i32
  }
  func.func @transform_3(%arg0: i32) -> (i32, i32, i32) {
    %c0_i32 = arith.constant 0 : i32
    %c0_i32_0 = arith.constant 0 : i32
    %c0_i32_1 = arith.constant 0 : i32
    %c0_i32_2 = arith.constant 0 : i32
    return %c0_i32, %c0_i32_0, %c0_i32_1 : i32, i32, i32
  }
  func.func @transform_4(%arg0: i32) -> (i32, i32, i32) {
    %c0_i32 = arith.constant 0 : i32
    %c0_i32_0 = arith.constant 0 : i32
    %c0_i32_1 = arith.constant 0 : i32
    %c0_i32_2 = arith.constant 0 : i32
    return %c0_i32, %c0_i32_0, %c0_i32_1 : i32, i32, i32
  }
  func.func @transform_5(%arg0: i32) -> (i32, i32) {
    %c0_i32 = arith.constant 0 : i32
    %c0_i32_0 = arith.constant 0 : i32
    %c0_i32_1 = arith.constant 0 : i32
    return %c0_i32, %c0_i32_0 : i32, i32
  }
  func.func @transform_6(%arg0: i32) -> (i32, i32, i32) {
    %c0_i32 = arith.constant 0 : i32
    %c0_i32_0 = arith.constant 0 : i32
    %c0_i32_1 = arith.constant 0 : i32
    %c0_i32_2 = arith.constant 0 : i32
    return %c0_i32, %c0_i32_0, %c0_i32_1 : i32, i32, i32
  }
  func.func @transform_7(%arg0: i32) -> (i32, i32, i32) {
    %c0_i32 = arith.constant 0 : i32
    %c0_i32_0 = arith.constant 0 : i32
    %c0_i32_1 = arith.constant 0 : i32
    %c0_i32_2 = arith.constant 0 : i32
    return %c0_i32, %c0_i32_0, %c0_i32_1 : i32, i32, i32
  }
  func.func @transform_8(%arg0: i32) -> (i32, i32) {
    %c0_i32 = arith.constant 0 : i32
    %c0_i32_0 = arith.constant 0 : i32
    %c0_i32_1 = arith.constant 0 : i32
    return %c0_i32, %c0_i32_0 : i32, i32
  }
  func.func @transform_9(%arg0: i32) -> (i32, i32, i32) {
    %c0_i32 = arith.constant 0 : i32
    %c0_i32_0 = arith.constant 0 : i32
    %c0_i32_1 = arith.constant 0 : i32
    %c0_i32_2 = arith.constant 0 : i32
    return %c0_i32, %c0_i32_0, %c0_i32_1 : i32, i32, i32
  }
  func.func @transform_10(%arg0: i32) -> (i32, i32) {
    %c0_i32 = arith.constant 0 : i32
    %c0_i32_0 = arith.constant 0 : i32
    %c0_i32_1 = arith.constant 0 : i32
    return %c0_i32, %c0_i32_0 : i32, i32
  }
  func.func @transform_11(%arg0: i32) -> (i32, i32) {
    %c0_i32 = arith.constant 0 : i32
    %c0_i32_0 = arith.constant 0 : i32
    %c0_i32_1 = arith.constant 0 : i32
    return %c0_i32, %c0_i32_0 : i32, i32
  }
  func.func @transform_12(%arg0: i32) -> (i32, i32) {
    %c0_i32 = arith.constant 0 : i32
    %c0_i32_0 = arith.constant 0 : i32
    %c0_i32_1 = arith.constant 0 : i32
    return %c0_i32, %c0_i32_0 : i32, i32
  }
  func.func @transform_13(%arg0: i32) -> (i32, i32, i32) {
    %c0_i32 = arith.constant 0 : i32
    %c0_i32_0 = arith.constant 0 : i32
    %c0_i32_1 = arith.constant 0 : i32
    return %arg0, %c0_i32, %c0_i32_0 : i32, i32, i32
  }
}

</mosaic_0001>

<llo_original>
// kernel: forward.1
$region0: #{forward.1}
  #allocation0 [shape = 'u32[]', space=smem, size = 0x4, offset = 0x4, fixed_abs, tag = 'smem constant byte address 0x4 - core index']
  #allocation1 [shape = 'u32[144,128]{1,0:T(1,128)}', space=vmem, size = 0x12000, scoped, tag = 'internal scratch']
  %s0 = inlined_call_operand.vmem [shape: f32[2,81,256], index: 0, kind: input, shape index: {}]
  %s1 = inlined_call_operand.vmem [shape: f32[256,128], index: 1, kind: input, shape index: {}]
  %s2 = inlined_call_operand.vmem [shape: f32[1,128], index: 2, kind: input, shape index: {}]
  %s3 = inlined_call_operand.vmem [shape: f32[16,9,81], index: 3, kind: input, shape index: {}]
  %s4 = inlined_call_operand.vmem [shape: f32[16,128,128], index: 4, kind: input, shape index: {}]
  %s5 = inlined_call_operand.vmem [shape: f32[1,128], index: 5, kind: input, shape index: {}]
  %s6 = inlined_call_operand.vmem [shape: f32[9,1,9], index: 6, kind: input, shape index: {}]
  %s7 = inlined_call_operand.vmem [shape: f32[9,128,128], index: 7, kind: input, shape index: {}]
  %s8 = inlined_call_operand.vmem [shape: f32[1,128], index: 8, kind: input, shape index: {}]
  %s9 = inlined_call_operand.vmem [shape: f32[1,128,512], index: 9, kind: input, shape index: {}]
  %s10 = inlined_call_operand.vmem [shape: f32[1,512], index: 10, kind: input, shape index: {}]
  %s11 = inlined_call_operand.vmem [shape: f32[512,128], index: 11, kind: input, shape index: {}]
  %s12 = inlined_call_operand.vmem [shape: f32[1,128], index: 12, kind: input, shape index: {}]
  %s13 = inlined_call_operand.hbm [shape: f32[2,1,128], index: 13, kind: output, shape index: {}]
  %s14 = sld [smem:[#allocation0]]
  $region85: #{forward.1} parent=0
    _
  %s16 = ssub.s32 1, %s14
  %s17 = scalar_select 0, %s16, %s14
  $region1: #{forward.1} parent=0
    #allocation2 [shape = 'u8[1024]{0}', space=vmem, size = 0x400, scoped, tag = 'output window, operand 0']
    #allocation3 [shape = 's32[2]{0}', space=sflag, size = 0x8, scoped, tag = 'scoped memory for forward.1']
    %18 = vsyncpa [#allocation3], 0
    %s19 = scalar_lea.sflag [#allocation3], 1
    %20 = vsyncpa %s19, 0
    loop: start=0, step=1, limit=4
    $region2: #{forward.1} parent=1 // loop_pre_header
      _
    $region3: #{forward.1} parent=1 // loop_header
      %s22 = sphi 0, %s26
      %p23 = scmp.ge.s32.totalorder %s22, 4
      %s32 = sphi 0, %s34
      %s35 = sphi 0, %s32
      %s36 = sphi 0, %s35
      %s52 = sphi 0, %s36
      %s56 = sphi 0, %s56
      %s58 = sphi 0, %s56
      %s59 = sphi 0, %s58
      %s73 = sphi 0, %s59
      %s77 = sphi 0, %s77
      %s79 = sphi 0, %s77
      %s80 = sphi 0, %s79
      %s94 = sphi 0, %s80
      %s98 = sphi 0, %s98
      %s100 = sphi 0, %s98
      %s101 = sphi 0, %s100
      %s115 = sphi 0, %s101
      %s119 = sphi 0, %s119
      %s121 = sphi 0, %s119
      %s122 = sphi 0, %s121
      %s136 = sphi 0, %s122
      %s140 = sphi 0, %s140
      %s142 = sphi 0, %s140
      %s143 = sphi 0, %s142
      %s157 = sphi 0, %s143
      %s161 = sphi 0, %s161
      %s163 = sphi 0, %s161
      %s164 = sphi 0, %s163
      %s178 = sphi 0, %s164
      %s182 = sphi 0, %s182
      %s184 = sphi 0, %s182
      %s185 = sphi 0, %s184
      %s199 = sphi 0, %s185
      %s203 = sphi 0, %s203
      %s205 = sphi 0, %s203
      %s206 = sphi 0, %s205
      %s220 = sphi 0, %s206
      %s224 = sphi 0, %s224
      %s226 = sphi 0, %s224
      %s227 = sphi 0, %s226
      %s241 = sphi 0, %s227
      %s245 = sphi 0, %s245
      %s247 = sphi 0, %s245
      %s248 = sphi 0, %s247
      %s262 = sphi 0, %s248
      %s266 = sphi 0, %s266
      %s268 = sphi 0, %s266
      %s269 = sphi 0, %s268
      %s283 = sphi 0, %s269
      %s287 = sphi 0, %s287
      %s289 = sphi 0, %s287
      %s290 = sphi 0, %s289
      %s304 = sphi 0, %s290
      %s310 = sphi 0, %s312
      %s313 = sphi 0, %s310
      %s314 = sphi 0, %s313
      %s330 = sphi 0, %s314
    $region4: #{forward.1} parent=1 // loop_header_branch
      %25 = sbr.rel (%p23) target = $region8
    $region5: #{forward.1} parent=1 // loop_body
      %s27 = ssub.s32 %s22, 1
      %s28 = ssub.s32 %s22, 2
      %s29 = sadd.s32 %s22, 1
      %s30 = ssub.s32 %s22, %s29
      %p31 = scmp.eq.s32.totalorder %s30, 0
      %s33 = sadd.s32 %s32, 1
      %s34 = scalar_select %p31, %s32, %s33
      %p37 = pneg %p31
      %p38 = scmp.eq.s32.totalorder %s22, 1
      %p39 = por %p37, %p38
      %p40 = scmp.ne.s32.totalorder %s32, %s35
      %p41 = scmp.eq.s32.totalorder %s22, 0
      %p42 = por %p40, %p41
      %p43 = scmp.ne.s32.totalorder %s32, %s35
      %p44 = scmp.eq.s32.totalorder %s27, 1
      %p45 = por %p43, %p44
      %p46 = scmp.ne.s32.totalorder %s35, %s36
      %p47 = scmp.eq.s32.totalorder %s27, 0
      %p48 = por %p46, %p47
      %p49 = scmp.ne.s32.totalorder %s35, %s36
      %p50 = scmp.eq.s32.totalorder %s28, 1
      %p51 = por %p49, %p50
      %p53 = scmp.ne.s32.totalorder %s36, %s52
      %p54 = scmp.eq.s32.totalorder %s28, 0
      %p55 = por %p53, %p54
      %s57 = sadd.s32 %s56, 1
      %p60 = scmp.eq.s32.totalorder %s22, 1
      %p61 = scmp.ne.s32.totalorder %s56, %s58
      %p62 = scmp.eq.s32.totalorder %s22, 0
      %p63 = por %p61, %p62
      %p64 = scmp.ne.s32.totalorder %s56, %s58
      %p65 = scmp.eq.s32.totalorder %s27, 1
      %p66 = por %p64, %p65
      %p67 = scmp.ne.s32.totalorder %s58, %s59
      %p68 = scmp.eq.s32.totalorder %s27, 0
      %p69 = por %p67, %p68
      %p70 = scmp.ne.s32.totalorder %s58, %s59
      %p71 = scmp.eq.s32.totalorder %s28, 1
      %p72 = por %p70, %p71
      %p74 = scmp.ne.s32.totalorder %s59, %s73
      %p75 = scmp.eq.s32.totalorder %s28, 0
      %p76 = por %p74, %p75
      %s78 = sadd.s32 %s77, 1
      %p81 = scmp.eq.s32.totalorder %s22, 1
      %p82 = scmp.ne.s32.totalorder %s77, %s79
      %p83 = scmp.eq.s32.totalorder %s22, 0
      %p84 = por %p82, %p83
      %p85 = scmp.ne.s32.totalorder %s77, %s79
      %p86 = scmp.eq.s32.totalorder %s27, 1
      %p87 = por %p85, %p86
      %p88 = scmp.ne.s32.totalorder %s79, %s80
      %p89 = scmp.eq.s32.totalorder %s27, 0
      %p90 = por %p88, %p89
      %p91 = scmp.ne.s32.totalorder %s79, %s80
      %p92 = scmp.eq.s32.totalorder %s28, 1
      %p93 = por %p91, %p92
      %p95 = scmp.ne.s32.totalorder %s80, %s94
      %p96 = scmp.eq.s32.totalorder %s28, 0
      %p97 = por %p95, %p96
      %s99 = sadd.s32 %s98, 1
      %p102 = scmp.eq.s32.totalorder %s22, 1
      %p103 = scmp.ne.s32.totalorder %s98, %s100
      %p104 = scmp.eq.s32.totalorder %s22, 0
      %p105 = por %p103, %p104
      %p106 = scmp.ne.s32.totalorder %s98, %s100
      %p107 = scmp.eq.s32.totalorder %s27, 1
      %p108 = por %p106, %p107
      %p109 = scmp.ne.s32.totalorder %s100, %s101
      %p110 = scmp.eq.s32.totalorder %s27, 0
      %p111 = por %p109, %p110
      %p112 = scmp.ne.s32.totalorder %s100, %s101
      %p113 = scmp.eq.s32.totalorder %s28, 1
      %p114 = por %p112, %p113
      %p116 = scmp.ne.s32.totalorder %s101, %s115
      %p117 = scmp.eq.s32.totalorder %s28, 0
      %p118 = por %p116, %p117
      %s120 = sadd.s32 %s119, 1
      %p123 = scmp.eq.s32.totalorder %s22, 1
      %p124 = scmp.ne.s32.totalorder %s119, %s121
      %p125 = scmp.eq.s32.totalorder %s22, 0
      %p126 = por %p124, %p125
      %p127 = scmp.ne.s32.totalorder %s119, %s121
      %p128 = scmp.eq.s32.totalorder %s27, 1
      %p129 = por %p127, %p128
      %p130 = scmp.ne.s32.totalorder %s121, %s122
      %p131 = scmp.eq.s32.totalorder %s27, 0
      %p132 = por %p130, %p131
      %p133 = scmp.ne.s32.totalorder %s121, %s122
      %p134 = scmp.eq.s32.totalorder %s28, 1
      %p135 = por %p133, %p134
      %p137 = scmp.ne.s32.totalorder %s122, %s136
      %p138 = scmp.eq.s32.totalorder %s28, 0
      %p139 = por %p137, %p138
      %s141 = sadd.s32 %s140, 1
      %p144 = scmp.eq.s32.totalorder %s22, 1
      %p145 = scmp.ne.s32.totalorder %s140, %s142
      %p146 = scmp.eq.s32.totalorder %s22, 0
      %p147 = por %p145, %p146
      %p148 = scmp.ne.s32.totalorder %s140, %s142
      %p149 = scmp.eq.s32.totalorder %s27, 1
      %p150 = por %p148, %p149
      %p151 = scmp.ne.s32.totalorder %s142, %s143
      %p152 = scmp.eq.s32.totalorder %s27, 0
      %p153 = por %p151, %p152
      %p154 = scmp.ne.s32.totalorder %s142, %s143
      %p155 = scmp.eq.s32.totalorder %s28, 1
      %p156 = por %p154, %p155
      %p158 = scmp.ne.s32.totalorder %s143, %s157
      %p159 = scmp.eq.s32.totalorder %s28, 0
      %p160 = por %p158, %p159
      %s162 = sadd.s32 %s161, 1
      %p165 = scmp.eq.s32.totalorder %s22, 1
      %p166 = scmp.ne.s32.totalorder %s161, %s163
      %p167 = scmp.eq.s32.totalorder %s22, 0
      %p168 = por %p166, %p167
      %p169 = scmp.ne.s32.totalorder %s161, %s163
      %p170 = scmp.eq.s32.totalorder %s27, 1
      %p171 = por %p169, %p170
      %p172 = scmp.ne.s32.totalorder %s163, %s164
      %p173 = scmp.eq.s32.totalorder %s27, 0
      %p174 = por %p172, %p173
      %p175 = scmp.ne.s32.totalorder %s163, %s164
      %p176 = scmp.eq.s32.totalorder %s28, 1
      %p177 = por %p175, %p176
      %p179 = scmp.ne.s32.totalorder %s164, %s178
      %p180 = scmp.eq.s32.totalorder %s28, 0
      %p181 = por %p179, %p180
      %s183 = sadd.s32 %s182, 1
      %p186 = scmp.eq.s32.totalorder %s22, 1
      %p187 = scmp.ne.s32.totalorder %s182, %s184
      %p188 = scmp.eq.s32.totalorder %s22, 0
      %p189 = por %p187, %p188
      %p190 = scmp.ne.s32.totalorder %s182, %s184
      %p191 = scmp.eq.s32.totalorder %s27, 1
      %p192 = por %p190, %p191
      %p193 = scmp.ne.s32.totalorder %s184, %s185
      %p194 = scmp.eq.s32.totalorder %s27, 0
      %p195 = por %p193, %p194
      %p196 = scmp.ne.s32.totalorder %s184, %s185
      %p197 = scmp.eq.s32.totalorder %s28, 1
      %p198 = por %p196, %p197
      %p200 = scmp.ne.s32.totalorder %s185, %s199
      %p201 = scmp.eq.s32.totalorder %s28, 0
      %p202 = por %p200, %p201
      %s204 = sadd.s32 %s203, 1
      %p207 = scmp.eq.s32.totalorder %s22, 1
      %p208 = scmp.ne.s32.totalorder %s203, %s205
      %p209 = scmp.eq.s32.totalorder %s22, 0
      %p210 = por %p208, %p209
      %p211 = scmp.ne.s32.totalorder %s203, %s205
      %p212 = scmp.eq.s32.totalorder %s27, 1
      %p213 = por %p211, %p212
      %p214 = scmp.ne.s32.totalorder %s205, %s206
      %p215 = scmp.eq.s32.totalorder %s27, 0
      %p216 = por %p214, %p215
      %p217 = scmp.ne.s32.totalorder %s205, %s206
      %p218 = scmp.eq.s32.totalorder %s28, 1
      %p219 = por %p217, %p218
      %p221 = scmp.ne.s32.totalorder %s206, %s220
      %p222 = scmp.eq.s32.totalorder %s28, 0
      %p223 = por %p221, %p222
      %s225 = sadd.s32 %s224, 1
      %p228 = scmp.eq.s32.totalorder %s22, 1
      %p229 = scmp.ne.s32.totalorder %s224, %s226
      %p230 = scmp.eq.s32.totalorder %s22, 0
      %p231 = por %p229, %p230
      %p232 = scmp.ne.s32.totalorder %s224, %s226
      %p233 = scmp.eq.s32.totalorder %s27, 1
      %p234 = por %p232, %p233
      %p235 = scmp.ne.s32.totalorder %s226, %s227
      %p236 = scmp.eq.s32.totalorder %s27, 0
      %p237 = por %p235, %p236
      %p238 = scmp.ne.s32.totalorder %s226, %s227
      %p239 = scmp.eq.s32.totalorder %s28, 1
      %p240 = por %p238, %p239
      %p242 = scmp.ne.s32.totalorder %s227, %s241
      %p243 = scmp.eq.s32.totalorder %s28, 0
      %p244 = por %p242, %p243
      %s246 = sadd.s32 %s245, 1
      %p249 = scmp.eq.s32.totalorder %s22, 1
      %p250 = scmp.ne.s32.totalorder %s245, %s247
      %p251 = scmp.eq.s32.totalorder %s22, 0
      %p252 = por %p250, %p251
      %p253 = scmp.ne.s32.totalorder %s245, %s247
      %p254 = scmp.eq.s32.totalorder %s27, 1
      %p255 = por %p253, %p254
      %p256 = scmp.ne.s32.totalorder %s247, %s248
      %p257 = scmp.eq.s32.totalorder %s27, 0
      %p258 = por %p256, %p257
      %p259 = scmp.ne.s32.totalorder %s247, %s248
      %p260 = scmp.eq.s32.totalorder %s28, 1
      %p261 = por %p259, %p260
      %p263 = scmp.ne.s32.totalorder %s248, %s262
      %p264 = scmp.eq.s32.totalorder %s28, 0
      %p265 = por %p263, %p264
      %s267 = sadd.s32 %s266, 1
      %p270 = scmp.eq.s32.totalorder %s22, 1
      %p271 = scmp.ne.s32.totalorder %s266, %s268
      %p272 = scmp.eq.s32.totalorder %s22, 0
      %p273 = por %p271, %p272
      %p274 = scmp.ne.s32.totalorder %s266, %s268
      %p275 = scmp.eq.s32.totalorder %s27, 1
      %p276 = por %p274, %p275
      %p277 = scmp.ne.s32.totalorder %s268, %s269
      %p278 = scmp.eq.s32.totalorder %s27, 0
      %p279 = por %p277, %p278
      %p280 = scmp.ne.s32.totalorder %s268, %s269
      %p281 = scmp.eq.s32.totalorder %s28, 1
      %p282 = por %p280, %p281
      %p284 = scmp.ne.s32.totalorder %s269, %s283
      %p285 = scmp.eq.s32.totalorder %s28, 0
      %p286 = por %p284, %p285
      %s288 = sadd.s32 %s287, 1
      %p291 = scmp.eq.s32.totalorder %s22, 1
      %p292 = scmp.ne.s32.totalorder %s287, %s289
      %p293 = scmp.eq.s32.totalorder %s22, 0
      %p294 = por %p292, %p293
      %p295 = scmp.ne.s32.totalorder %s287, %s289
      %p296 = scmp.eq.s32.totalorder %s27, 1
      %p297 = por %p295, %p296
      %p298 = scmp.ne.s32.totalorder %s289, %s290
      %p299 = scmp.eq.s32.totalorder %s27, 0
      %p300 = por %p298, %p299
      %p301 = scmp.ne.s32.totalorder %s289, %s290
      %p302 = scmp.eq.s32.totalorder %s28, 1
      %p303 = por %p301, %p302
      %p305 = scmp.ne.s32.totalorder %s290, %s304
      %p306 = scmp.eq.s32.totalorder %s28, 0
      %p307 = por %p305, %p306
      %s308 = ssub.s32 %s22, %s29
      %p309 = scmp.eq.s32.totalorder %s308, 0
      %s311 = sadd.s32 %s310, 1
      %s312 = scalar_select %p309, %s310, %s311
      %p315 = pneg %p309
      %p316 = scmp.eq.s32.totalorder %s22, 1
      %p317 = por %p315, %p316
      %p318 = scmp.ne.s32.totalorder %s310, %s313
      %p319 = scmp.eq.s32.totalorder %s22, 0
      %p320 = por %p318, %p319
      %p321 = scmp.ne.s32.totalorder %s310, %s313
      %p322 = scmp.eq.s32.totalorder %s27, 1
      %p323 = por %p321, %p322
      %p324 = scmp.ne.s32.totalorder %s313, %s314
      %p325 = scmp.eq.s32.totalorder %s27, 0
      %p326 = por %p324, %p325
      %p327 = scmp.ne.s32.totalorder %s313, %s314
      %p328 = scmp.eq.s32.totalorder %s28, 1
      %p329 = por %p327, %p328
      %p331 = scmp.ne.s32.totalorder %s314, %s330
      %p332 = scmp.eq.s32.totalorder %s28, 0
      %p333 = por %p331, %p332
      %p334 = scmp.le.s32.totalorder 1, %s22
      %p335 = scmp.lt.s32.totalorder %s22, 3
      %p336 = pnand %p334, %p335
      %p337 = pneg %p336
      // Predicated region
      $region9: #{forward.1} parent=5 // pred_check
        _
      $region10: #{forward.1} parent=5 // pred_check_branch
        %339 = sbr.rel (%p336) target = $region12
      $region11: #{forward.1} parent=5 // pred_region
        %s340 = ssub.s32 %s22, 1
        // Predicated region
        $region13: #{forward.1} parent=11 // pred_check
          %p341 = pneg %p69
        $region14: #{forward.1} parent=11 // pred_check_branch
          %343 = sbr.rel (%p341) target = $region16
        $region15: #{forward.1} parent=11 // pred_region
          _
        $region16: #{forward.1} parent=11 // pred_fallthru
          _
        // Predicated region
        $region17: #{forward.1} parent=11 // pred_check
          %p344 = pneg %p90
        $region18: #{forward.1} parent=11 // pred_check_branch
          %346 = sbr.rel (%p344) target = $region20
        $region19: #{forward.1} parent=11 // pred_region
          _
        $region20: #{forward.1} parent=11 // pred_fallthru
          _
        // Predicated region
        $region21: #{forward.1} parent=11 // pred_check
          %p347 = pneg %p111
        $region22: #{forward.1} parent=11 // pred_check_branch
          %349 = sbr.rel (%p347) target = $region24
        $region23: #{forward.1} parent=11 // pred_region
          _
        $region24: #{forward.1} parent=11 // pred_fallthru
          _
        // Predicated region
        $region25: #{forward.1} parent=11 // pred_check
          %p350 = pneg %p132
        $region26: #{forward.1} parent=11 // pred_check_branch
          %352 = sbr.rel (%p350) target = $region28
        $region27: #{forward.1} parent=11 // pred_region
          _
        $region28: #{forward.1} parent=11 // pred_fallthru
          _
        // Predicated region
        $region29: #{forward.1} parent=11 // pred_check
          %p353 = pneg %p153
        $region30: #{forward.1} parent=11 // pred_check_branch
          %355 = sbr.rel (%p353) target = $region32
        $region31: #{forward.1} parent=11 // pred_region
          _
        $region32: #{forward.1} parent=11 // pred_fallthru
          _
        // Predicated region
        $region33: #{forward.1} parent=11 // pred_check
          %p356 = pneg %p174
        $region34: #{forward.1} parent=11 // pred_check_branch
          %358 = sbr.rel (%p356) target = $region36
        $region35: #{forward.1} parent=11 // pred_region
          _
        $region36: #{forward.1} parent=11 // pred_fallthru
          _
        // Predicated region
        $region37: #{forward.1} parent=11 // pred_check
          %p359 = pneg %p195
        $region38: #{forward.1} parent=11 // pred_check_branch
          %361 = sbr.rel (%p359) target = $region40
        $region39: #{forward.1} parent=11 // pred_region
          _
        $region40: #{forward.1} parent=11 // pred_fallthru
          _
        // Predicated region
        $region41: #{forward.1} parent=11 // pred_check
          %p362 = pneg %p216
        $region42: #{forward.1} parent=11 // pred_check_branch
          %364 = sbr.rel (%p362) target = $region44
        $region43: #{forward.1} parent=11 // pred_region
          _
        $region44: #{forward.1} parent=11 // pred_fallthru
          _
        // Predicated region
        $region45: #{forward.1} parent=11 // pred_check
          %p365 = pneg %p237
        $region46: #{forward.1} parent=11 // pred_check_branch
          %367 = sbr.rel (%p365) target = $region48
        $region47: #{forward.1} parent=11 // pred_region
          _
        $region48: #{forward.1} parent=11 // pred_fallthru
          _
        // Predicated region
        $region49: #{forward.1} parent=11 // pred_check
          %p368 = pneg %p258
        $region50: #{forward.1} parent=11 // pred_check_branch
          %370 = sbr.rel (%p368) target = $region52
        $region51: #{forward.1} parent=11 // pred_region
          _
        $region52: #{forward.1} parent=11 // pred_fallthru
          _
        // Predicated region
        $region53: #{forward.1} parent=11 // pred_check
          %p371 = pneg %p279
        $region54: #{forward.1} parent=11 // pred_check_branch
          %373 = sbr.rel (%p371) target = $region56
        $region55: #{forward.1} parent=11 // pred_region
          _
        $region56: #{forward.1} parent=11 // pred_fallthru
          _
        // Predicated region
        $region57: #{forward.1} parent=11 // pred_check
          %p374 = pneg %p300
        $region58: #{forward.1} parent=11 // pred_check_branch
          %376 = sbr.rel (%p374) target = $region60
        $region59: #{forward.1} parent=11 // pred_region
          _
        $region60: #{forward.1} parent=11 // pred_fallthru
          _
      $region12: #{forward.1} parent=5 // pred_fallthru
        _
      %p377 = scmp.lt.s32.totalorder %s22, 2
      // Predicated region
      $region61: #{forward.1} parent=5 // pred_check
        %p378 = pneg %p377
      $region62: #{forward.1} parent=5 // pred_check_branch
        %380 = sbr.rel (%p378) target = $region64
      $region63: #{forward.1} parent=5 // pred_region
        // Predicated region
        $region65: #{forward.1} parent=63 // pred_check
          %p381 = pneg %p42
        $region66: #{forward.1} parent=63 // pred_check_branch
          %383 = sbr.rel (%p381) target = $region68
        $region67: #{forward.1} parent=63 // pred_region
          %p384 = scmp.lt.s32.totalorder %s22, 1
          %s385 = scalar_select %p384, %s22, 1
          %s386 = smul.addr %s385, 22
          %s387 = smul.addr %s386, 8
          %s388 = scalar_lea.vmem %s0, %s387
        $region68: #{forward.1} parent=63 // pred_fallthru
          _
      $region64: #{forward.1} parent=5 // pred_fallthru
        _
      %p389 = scmp.le.s32.totalorder 1, %s22
      %p390 = scmp.lt.s32.totalorder %s22, 3
      %p391 = pnand %p389, %p390
      %p392 = pneg %p391
      // Predicated region
      $region69: #{forward.1} parent=5 // pred_check
        _
      $region70: #{forward.1} parent=5 // pred_check_branch
        %394 = sbr.rel (%p391) target = $region72
      $region71: #{forward.1} parent=5 // pred_region
        %s395 = ssub.s32 %s22, 1
        %p396 = scmp.lt.s32.totalorder %s27, 1
        %s397 = scalar_select %p396, %s27, 1
        %s398 = smul.addr %s397, 22
        %s399 = smul.addr %s398, 8
        %s400 = scalar_lea.vmem %s0, %s399
        %p401 = pneg %p48
        %p402 = pneg %p45
        %p403 = pneg %p69
        %p404 = pneg %p66
        %p405 = pneg %p90
        %p406 = pneg %p87
        %p407 = pneg %p111
        %p408 = pneg %p108
        %p409 = pneg %p132
        %p410 = pneg %p129
        %p411 = pneg %p153
        %p412 = pneg %p150
        %p413 = pneg %p174
        %p414 = pneg %p171
        %p415 = pneg %p195
        %p416 = pneg %p192
        %p417 = pneg %p216
        %p418 = pneg %p213
        %p419 = pneg %p237
        %p420 = pneg %p234
        %p421 = pneg %p258
        %p422 = pneg %p255
        %p423 = pneg %p279
        %p424 = pneg %p276
        %p425 = pneg %p300
        %p426 = pneg %p297
        %p427 = pneg %p326
        %p428 = pneg %p323
        %s429 = sand.u32 %s313, 1
        %s430 = scalar_lea.sflag [#allocation3], %s429
        %s431 = sand.u32 %s313, 1
        %s432 = scalar_lea.vmem [#allocation2], %s431
        %p433 = scmp.lt.s32.totalorder %s27, 1
        %s434 = scalar_select %p433, %s27, 1
        %s435 = smul.addr %s434, 22
        %s436 = smul.addr %s435, 8
        %s437 = scalar_lea.vmem %s0, %s436
        %v438 = vld [vmem:[%s437] sm:$0xff]
        %v439 = vld [vmem:[%s437 + $0x8] sm:$0xff]
        %v440 = vld [vmem:[%s437 + $0x10] sm:$0xff]
        %v441 = vld [vmem:[%s437 + $0x18] sm:$0xff]
        %v442 = vld [vmem:[%s437 + $0x20] sm:$0xff]
        %v443 = vld [vmem:[%s437 + $0x28] sm:$0xff]
        %v444 = vld [vmem:[%s437 + $0x30] sm:$0xff]
        %v445 = vld [vmem:[%s437 + $0x38] sm:$0xff]
        %v446 = vld [vmem:[%s437 + $0x40] sm:$0xff]
        %v447 = vld [vmem:[%s437 + $0x48] sm:$0xff]
        %v448 = vld [vmem:[%s437 + $0x50] sm:$0xff]
        %v449 = vld [vmem:[%s437 + $0x58] sm:$0xff]
        %v450 = vld [vmem:[%s437 + $0x60] sm:$0xff]
        %v451 = vld [vmem:[%s437 + $0x68] sm:$0xff]
        %v452 = vld [vmem:[%s437 + $0x70] sm:$0xff]
        %v453 = vld [vmem:[%s437 + $0x78] sm:$0xff]
        %v454 = vld [vmem:[%s437 + $0x80] sm:$0xff]
        %v455 = vld [vmem:[%s437 + $0x88] sm:$0xff]
        %v456 = vld [vmem:[%s437 + $0x90] sm:$0xff]
        %v457 = vld [vmem:[%s437 + $0x98] sm:$0xff]
        %v458 = vld [vmem:[%s437 + $0xa0] sm:$0x1]
        %v459 = vld [vmem:[%s437 + $0xa8] sm:$0x1]
        %v460 = vld [vmem:[%s1] sm:$0xff]
        %v461 = vld [vmem:[%s1 + $0x8] sm:$0xff]
        %v462 = vld [vmem:[%s1 + $0x10] sm:$0xff]
        %v463 = vld [vmem:[%s1 + $0x18] sm:$0xff]
        %v464 = vld [vmem:[%s1 + $0x20] sm:$0xff]
        %v465 = vld [vmem:[%s1 + $0x28] sm:$0xff]
        %v466 = vld [vmem:[%s1 + $0x30] sm:$0xff]
        %v467 = vld [vmem:[%s1 + $0x38] sm:$0xff]
        %v468 = vld [vmem:[%s1 + $0x40] sm:$0xff]
        %v469 = vld [vmem:[%s1 + $0x48] sm:$0xff]
        %v470 = vld [vmem:[%s1 + $0x50] sm:$0xff]
        %v471 = vld [vmem:[%s1 + $0x58] sm:$0xff]
        %v472 = vld [vmem:[%s1 + $0x60] sm:$0xff]
        %v473 = vld [vmem:[%s1 + $0x68] sm:$0xff]
        %v474 = vld [vmem:[%s1 + $0x70] sm:$0xff]
        %v475 = vld [vmem:[%s1 + $0x78] sm:$0xff]
        %v476 = vld [vmem:[%s1 + $0x80] sm:$0xff]
        %v477 = vld [vmem:[%s1 + $0x88] sm:$0xff]
        %v478 = vld [vmem:[%s1 + $0x90] sm:$0xff]
        %v479 = vld [vmem:[%s1 + $0x98] sm:$0xff]
        %v480 = vld [vmem:[%s1 + $0xa0] sm:$0xff]
        %v481 = vld [vmem:[%s1 + $0xa8] sm:$0xff]
        %v482 = vld [vmem:[%s1 + $0xb0] sm:$0xff]
        %v483 = vld [vmem:[%s1 + $0xb8] sm:$0xff]
        %v484 = vld [vmem:[%s1 + $0xc0] sm:$0xff]
        %v485 = vld [vmem:[%s1 + $0xc8] sm:$0xff]
        %v486 = vld [vmem:[%s1 + $0xd0] sm:$0xff]
        %v487 = vld [vmem:[%s1 + $0xd8] sm:$0xff]
        %v488 = vld [vmem:[%s1 + $0xe0] sm:$0xff]
        %v489 = vld [vmem:[%s1 + $0xe8] sm:$0xff]
        %v490 = vld [vmem:[%s1 + $0xf0] sm:$0xff]
        %v491 = vld [vmem:[%s1 + $0xf8] sm:$0xff]
        %v492 = vld [vmem:[%s2] sm:$0x1]
        %v494 = vlaneseq
        %v495 = vshrl.u32 %v494, 7
        %v496 = vsub.s32 0, %v495
        %v497 = vrot.slane %v492, %v496
        %499 = vmatprep.subr.mxu0 0.0
        %500 = vmatpush1.msra.mxu0 %v475
        %501 = vmatprep.subr.mxu0 0.0
        %502 = vmatpush1.msra.mxu0 %v474
        %503 = vmatprep.subr.mxu0 0.0
        %504 = vmatpush1.msra.mxu0 %v473
        %505 = vmatprep.subr.mxu0 0.0
        %506 = vmatpush1.msra.mxu0 %v472
        %507 = vmatprep.subr.mxu0 0.0
        %508 = vmatpush1.msra.mxu0 %v471
        %509 = vmatprep.subr.mxu0 0.0
        %510 = vmatpush1.msra.mxu0 %v470
        %511 = vmatprep.subr.mxu0 0.0
        %512 = vmatpush1.msra.mxu0 %v469
        %513 = vmatprep.subr.mxu0 0.0
        %514 = vmatpush1.msra.mxu0 %v468
        %515 = vmatprep.subr.mxu0 0.0
        %516 = vmatpush1.msra.mxu0 %v467
        %517 = vmatprep.subr.mxu0 0.0
        %518 = vmatpush1.msra.mxu0 %v466
        %519 = vmatprep.subr.mxu0 0.0
        %520 = vmatpush1.msra.mxu0 %v465
        %521 = vmatprep.subr.mxu0 0.0
        %522 = vmatpush1.msra.mxu0 %v464
        %523 = vmatprep.subr.mxu0 0.0
        %524 = vmatpush1.msra.mxu0 %v463
        %525 = vmatprep.subr.mxu0 0.0
        %526 = vmatpush1.msra.mxu0 %v462
        %527 = vmatprep.subr.mxu0 0.0
        %528 = vmatpush1.msra.mxu0 %v461
        %529 = vmatprep.subr.mxu0 0.0
        %530 = vmatpush1.msra.mxu0 %v460
        %531 = vmatprep.subr.mxu0 0.0
        %532 = vmatpush2.msra.mxu0 %v491
        %533 = vmatprep.subr.mxu0 0.0
        %534 = vmatpush2.msra.mxu0 %v490
        %535 = vmatprep.subr.mxu0 0.0
        %536 = vmatpush2.msra.mxu0 %v489
        %537 = vmatprep.subr.mxu0 0.0
        %538 = vmatpush2.msra.mxu0 %v488
        %539 = vmatprep.subr.mxu0 0.0
        %540 = vmatpush2.msra.mxu0 %v487
        %541 = vmatprep.subr.mxu0 0.0
        %542 = vmatpush2.msra.mxu0 %v486
        %543 = vmatprep.subr.mxu0 0.0
        %544 = vmatpush2.msra.mxu0 %v485
        %545 = vmatprep.subr.mxu0 0.0
        %546 = vmatpush2.msra.mxu0 %v484
        %547 = vmatprep.subr.mxu0 0.0
        %548 = vmatpush2.msra.mxu0 %v483
        %549 = vmatprep.subr.mxu0 0.0
        %550 = vmatpush2.msra.mxu0 %v482
        %551 = vmatprep.subr.mxu0 0.0
        %552 = vmatpush2.msra.mxu0 %v481
        %553 = vmatprep.subr.mxu0 0.0
        %554 = vmatpush2.msra.mxu0 %v480
        %555 = vmatprep.subr.mxu0 0.0
        %556 = vmatpush2.msra.mxu0 %v479
        %557 = vmatprep.subr.mxu0 0.0
        %558 = vmatpush2.msra.mxu0 %v478
        %559 = vmatprep.subr.mxu0 0.0
        %560 = vmatpush2.msra.mxu0 %v477
        %561 = vmatprep.subr.mxu0 0.0
        %562 = vmatpush2.msra.mxu0 %v476
        %563 = vmatprep.mubr.f32.mxu0 %v439
        %564 = vmatmul.mubr.f32.gmra.mxu0 %v438
        %v565 = vpop.f32.mrf.mxu0
        %v566 = vadd.f32 %v497, %v565
        %v567 = vpop.f32.mrf.mxu0
        %568 = vmatprep.mubr.f32.mxu0 %v441
        %569 = vmatmul.mubr.f32.gmra.mxu0 %v440
        %v570 = vpop.f32.mrf.mxu0
        %v571 = vadd.f32 %v497, %v570
        %v572 = vpop.f32.mrf.mxu0
        %573 = vmatprep.mubr.f32.mxu0 %v443
        %574 = vmatmul.mubr.f32.gmra.mxu0 %v442
        %v575 = vpop.f32.mrf.mxu0
        %v576 = vadd.f32 %v497, %v575
        %v577 = vpop.f32.mrf.mxu0
        %578 = vmatprep.mubr.f32.mxu0 %v445
        %579 = vmatmul.mubr.f32.gmra.mxu0 %v444
        %v580 = vpop.f32.mrf.mxu0
        %v581 = vadd.f32 %v497, %v580
        %v582 = vpop.f32.mrf.mxu0
        %583 = vmatprep.mubr.f32.mxu0 %v447
        %584 = vmatmul.mubr.f32.gmra.mxu0 %v446
        %v585 = vpop.f32.mrf.mxu0
        %v586 = vadd.f32 %v497, %v585
        %v587 = vpop.f32.mrf.mxu0
        %588 = vmatprep.mubr.f32.mxu0 %v449
        %589 = vmatmul.mubr.f32.gmra.mxu0 %v448
        %v590 = vpop.f32.mrf.mxu0
        %v591 = vadd.f32 %v497, %v590
        %v592 = vpop.f32.mrf.mxu0
        %593 = vmatprep.mubr.f32.mxu0 %v451
        %594 = vmatmul.mubr.f32.gmra.mxu0 %v450
        %v595 = vpop.f32.mrf.mxu0
        %v596 = vadd.f32 %v497, %v595
        %v597 = vpop.f32.mrf.mxu0
        %598 = vmatprep.mubr.f32.mxu0 %v453
        %599 = vmatmul.mubr.f32.gmra.mxu0 %v452
        %v600 = vpop.f32.mrf.mxu0
        %v601 = vadd.f32 %v497, %v600
        %v602 = vpop.f32.mrf.mxu0
        %603 = vmatprep.mubr.f32.mxu0 %v455
        %604 = vmatmul.mubr.f32.gmra.mxu0 %v454
        %v605 = vpop.f32.mrf.mxu0
        %v606 = vadd.f32 %v497, %v605
        %v607 = vpop.f32.mrf.mxu0
        %608 = vmatprep.mubr.f32.mxu0 %v457
        %609 = vmatmul.mubr.f32.gmra.mxu0 %v456
        %v610 = vpop.f32.mrf.mxu0
        %v611 = vadd.f32 %v497, %v610
        %v612 = vpop.f32.mrf.mxu0
        %613 = vmatprep.mubr.f32.mxu0 %v459
        %614 = vmatmul.mubr.f32.gmra.mxu0 %v458
        %v615 = vpop.f32.mrf.mxu0
        %v616 = vadd.f32 %v497, %v615
        %v617 = vpop.f32.mrf.mxu0
        %618 = vdwg.mxu0
        %v619 = vmax.f32 %v566, 0.0
        %v620 = vmax.f32 %v571, 0.0
        %v621 = vmax.f32 %v576, 0.0
        %v622 = vmax.f32 %v581, 0.0
        %v623 = vmax.f32 %v586, 0.0
        %v624 = vmax.f32 %v591, 0.0
        %v625 = vmax.f32 %v596, 0.0
        %v626 = vmax.f32 %v601, 0.0
        %v627 = vmax.f32 %v606, 0.0
        %v628 = vmax.f32 %v611, 0.0
        %v629 = vmax.f32 %v616, 0.0
        %v630 = vld [vmem:[%s3] sm:$0xff]
        %v631 = vld [vmem:[%s3 + $0x8] sm:$0x1]
        %vm632 = vcmask 662528
        %v634 = vsel %vm632, %v630, 0
        %v637 = vsel %vm632, %v631, 0
        %vm639 = vcmask 1040384
        %v641 = vsel %vm639, %v629, 0
        %643 = vmatprep.subr.mxu0 0.0
        %644 = vmatpush1.msra.mxu0 0.0
        %645 = vmatprep.subr.mxu0 0.0
        %646 = vmatpush1.msra.mxu0 0.0
        %647 = vmatprep.subr.mxu0 0.0
        %648 = vmatpush1.msra.mxu0 0.0
        %649 = vmatprep.subr.mxu0 0.0
        %650 = vmatpush1.msra.mxu0 0.0
        %651 = vmatprep.subr.mxu0 0.0
        %652 = vmatpush1.msra.mxu0 0.0
        %653 = vmatprep.subr.mxu0 0.0
        %654 = vmatpush1.msra.mxu0 %v641
        %655 = vmatprep.subr.mxu0 0.0
        %656 = vmatpush1.msra.mxu0 %v628
        %657 = vmatprep.subr.mxu0 0.0
        %658 = vmatpush1.msra.mxu0 %v627
        %659 = vmatprep.subr.mxu0 0.0
        %660 = vmatpush1.msra.mxu0 %v626
        %661 = vmatprep.subr.mxu0 0.0
        %662 = vmatpush1.msra.mxu0 %v625
        %663 = vmatprep.subr.mxu0 0.0
        %664 = vmatpush1.msra.mxu0 %v624
        %665 = vmatprep.subr.mxu0 0.0
        %666 = vmatpush1.msra.mxu0 %v623
        %667 = vmatprep.subr.mxu0 0.0
        %668 = vmatpush1.msra.mxu0 %v622
        %669 = vmatprep.subr.mxu0 0.0
        %670 = vmatpush1.msra.mxu0 %v621
        %671 = vmatprep.subr.mxu0 0.0
        %672 = vmatpush1.msra.mxu0 %v620
        %673 = vmatprep.subr.mxu0 0.0
        %674 = vmatpush1.msra.mxu0 %v619
        %675 = vmatprep.subr.mxu0 0.0
        %676 = vmatpush2.msra.mxu0 0.0
        %677 = vmatprep.subr.mxu0 0.0
        %678 = vmatpush2.msra.mxu0 0.0
        %679 = vmatprep.subr.mxu0 0.0
        %680 = vmatpush2.msra.mxu0 0.0
        %681 = vmatprep.subr.mxu0 0.0
        %682 = vmatpush2.msra.mxu0 0.0
        %683 = vmatprep.subr.mxu0 0.0
        %684 = vmatpush2.msra.mxu0 0.0
        %685 = vmatprep.subr.mxu0 0.0
        %686 = vmatpush2.msra.mxu0 0.0
        %687 = vmatprep.subr.mxu0 0.0
        %688 = vmatpush2.msra.mxu0 0.0
        %689 = vmatprep.subr.mxu0 0.0
        %690 = vmatpush2.msra.mxu0 0.0
        %691 = vmatprep.subr.mxu0 0.0
        %692 = vmatpush2.msra.mxu0 0.0
        %693 = vmatprep.subr.mxu0 0.0
        %694 = vmatpush2.msra.mxu0 0.0
        %695 = vmatprep.subr.mxu0 0.0
        %696 = vmatpush2.msra.mxu0 0.0
        %697 = vmatprep.subr.mxu0 0.0
        %698 = vmatpush2.msra.mxu0 0.0
        %699 = vmatprep.subr.mxu0 0.0
        %700 = vmatpush2.msra.mxu0 0.0
        %701 = vmatprep.subr.mxu0 0.0
        %702 = vmatpush2.msra.mxu0 0.0
        %703 = vmatprep.subr.mxu0 0.0
        %704 = vmatpush2.msra.mxu0 0.0
        %705 = vmatprep.subr.mxu0 0.0
        %706 = vmatpush2.msra.mxu0 0.0
        %707 = vmatprep.mubr.f32.mxu0 0.0
        %708 = vmatmul.mubr.f32.gmra.mxu0 %v634
        %v709 = vpop.f32.mrf.mxu0
        %v710 = vadd.f32 0.0, %v709
        %v711 = vpop.f32.mrf.mxu0
        %712 = vmatprep.mubr.f32.mxu0 0.0
        %713 = vmatmul.mubr.f32.gmra.mxu0 %v637
        %v714 = vpop.f32.mrf.mxu0
        %v715 = vadd.f32 0.0, %v714
        %v716 = vpop.f32.mrf.mxu0
        %717 = vdwg.mxu0
        %v718 = vld [vmem:[%s4] sm:$0xff]
        %v719 = vld [vmem:[%s4 + $0x8] sm:$0xff]
        %v720 = vld [vmem:[%s4 + $0x10] sm:$0xff]
        %v721 = vld [vmem:[%s4 + $0x18] sm:$0xff]
        %v722 = vld [vmem:[%s4 + $0x20] sm:$0xff]
        %v723 = vld [vmem:[%s4 + $0x28] sm:$0xff]
        %v724 = vld [vmem:[%s4 + $0x30] sm:$0xff]
        %v725 = vld [vmem:[%s4 + $0x38] sm:$0xff]
        %v726 = vld [vmem:[%s4 + $0x40] sm:$0xff]
        %v727 = vld [vmem:[%s4 + $0x48] sm:$0xff]
        %v728 = vld [vmem:[%s4 + $0x50] sm:$0xff]
        %v729 = vld [vmem:[%s4 + $0x58] sm:$0xff]
        %v730 = vld [vmem:[%s4 + $0x60] sm:$0xff]
        %v731 = vld [vmem:[%s4 + $0x68] sm:$0xff]
        %v732 = vld [vmem:[%s4 + $0x70] sm:$0xff]
        %v733 = vld [vmem:[%s4 + $0x78] sm:$0xff]
        %s734 = scalar_lea.vmem %s3, 16
        %v735 = vld [vmem:[%s734] sm:$0xff]
        %v736 = vld [vmem:[%s734 + $0x8] sm:$0x1]
        %v738 = vsel %vm632, %v735, 0
        %v741 = vsel %vm632, %v736, 0
        %743 = vmatprep.subr.mxu0 0.0
        %744 = vmatpush1.msra.mxu0 0.0
        %745 = vmatprep.subr.mxu0 0.0
        %746 = vmatpush1.msra.mxu0 0.0
        %747 = vmatprep.subr.mxu0 0.0
        %748 = vmatpush1.msra.mxu0 0.0
        %749 = vmatprep.subr.mxu0 0.0
        %750 = vmatpush1.msra.mxu0 0.0
        %751 = vmatprep.subr.mxu0 0.0
        %752 = vmatpush1.msra.mxu0 0.0
        %753 = vmatprep.subr.mxu0 0.0
        %754 = vmatpush1.msra.mxu0 %v641
        %755 = vmatprep.subr.mxu0 0.0
        %756 = vmatpush1.msra.mxu0 %v628
        %757 = vmatprep.subr.mxu0 0.0
        %758 = vmatpush1.msra.mxu0 %v627
        %759 = vmatprep.subr.mxu0 0.0
        %760 = vmatpush1.msra.mxu0 %v626
        %761 = vmatprep.subr.mxu0 0.0
        %762 = vmatpush1.msra.mxu0 %v625
        %763 = vmatprep.subr.mxu0 0.0
        %764 = vmatpush1.msra.mxu0 %v624
        %765 = vmatprep.subr.mxu0 0.0
        %766 = vmatpush1.msra.mxu0 %v623
        %767 = vmatprep.subr.mxu0 0.0
        %768 = vmatpush1.msra.mxu0 %v622
        %769 = vmatprep.subr.mxu0 0.0
        %770 = vmatpush1.msra.mxu0 %v621
        %771 = vmatprep.subr.mxu0 0.0
        %772 = vmatpush1.msra.mxu0 %v620
        %773 = vmatprep.subr.mxu0 0.0
        %774 = vmatpush1.msra.mxu0 %v619
        %775 = vmatprep.subr.mxu0 0.0
        %776 = vmatpush2.msra.mxu0 0.0
        %777 = vmatprep.subr.mxu0 0.0
        %778 = vmatpush2.msra.mxu0 0.0
        %779 = vmatprep.subr.mxu0 0.0
        %780 = vmatpush2.msra.mxu0 0.0
        %781 = vmatprep.subr.mxu0 0.0
        %782 = vmatpush2.msra.mxu0 0.0
        %783 = vmatprep.subr.mxu0 0.0
        %784 = vmatpush2.msra.mxu0 0.0
        %785 = vmatprep.subr.mxu0 0.0
        %786 = vmatpush2.msra.mxu0 0.0
        %787 = vmatprep.subr.mxu0 0.0
        %788 = vmatpush2.msra.mxu0 0.0
        %789 = vmatprep.subr.mxu0 0.0
        %790 = vmatpush2.msra.mxu0 0.0
        %791 = vmatprep.subr.mxu0 0.0
        %792 = vmatpush2.msra.mxu0 0.0
        %793 = vmatprep.subr.mxu0 0.0
        %794 = vmatpush2.msra.mxu0 0.0
        %795 = vmatprep.subr.mxu0 0.0
        %796 = vmatpush2.msra.mxu0 0.0
        %797 = vmatprep.subr.mxu0 0.0
        %798 = vmatpush2.msra.mxu0 0.0
        %799 = vmatprep.subr.mxu0 0.0
        %800 = vmatpush2.msra.mxu0 0.0
        %801 = vmatprep.subr.mxu0 0.0
        %802 = vmatpush2.msra.mxu0 0.0
        %803 = vmatprep.subr.mxu0 0.0
        %804 = vmatpush2.msra.mxu0 0.0
        %805 = vmatprep.subr.mxu0 0.0
        %806 = vmatpush2.msra.mxu0 0.0
        %807 = vmatprep.mubr.f32.mxu0 0.0
        %808 = vmatmul.mubr.f32.gmra.mxu0 %v738
        %v809 = vpop.f32.mrf.mxu0
        %v810 = vadd.f32 0.0, %v809
        %v811 = vpop.f32.mrf.mxu0
        %812 = vmatprep.mubr.f32.mxu0 0.0
        %813 = vmatmul.mubr.f32.gmra.mxu0 %v741
        %v814 = vpop.f32.mrf.mxu0
        %v815 = vadd.f32 0.0, %v814
        %v816 = vpop.f32.mrf.mxu0
        %817 = vdwg.mxu0
        %s818 = scalar_lea.vmem %s4, 128
        %v819 = vld [vmem:[%s818] sm:$0xff]
        %v820 = vld [vmem:[%s818 + $0x8] sm:$0xff]
        %v821 = vld [vmem:[%s818 + $0x10] sm:$0xff]
        %v822 = vld [vmem:[%s818 + $0x18] sm:$0xff]
        %v823 = vld [vmem:[%s818 + $0x20] sm:$0xff]
        %v824 = vld [vmem:[%s818 + $0x28] sm:$0xff]
        %v825 = vld [vmem:[%s818 + $0x30] sm:$0xff]
        %v826 = vld [vmem:[%s818 + $0x38] sm:$0xff]
        %v827 = vld [vmem:[%s818 + $0x40] sm:$0xff]
        %v828 = vld [vmem:[%s818 + $0x48] sm:$0xff]
        %v829 = vld [vmem:[%s818 + $0x50] sm:$0xff]
        %v830 = vld [vmem:[%s818 + $0x58] sm:$0xff]
        %v831 = vld [vmem:[%s818 + $0x60] sm:$0xff]
        %v832 = vld [vmem:[%s818 + $0x68] sm:$0xff]
        %v833 = vld [vmem:[%s818 + $0x70] sm:$0xff]
        %v834 = vld [vmem:[%s818 + $0x78] sm:$0xff]
        %835 = vmatprep.subr.mxu0 0.0
        %836 = vmatpush1.msra.mxu0 %v834
        %837 = vmatprep.subr.mxu0 0.0
        %838 = vmatpush1.msra.mxu0 %v833
        %839 = vmatprep.subr.mxu0 0.0
        %840 = vmatpush1.msra.mxu0 %v832
        %841 = vmatprep.subr.mxu0 0.0
        %842 = vmatpush1.msra.mxu0 %v831
        %843 = vmatprep.subr.mxu0 0.0
        %844 = vmatpush1.msra.mxu0 %v830
        %845 = vmatprep.subr.mxu0 0.0
        %846 = vmatpush1.msra.mxu0 %v829
        %847 = vmatprep.subr.mxu0 0.0
        %848 = vmatpush1.msra.mxu0 %v828
        %849 = vmatprep.subr.mxu0 0.0
        %850 = vmatpush1.msra.mxu0 %v827
        %851 = vmatprep.subr.mxu0 0.0
        %852 = vmatpush1.msra.mxu0 %v826
        %853 = vmatprep.subr.mxu0 0.0
        %854 = vmatpush1.msra.mxu0 %v825
        %855 = vmatprep.subr.mxu0 0.0
        %856 = vmatpush1.msra.mxu0 %v824
        %857 = vmatprep.subr.mxu0 0.0
        %858 = vmatpush1.msra.mxu0 %v823
        %859 = vmatprep.subr.mxu0 0.0
        %860 = vmatpush1.msra.mxu0 %v822
        %861 = vmatprep.subr.mxu0 0.0
        %862 = vmatpush1.msra.mxu0 %v821
        %863 = vmatprep.subr.mxu0 0.0
        %864 = vmatpush1.msra.mxu0 %v820
        %865 = vmatprep.subr.mxu0 0.0
        %866 = vmatpush1.msra.mxu0 %v819
        %867 = vmatprep.subr.mxu0 0.0
        %868 = vmatpush2.msra.mxu0 0.0
        %869 = vmatprep.subr.mxu0 0.0
        %870 = vmatpush2.msra.mxu0 0.0
        %871 = vmatprep.subr.mxu0 0.0
        %872 = vmatpush2.msra.mxu0 0.0
        %873 = vmatprep.subr.mxu0 0.0
        %874 = vmatpush2.msra.mxu0 0.0
        %875 = vmatprep.subr.mxu0 0.0
        %876 = vmatpush2.msra.mxu0 0.0
        %877 = vmatprep.subr.mxu0 0.0
        %878 = vmatpush2.msra.mxu0 0.0
        %879 = vmatprep.subr.mxu0 0.0
        %880 = vmatpush2.msra.mxu0 0.0
        %881 = vmatprep.subr.mxu0 0.0
        %882 = vmatpush2.msra.mxu0 0.0
        %883 = vmatprep.subr.mxu0 0.0
        %884 = vmatpush2.msra.mxu0 0.0
        %885 = vmatprep.subr.mxu0 0.0
        %886 = vmatpush2.msra.mxu0 0.0
        %887 = vmatprep.subr.mxu0 0.0
        %888 = vmatpush2.msra.mxu0 0.0
        %889 = vmatprep.subr.mxu0 0.0
        %890 = vmatpush2.msra.mxu0 0.0
        %891 = vmatprep.subr.mxu0 0.0
        %892 = vmatpush2.msra.mxu0 0.0
        %893 = vmatprep.subr.mxu0 0.0
        %894 = vmatpush2.msra.mxu0 0.0
        %895 = vmatprep.subr.mxu0 0.0
        %896 = vmatpush2.msra.mxu0 0.0
        %897 = vmatprep.subr.mxu0 0.0
        %898 = vmatpush2.msra.mxu0 0.0
        %899 = vmatprep.mubr.f32.mxu0 0.0
        %900 = vmatmul.mubr.f32.gmra.mxu0 %v810
        %v901 = vpop.f32.mrf.mxu0
        %v902 = vadd.f32 0.0, %v901
        %v903 = vpop.f32.mrf.mxu0
        %904 = vmatprep.mubr.f32.mxu0 0.0
        %905 = vmatmul.mubr.f32.gmra.mxu0 %v815
        %v906 = vpop.f32.mrf.mxu0
        %v907 = vadd.f32 0.0, %v906
        %v908 = vpop.f32.mrf.mxu0
        %909 = vdwg.mxu0
        %910 = vmatprep.subr.mxu0 0.0
        %911 = vmatpush1.msra.mxu0 %v733
        %912 = vmatprep.subr.mxu0 0.0
        %913 = vmatpush1.msra.mxu0 %v732
        %914 = vmatprep.subr.mxu0 0.0
        %915 = vmatpush1.msra.mxu0 %v731
        %916 = vmatprep.subr.mxu0 0.0
        %917 = vmatpush1.msra.mxu0 %v730
        %918 = vmatprep.subr.mxu0 0.0
        %919 = vmatpush1.msra.mxu0 %v729
        %920 = vmatprep.subr.mxu0 0.0
        %921 = vmatpush1.msra.mxu0 %v728
        %922 = vmatprep.subr.mxu0 0.0
        %923 = vmatpush1.msra.mxu0 %v727
        %924 = vmatprep.subr.mxu0 0.0
        %925 = vmatpush1.msra.mxu0 %v726
        %926 = vmatprep.subr.mxu0 0.0
        %927 = vmatpush1.msra.mxu0 %v725
        %928 = vmatprep.subr.mxu0 0.0
        %929 = vmatpush1.msra.mxu0 %v724
        %930 = vmatprep.subr.mxu0 0.0
        %931 = vmatpush1.msra.mxu0 %v723
        %932 = vmatprep.subr.mxu0 0.0
        %933 = vmatpush1.msra.mxu0 %v722
        %934 = vmatprep.subr.mxu0 0.0
        %935 = vmatpush1.msra.mxu0 %v721
        %936 = vmatprep.subr.mxu0 0.0
        %937 = vmatpush1.msra.mxu0 %v720
        %938 = vmatprep.subr.mxu0 0.0
        %939 = vmatpush1.msra.mxu0 %v719
        %940 = vmatprep.subr.mxu0 0.0
        %941 = vmatpush1.msra.mxu0 %v718
        %942 = vmatprep.subr.mxu0 0.0
        %943 = vmatpush2.msra.mxu0 0.0
        %944 = vmatprep.subr.mxu0 0.0
        %945 = vmatpush2.msra.mxu0 0.0
        %946 = vmatprep.subr.mxu0 0.0
        %947 = vmatpush2.msra.mxu0 0.0
        %948 = vmatprep.subr.mxu0 0.0
        %949 = vmatpush2.msra.mxu0 0.0
        %950 = vmatprep.subr.mxu0 0.0
        %951 = vmatpush2.msra.mxu0 0.0
        %952 = vmatprep.subr.mxu0 0.0
        %953 = vmatpush2.msra.mxu0 0.0
        %954 = vmatprep.subr.mxu0 0.0
        %955 = vmatpush2.msra.mxu0 0.0
        %956 = vmatprep.subr.mxu0 0.0
        %957 = vmatpush2.msra.mxu0 0.0
        %958 = vmatprep.subr.mxu0 0.0
        %959 = vmatpush2.msra.mxu0 0.0
        %960 = vmatprep.subr.mxu0 0.0
        %961 = vmatpush2.msra.mxu0 0.0
        %962 = vmatprep.subr.mxu0 0.0
        %963 = vmatpush2.msra.mxu0 0.0
        %964 = vmatprep.subr.mxu0 0.0
        %965 = vmatpush2.msra.mxu0 0.0
        %966 = vmatprep.subr.mxu0 0.0
        %967 = vmatpush2.msra.mxu0 0.0
        %968 = vmatprep.subr.mxu0 0.0
        %969 = vmatpush2.msra.mxu0 0.0
        %970 = vmatprep.subr.mxu0 0.0
        %971 = vmatpush2.msra.mxu0 0.0
        %972 = vmatprep.subr.mxu0 0.0
        %973 = vmatpush2.msra.mxu0 0.0
        %974 = vmatprep.mubr.f32.mxu0 0.0
        %975 = vmatmul.mubr.f32.gmra.mxu0 %v710
        %v976 = vpop.f32.mrf.mxu0
        %v977 = vadd.f32 %v902, %v976
        %v978 = vpop.f32.mrf.mxu0
        %979 = vmatprep.mubr.f32.mxu0 0.0
        %980 = vmatmul.mubr.f32.gmra.mxu0 %v715
        %v981 = vpop.f32.mrf.mxu0
        %v982 = vadd.f32 %v907, %v981
        %v983 = vpop.f32.mrf.mxu0
        %984 = vdwg.mxu0
        %s985 = scalar_lea.vmem %s3, 32
        %v986 = vld [vmem:[%s985] sm:$0xff]
        %v987 = vld [vmem:[%s985 + $0x8] sm:$0x1]
        %v989 = vsel %vm632, %v986, 0
        %v992 = vsel %vm632, %v987, 0
        %994 = vmatprep.subr.mxu0 0.0
        %995 = vmatpush1.msra.mxu0 0.0
        %996 = vmatprep.subr.mxu0 0.0
        %997 = vmatpush1.msra.mxu0 0.0
        %998 = vmatprep.subr.mxu0 0.0
        %999 = vmatpush1.msra.mxu0 0.0
        %1000 = vmatprep.subr.mxu0 0.0
        %1001 = vmatpush1.msra.mxu0 0.0
        %1002 = vmatprep.subr.mxu0 0.0
        %1003 = vmatpush1.msra.mxu0 0.0
        %1004 = vmatprep.subr.mxu0 0.0
        %1005 = vmatpush1.msra.mxu0 %v641
        %1006 = vmatprep.subr.mxu0 0.0
        %1007 = vmatpush1.msra.mxu0 %v628
        %1008 = vmatprep.subr.mxu0 0.0
        %1009 = vmatpush1.msra.mxu0 %v627
        %1010 = vmatprep.subr.mxu0 0.0
        %1011 = vmatpush1.msra.mxu0 %v626
        %1012 = vmatprep.subr.mxu0 0.0
        %1013 = vmatpush1.msra.mxu0 %v625
        %1014 = vmatprep.subr.mxu0 0.0
        %1015 = vmatpush1.msra.mxu0 %v624
        %1016 = vmatprep.subr.mxu0 0.0
        %1017 = vmatpush1.msra.mxu0 %v623
        %1018 = vmatprep.subr.mxu0 0.0
        %1019 = vmatpush1.msra.mxu0 %v622
        %1020 = vmatprep.subr.mxu0 0.0
        %1021 = vmatpush1.msra.mxu0 %v621
        %1022 = vmatprep.subr.mxu0 0.0
        %1023 = vmatpush1.msra.mxu0 %v620
        %1024 = vmatprep.subr.mxu0 0.0
        %1025 = vmatpush1.msra.mxu0 %v619
        %1026 = vmatprep.subr.mxu0 0.0
        %1027 = vmatpush2.msra.mxu0 0.0
        %1028 = vmatprep.subr.mxu0 0.0
        %1029 = vmatpush2.msra.mxu0 0.0
        %1030 = vmatprep.subr.mxu0 0.0
        %1031 = vmatpush2.msra.mxu0 0.0
        %1032 = vmatprep.subr.mxu0 0.0
        %1033 = vmatpush2.msra.mxu0 0.0
        %1034 = vmatprep.subr.mxu0 0.0
        %1035 = vmatpush2.msra.mxu0 0.0
        %1036 = vmatprep.subr.mxu0 0.0
        %1037 = vmatpush2.msra.mxu0 0.0
        %1038 = vmatprep.subr.mxu0 0.0
        %1039 = vmatpush2.msra.mxu0 0.0
        %1040 = vmatprep.subr.mxu0 0.0
        %1041 = vmatpush2.msra.mxu0 0.0
        %1042 = vmatprep.subr.mxu0 0.0
        %1043 = vmatpush2.msra.mxu0 0.0
        %1044 = vmatprep.subr.mxu0 0.0
        %1045 = vmatpush2.msra.mxu0 0.0
        %1046 = vmatprep.subr.mxu0 0.0
        %1047 = vmatpush2.msra.mxu0 0.0
        %1048 = vmatprep.subr.mxu0 0.0
        %1049 = vmatpush2.msra.mxu0 0.0
        %1050 = vmatprep.subr.mxu0 0.0
        %1051 = vmatpush2.msra.mxu0 0.0
        %1052 = vmatprep.subr.mxu0 0.0
        %1053 = vmatpush2.msra.mxu0 0.0
        %1054 = vmatprep.subr.mxu0 0.0
        %1055 = vmatpush2.msra.mxu0 0.0
        %1056 = vmatprep.subr.mxu0 0.0
        %1057 = vmatpush2.msra.mxu0 0.0
        %1058 = vmatprep.mubr.f32.mxu0 0.0
        %1059 = vmatmul.mubr.f32.gmra.mxu0 %v989
        %v1060 = vpop.f32.mrf.mxu0
        %v1061 = vadd.f32 0.0, %v1060
        %v1062 = vpop.f32.mrf.mxu0
        %1063 = vmatprep.mubr.f32.mxu0 0.0
        %1064 = vmatmul.mubr.f32.gmra.mxu0 %v992
        %v1065 = vpop.f32.mrf.mxu0
        %v1066 = vadd.f32 0.0, %v1065
        %v1067 = vpop.f32.mrf.mxu0
        %1068 = vdwg.mxu0
        %s1069 = scalar_lea.vmem %s4, 256
        %v1070 = vld [vmem:[%s1069] sm:$0xff]
        %v1071 = vld [vmem:[%s1069 + $0x8] sm:$0xff]
        %v1072 = vld [vmem:[%s1069 + $0x10] sm:$0xff]
        %v1073 = vld [vmem:[%s1069 + $0x18] sm:$0xff]
        %v1074 = vld [vmem:[%s1069 + $0x20] sm:$0xff]
        %v1075 = vld [vmem:[%s1069 + $0x28] sm:$0xff]
        %v1076 = vld [vmem:[%s1069 + $0x30] sm:$0xff]
        %v1077 = vld [vmem:[%s1069 + $0x38] sm:$0xff]
        %v1078 = vld [vmem:[%s1069 + $0x40] sm:$0xff]
        %v1079 = vld [vmem:[%s1069 + $0x48] sm:$0xff]
        %v1080 = vld [vmem:[%s1069 + $0x50] sm:$0xff]
        %v1081 = vld [vmem:[%s1069 + $0x58] sm:$0xff]
        %v1082 = vld [vmem:[%s1069 + $0x60] sm:$0xff]
        %v1083 = vld [vmem:[%s1069 + $0x68] sm:$0xff]
        %v1084 = vld [vmem:[%s1069 + $0x70] sm:$0xff]
        %v1085 = vld [vmem:[%s1069 + $0x78] sm:$0xff]
        %1086 = vmatprep.subr.mxu0 0.0
        %1087 = vmatpush1.msra.mxu0 %v1085
        %1088 = vmatprep.subr.mxu0 0.0
        %1089 = vmatpush1.msra.mxu0 %v1084
        %1090 = vmatprep.subr.mxu0 0.0
        %1091 = vmatpush1.msra.mxu0 %v1083
        %1092 = vmatprep.subr.mxu0 0.0
        %1093 = vmatpush1.msra.mxu0 %v1082
        %1094 = vmatprep.subr.mxu0 0.0
        %1095 = vmatpush1.msra.mxu0 %v1081
        %1096 = vmatprep.subr.mxu0 0.0
        %1097 = vmatpush1.msra.mxu0 %v1080
        %1098 = vmatprep.subr.mxu0 0.0
        %1099 = vmatpush1.msra.mxu0 %v1079
        %1100 = vmatprep.subr.mxu0 0.0
        %1101 = vmatpush1.msra.mxu0 %v1078
        %1102 = vmatprep.subr.mxu0 0.0
        %1103 = vmatpush1.msra.mxu0 %v1077
        %1104 = vmatprep.subr.mxu0 0.0
        %1105 = vmatpush1.msra.mxu0 %v1076
        %1106 = vmatprep.subr.mxu0 0.0
        %1107 = vmatpush1.msra.mxu0 %v1075
        %1108 = vmatprep.subr.mxu0 0.0
        %1109 = vmatpush1.msra.mxu0 %v1074
        %1110 = vmatprep.subr.mxu0 0.0
        %1111 = vmatpush1.msra.mxu0 %v1073
        %1112 = vmatprep.subr.mxu0 0.0
        %1113 = vmatpush1.msra.mxu0 %v1072
        %1114 = vmatprep.subr.mxu0 0.0
        %1115 = vmatpush1.msra.mxu0 %v1071
        %1116 = vmatprep.subr.mxu0 0.0
        %1117 = vmatpush1.msra.mxu0 %v1070
        %1118 = vmatprep.subr.mxu0 0.0
        %1119 = vmatpush2.msra.mxu0 0.0
        %1120 = vmatprep.subr.mxu0 0.0
        %1121 = vmatpush2.msra.mxu0 0.0
        %1122 = vmatprep.subr.mxu0 0.0
        %1123 = vmatpush2.msra.mxu0 0.0
        %1124 = vmatprep.subr.mxu0 0.0
        %1125 = vmatpush2.msra.mxu0 0.0
        %1126 = vmatprep.subr.mxu0 0.0
        %1127 = vmatpush2.msra.mxu0 0.0
        %1128 = vmatprep.subr.mxu0 0.0
        %1129 = vmatpush2.msra.mxu0 0.0
        %1130 = vmatprep.subr.mxu0 0.0
        %1131 = vmatpush2.msra.mxu0 0.0
        %1132 = vmatprep.subr.mxu0 0.0
        %1133 = vmatpush2.msra.mxu0 0.0
        %1134 = vmatprep.subr.mxu0 0.0
        %1135 = vmatpush2.msra.mxu0 0.0
        %1136 = vmatprep.subr.mxu0 0.0
        %1137 = vmatpush2.msra.mxu0 0.0
        %1138 = vmatprep.subr.mxu0 0.0
        %1139 = vmatpush2.msra.mxu0 0.0
        %1140 = vmatprep.subr.mxu0 0.0
        %1141 = vmatpush2.msra.mxu0 0.0
        %1142 = vmatprep.subr.mxu0 0.0
        %1143 = vmatpush2.msra.mxu0 0.0
        %1144 = vmatprep.subr.mxu0 0.0
        %1145 = vmatpush2.msra.mxu0 0.0
        %1146 = vmatprep.subr.mxu0 0.0
        %1147 = vmatpush2.msra.mxu0 0.0
        %1148 = vmatprep.subr.mxu0 0.0
        %1149 = vmatpush2.msra.mxu0 0.0
        %1150 = vmatprep.mubr.f32.mxu0 0.0
        %1151 = vmatmul.mubr.f32.gmra.mxu0 %v1061
        %v1152 = vpop.f32.mrf.mxu0
        %v1153 = vadd.f32 0.0, %v1152
        %v1154 = vpop.f32.mrf.mxu0
        %1155 = vmatprep.mubr.f32.mxu0 0.0
        %1156 = vmatmul.mubr.f32.gmra.mxu0 %v1066
        %v1157 = vpop.f32.mrf.mxu0
        %v1158 = vadd.f32 0.0, %v1157
        %v1159 = vpop.f32.mrf.mxu0
        %1160 = vdwg.mxu0
        %v1161 = vadd.f32 %v977, %v1153
        %v1162 = vadd.f32 %v982, %v1158
        %s1163 = scalar_lea.vmem %s3, 48
        %v1164 = vld [vmem:[%s1163] sm:$0xff]
        %v1165 = vld [vmem:[%s1163 + $0x8] sm:$0x1]
        %v1167 = vsel %vm632, %v1164, 0
        %v1170 = vsel %vm632, %v1165, 0
        %1172 = vmatprep.subr.mxu0 0.0
        %1173 = vmatpush1.msra.mxu0 0.0
        %1174 = vmatprep.subr.mxu0 0.0
        %1175 = vmatpush1.msra.mxu0 0.0
        %1176 = vmatprep.subr.mxu0 0.0
        %1177 = vmatpush1.msra.mxu0 0.0
        %1178 = vmatprep.subr.mxu0 0.0
        %1179 = vmatpush1.msra.mxu0 0.0
        %1180 = vmatprep.subr.mxu0 0.0
        %1181 = vmatpush1.msra.mxu0 0.0
        %1182 = vmatprep.subr.mxu0 0.0
        %1183 = vmatpush1.msra.mxu0 %v641
        %1184 = vmatprep.subr.mxu0 0.0
        %1185 = vmatpush1.msra.mxu0 %v628
        %1186 = vmatprep.subr.mxu0 0.0
        %1187 = vmatpush1.msra.mxu0 %v627
        %1188 = vmatprep.subr.mxu0 0.0
        %1189 = vmatpush1.msra.mxu0 %v626
        %1190 = vmatprep.subr.mxu0 0.0
        %1191 = vmatpush1.msra.mxu0 %v625
        %1192 = vmatprep.subr.mxu0 0.0
        %1193 = vmatpush1.msra.mxu0 %v624
        %1194 = vmatprep.subr.mxu0 0.0
        %1195 = vmatpush1.msra.mxu0 %v623
        %1196 = vmatprep.subr.mxu0 0.0
        %1197 = vmatpush1.msra.mxu0 %v622
        %1198 = vmatprep.subr.mxu0 0.0
        %1199 = vmatpush1.msra.mxu0 %v621
        %1200 = vmatprep.subr.mxu0 0.0
        %1201 = vmatpush1.msra.mxu0 %v620
        %1202 = vmatprep.subr.mxu0 0.0
        %1203 = vmatpush1.msra.mxu0 %v619
        %1204 = vmatprep.subr.mxu0 0.0
        %1205 = vmatpush2.msra.mxu0 0.0
        %1206 = vmatprep.subr.mxu0 0.0
        %1207 = vmatpush2.msra.mxu0 0.0
        %1208 = vmatprep.subr.mxu0 0.0
        %1209 = vmatpush2.msra.mxu0 0.0
        %1210 = vmatprep.subr.mxu0 0.0
        %1211 = vmatpush2.msra.mxu0 0.0
        %1212 = vmatprep.subr.mxu0 0.0
        %1213 = vmatpush2.msra.mxu0 0.0
        %1214 = vmatprep.subr.mxu0 0.0
        %1215 = vmatpush2.msra.mxu0 0.0
        %1216 = vmatprep.subr.mxu0 0.0
        %1217 = vmatpush2.msra.mxu0 0.0
        %1218 = vmatprep.subr.mxu0 0.0
        %1219 = vmatpush2.msra.mxu0 0.0
        %1220 = vmatprep.subr.mxu0 0.0
        %1221 = vmatpush2.msra.mxu0 0.0
        %1222 = vmatprep.subr.mxu0 0.0
        %1223 = vmatpush2.msra.mxu0 0.0
        %1224 = vmatprep.subr.mxu0 0.0
        %1225 = vmatpush2.msra.mxu0 0.0
        %1226 = vmatprep.subr.mxu0 0.0
        %1227 = vmatpush2.msra.mxu0 0.0
        %1228 = vmatprep.subr.mxu0 0.0
        %1229 = vmatpush2.msra.mxu0 0.0
        %1230 = vmatprep.subr.mxu0 0.0
        %1231 = vmatpush2.msra.mxu0 0.0
        %1232 = vmatprep.subr.mxu0 0.0
        %1233 = vmatpush2.msra.mxu0 0.0
        %1234 = vmatprep.subr.mxu0 0.0
        %1235 = vmatpush2.msra.mxu0 0.0
        %1236 = vmatprep.mubr.f32.mxu0 0.0
        %1237 = vmatmul.mubr.f32.gmra.mxu0 %v1167
        %v1238 = vpop.f32.mrf.mxu0
        %v1239 = vadd.f32 0.0, %v1238
        %v1240 = vpop.f32.mrf.mxu0
        %1241 = vmatprep.mubr.f32.mxu0 0.0
        %1242 = vmatmul.mubr.f32.gmra.mxu0 %v1170
        %v1243 = vpop.f32.mrf.mxu0
        %v1244 = vadd.f32 0.0, %v1243
        %v1245 = vpop.f32.mrf.mxu0
        %1246 = vdwg.mxu0
        %s1247 = scalar_lea.vmem %s4, 384
        %v1248 = vld [vmem:[%s1247] sm:$0xff]
        %v1249 = vld [vmem:[%s1247 + $0x8] sm:$0xff]
        %v1250 = vld [vmem:[%s1247 + $0x10] sm:$0xff]
        %v1251 = vld [vmem:[%s1247 + $0x18] sm:$0xff]
        %v1252 = vld [vmem:[%s1247 + $0x20] sm:$0xff]
        %v1253 = vld [vmem:[%s1247 + $0x28] sm:$0xff]
        %v1254 = vld [vmem:[%s1247 + $0x30] sm:$0xff]
        %v1255 = vld [vmem:[%s1247 + $0x38] sm:$0xff]
        %v1256 = vld [vmem:[%s1247 + $0x40] sm:$0xff]
        %v1257 = vld [vmem:[%s1247 + $0x48] sm:$0xff]
        %v1258 = vld [vmem:[%s1247 + $0x50] sm:$0xff]
        %v1259 = vld [vmem:[%s1247 + $0x58] sm:$0xff]
        %v1260 = vld [vmem:[%s1247 + $0x60] sm:$0xff]
        %v1261 = vld [vmem:[%s1247 + $0x68] sm:$0xff]
        %v1262 = vld [vmem:[%s1247 + $0x70] sm:$0xff]
        %v1263 = vld [vmem:[%s1247 + $0x78] sm:$0xff]
        %1264 = vmatprep.subr.mxu0 0.0
        %1265 = vmatpush1.msra.mxu0 %v1263
        %1266 = vmatprep.subr.mxu0 0.0
        %1267 = vmatpush1.msra.mxu0 %v1262
        %1268 = vmatprep.subr.mxu0 0.0
        %1269 = vmatpush1.msra.mxu0 %v1261
        %1270 = vmatprep.subr.mxu0 0.0
        %1271 = vmatpush1.msra.mxu0 %v1260
        %1272 = vmatprep.subr.mxu0 0.0
        %1273 = vmatpush1.msra.mxu0 %v1259
        %1274 = vmatprep.subr.mxu0 0.0
        %1275 = vmatpush1.msra.mxu0 %v1258
        %1276 = vmatprep.subr.mxu0 0.0
        %1277 = vmatpush1.msra.mxu0 %v1257
        %1278 = vmatprep.subr.mxu0 0.0
        %1279 = vmatpush1.msra.mxu0 %v1256
        %1280 = vmatprep.subr.mxu0 0.0
        %1281 = vmatpush1.msra.mxu0 %v1255
        %1282 = vmatprep.subr.mxu0 0.0
        %1283 = vmatpush1.msra.mxu0 %v1254
        %1284 = vmatprep.subr.mxu0 0.0
        %1285 = vmatpush1.msra.mxu0 %v1253
        %1286 = vmatprep.subr.mxu0 0.0
        %1287 = vmatpush1.msra.mxu0 %v1252
        %1288 = vmatprep.subr.mxu0 0.0
        %1289 = vmatpush1.msra.mxu0 %v1251
        %1290 = vmatprep.subr.mxu0 0.0
        %1291 = vmatpush1.msra.mxu0 %v1250
        %1292 = vmatprep.subr.mxu0 0.0
        %1293 = vmatpush1.msra.mxu0 %v1249
        %1294 = vmatprep.subr.mxu0 0.0
        %1295 = vmatpush1.msra.mxu0 %v1248
        %1296 = vmatprep.subr.mxu0 0.0
        %1297 = vmatpush2.msra.mxu0 0.0
        %1298 = vmatprep.subr.mxu0 0.0
        %1299 = vmatpush2.msra.mxu0 0.0
        %1300 = vmatprep.subr.mxu0 0.0
        %1301 = vmatpush2.msra.mxu0 0.0
        %1302 = vmatprep.subr.mxu0 0.0
        %1303 = vmatpush2.msra.mxu0 0.0
        %1304 = vmatprep.subr.mxu0 0.0
        %1305 = vmatpush2.msra.mxu0 0.0
        %1306 = vmatprep.subr.mxu0 0.0
        %1307 = vmatpush2.msra.mxu0 0.0
        %1308 = vmatprep.subr.mxu0 0.0
        %1309 = vmatpush2.msra.mxu0 0.0
        %1310 = vmatprep.subr.mxu0 0.0
        %1311 = vmatpush2.msra.mxu0 0.0
        %1312 = vmatprep.subr.mxu0 0.0
        %1313 = vmatpush2.msra.mxu0 0.0
        %1314 = vmatprep.subr.mxu0 0.0
        %1315 = vmatpush2.msra.mxu0 0.0
        %1316 = vmatprep.subr.mxu0 0.0
        %1317 = vmatpush2.msra.mxu0 0.0
        %1318 = vmatprep.subr.mxu0 0.0
        %1319 = vmatpush2.msra.mxu0 0.0
        %1320 = vmatprep.subr.mxu0 0.0
        %1321 = vmatpush2.msra.mxu0 0.0
        %1322 = vmatprep.subr.mxu0 0.0
        %1323 = vmatpush2.msra.mxu0 0.0
        %1324 = vmatprep.subr.mxu0 0.0
        %1325 = vmatpush2.msra.mxu0 0.0
        %1326 = vmatprep.subr.mxu0 0.0
        %1327 = vmatpush2.msra.mxu0 0.0
        %1328 = vmatprep.mubr.f32.mxu0 0.0
        %1329 = vmatmul.mubr.f32.gmra.mxu0 %v1239
        %v1330 = vpop.f32.mrf.mxu0
        %v1331 = vadd.f32 0.0, %v1330
        %v1332 = vpop.f32.mrf.mxu0
        %1333 = vmatprep.mubr.f32.mxu0 0.0
        %1334 = vmatmul.mubr.f32.gmra.mxu0 %v1244
        %v1335 = vpop.f32.mrf.mxu0
        %v1336 = vadd.f32 0.0, %v1335
        %v1337 = vpop.f32.mrf.mxu0
        %1338 = vdwg.mxu0
        %v1339 = vadd.f32 %v1161, %v1331
        %v1340 = vadd.f32 %v1162, %v1336
        %s1341 = scalar_lea.vmem %s3, 64
        %v1342 = vld [vmem:[%s1341] sm:$0xff]
        %v1343 = vld [vmem:[%s1341 + $0x8] sm:$0x1]
        %v1345 = vsel %vm632, %v1342, 0
        %v1348 = vsel %vm632, %v1343, 0
        %1350 = vmatprep.subr.mxu0 0.0
        %1351 = vmatpush1.msra.mxu0 0.0
        %1352 = vmatprep.subr.mxu0 0.0
        %1353 = vmatpush1.msra.mxu0 0.0
        %1354 = vmatprep.subr.mxu0 0.0
        %1355 = vmatpush1.msra.mxu0 0.0
        %1356 = vmatprep.subr.mxu0 0.0
        %1357 = vmatpush1.msra.mxu0 0.0
        %1358 = vmatprep.subr.mxu0 0.0
        %1359 = vmatpush1.msra.mxu0 0.0
        %1360 = vmatprep.subr.mxu0 0.0
        %1361 = vmatpush1.msra.mxu0 %v641
        %1362 = vmatprep.subr.mxu0 0.0
        %1363 = vmatpush1.msra.mxu0 %v628
        %1364 = vmatprep.subr.mxu0 0.0
        %1365 = vmatpush1.msra.mxu0 %v627
        %1366 = vmatprep.subr.mxu0 0.0
        %1367 = vmatpush1.msra.mxu0 %v626
        %1368 = vmatprep.subr.mxu0 0.0
        %1369 = vmatpush1.msra.mxu0 %v625
        %1370 = vmatprep.subr.mxu0 0.0
        %1371 = vmatpush1.msra.mxu0 %v624
        %1372 = vmatprep.subr.mxu0 0.0
        %1373 = vmatpush1.msra.mxu0 %v623
        %1374 = vmatprep.subr.mxu0 0.0
        %1375 = vmatpush1.msra.mxu0 %v622
        %1376 = vmatprep.subr.mxu0 0.0
        %1377 = vmatpush1.msra.mxu0 %v621
        %1378 = vmatprep.subr.mxu0 0.0
        %1379 = vmatpush1.msra.mxu0 %v620
        %1380 = vmatprep.subr.mxu0 0.0
        %1381 = vmatpush1.msra.mxu0 %v619
        %1382 = vmatprep.subr.mxu0 0.0
        %1383 = vmatpush2.msra.mxu0 0.0
        %1384 = vmatprep.subr.mxu0 0.0
        %1385 = vmatpush2.msra.mxu0 0.0
        %1386 = vmatprep.subr.mxu0 0.0
        %1387 = vmatpush2.msra.mxu0 0.0
        %1388 = vmatprep.subr.mxu0 0.0
        %1389 = vmatpush2.msra.mxu0 0.0
        %1390 = vmatprep.subr.mxu0 0.0
        %1391 = vmatpush2.msra.mxu0 0.0
        %1392 = vmatprep.subr.mxu0 0.0
        %1393 = vmatpush2.msra.mxu0 0.0
        %1394 = vmatprep.subr.mxu0 0.0
        %1395 = vmatpush2.msra.mxu0 0.0
        %1396 = vmatprep.subr.mxu0 0.0
        %1397 = vmatpush2.msra.mxu0 0.0
        %1398 = vmatprep.subr.mxu0 0.0
        %1399 = vmatpush2.msra.mxu0 0.0
        %1400 = vmatprep.subr.mxu0 0.0
        %1401 = vmatpush2.msra.mxu0 0.0
        %1402 = vmatprep.subr.mxu0 0.0
        %1403 = vmatpush2.msra.mxu0 0.0
        %1404 = vmatprep.subr.mxu0 0.0
        %1405 = vmatpush2.msra.mxu0 0.0
        %1406 = vmatprep.subr.mxu0 0.0
        %1407 = vmatpush2.msra.mxu0 0.0
        %1408 = vmatprep.subr.mxu0 0.0
        %1409 = vmatpush2.msra.mxu0 0.0
        %1410 = vmatprep.subr.mxu0 0.0
        %1411 = vmatpush2.msra.mxu0 0.0
        %1412 = vmatprep.subr.mxu0 0.0
        %1413 = vmatpush2.msra.mxu0 0.0
        %1414 = vmatprep.mubr.f32.mxu0 0.0
        %1415 = vmatmul.mubr.f32.gmra.mxu0 %v1345
        %v1416 = vpop.f32.mrf.mxu0
        %v1417 = vadd.f32 0.0, %v1416
        %v1418 = vpop.f32.mrf.mxu0
        %1419 = vmatprep.mubr.f32.mxu0 0.0
        %1420 = vmatmul.mubr.f32.gmra.mxu0 %v1348
        %v1421 = vpop.f32.mrf.mxu0
        %v1422 = vadd.f32 0.0, %v1421
        %v1423 = vpop.f32.mrf.mxu0
        %1424 = vdwg.mxu0
        %s1425 = scalar_lea.vmem %s4, 512
        %v1426 = vld [vmem:[%s1425] sm:$0xff]
        %v1427 = vld [vmem:[%s1425 + $0x8] sm:$0xff]
        %v1428 = vld [vmem:[%s1425 + $0x10] sm:$0xff]
        %v1429 = vld [vmem:[%s1425 + $0x18] sm:$0xff]
        %v1430 = vld [vmem:[%s1425 + $0x20] sm:$0xff]
        %v1431 = vld [vmem:[%s1425 + $0x28] sm:$0xff]
        %v1432 = vld [vmem:[%s1425 + $0x30] sm:$0xff]
        %v1433 = vld [vmem:[%s1425 + $0x38] sm:$0xff]
        %v1434 = vld [vmem:[%s1425 + $0x40] sm:$0xff]
        %v1435 = vld [vmem:[%s1425 + $0x48] sm:$0xff]
        %v1436 = vld [vmem:[%s1425 + $0x50] sm:$0xff]
        %v1437 = vld [vmem:[%s1425 + $0x58] sm:$0xff]
        %v1438 = vld [vmem:[%s1425 + $0x60] sm:$0xff]
        %v1439 = vld [vmem:[%s1425 + $0x68] sm:$0xff]
        %v1440 = vld [vmem:[%s1425 + $0x70] sm:$0xff]
        %v1441 = vld [vmem:[%s1425 + $0x78] sm:$0xff]
        %1442 = vmatprep.subr.mxu0 0.0
        %1443 = vmatpush1.msra.mxu0 %v1441
        %1444 = vmatprep.subr.mxu0 0.0
        %1445 = vmatpush1.msra.mxu0 %v1440
        %1446 = vmatprep.subr.mxu0 0.0
        %1447 = vmatpush1.msra.mxu0 %v1439
        %1448 = vmatprep.subr.mxu0 0.0
        %1449 = vmatpush1.msra.mxu0 %v1438
        %1450 = vmatprep.subr.mxu0 0.0
        %1451 = vmatpush1.msra.mxu0 %v1437
        %1452 = vmatprep.subr.mxu0 0.0
        %1453 = vmatpush1.msra.mxu0 %v1436
        %1454 = vmatprep.subr.mxu0 0.0
        %1455 = vmatpush1.msra.mxu0 %v1435
        %1456 = vmatprep.subr.mxu0 0.0
        %1457 = vmatpush1.msra.mxu0 %v1434
        %1458 = vmatprep.subr.mxu0 0.0
        %1459 = vmatpush1.msra.mxu0 %v1433
        %1460 = vmatprep.subr.mxu0 0.0
        %1461 = vmatpush1.msra.mxu0 %v1432
        %1462 = vmatprep.subr.mxu0 0.0
        %1463 = vmatpush1.msra.mxu0 %v1431
        %1464 = vmatprep.subr.mxu0 0.0
        %1465 = vmatpush1.msra.mxu0 %v1430
        %1466 = vmatprep.subr.mxu0 0.0
        %1467 = vmatpush1.msra.mxu0 %v1429
        %1468 = vmatprep.subr.mxu0 0.0
        %1469 = vmatpush1.msra.mxu0 %v1428
        %1470 = vmatprep.subr.mxu0 0.0
        %1471 = vmatpush1.msra.mxu0 %v1427
        %1472 = vmatprep.subr.mxu0 0.0
        %1473 = vmatpush1.msra.mxu0 %v1426
        %1474 = vmatprep.subr.mxu0 0.0
        %1475 = vmatpush2.msra.mxu0 0.0
        %1476 = vmatprep.subr.mxu0 0.0
        %1477 = vmatpush2.msra.mxu0 0.0
        %1478 = vmatprep.subr.mxu0 0.0
        %1479 = vmatpush2.msra.mxu0 0.0
        %1480 = vmatprep.subr.mxu0 0.0
        %1481 = vmatpush2.msra.mxu0 0.0
        %1482 = vmatprep.subr.mxu0 0.0
        %1483 = vmatpush2.msra.mxu0 0.0
        %1484 = vmatprep.subr.mxu0 0.0
        %1485 = vmatpush2.msra.mxu0 0.0
        %1486 = vmatprep.subr.mxu0 0.0
        %1487 = vmatpush2.msra.mxu0 0.0
        %1488 = vmatprep.subr.mxu0 0.0
        %1489 = vmatpush2.msra.mxu0 0.0
        %1490 = vmatprep.subr.mxu0 0.0
        %1491 = vmatpush2.msra.mxu0 0.0
        %1492 = vmatprep.subr.mxu0 0.0
        %1493 = vmatpush2.msra.mxu0 0.0
        %1494 = vmatprep.subr.mxu0 0.0
        %1495 = vmatpush2.msra.mxu0 0.0
        %1496 = vmatprep.subr.mxu0 0.0
        %1497 = vmatpush2.msra.mxu0 0.0
        %1498 = vmatprep.subr.mxu0 0.0
        %1499 = vmatpush2.msra.mxu0 0.0
        %1500 = vmatprep.subr.mxu0 0.0
        %1501 = vmatpush2.msra.mxu0 0.0
        %1502 = vmatprep.subr.mxu0 0.0
        %1503 = vmatpush2.msra.mxu0 0.0
        %1504 = vmatprep.subr.mxu0 0.0
        %1505 = vmatpush2.msra.mxu0 0.0
        %1506 = vmatprep.mubr.f32.mxu0 0.0
        %1507 = vmatmul.mubr.f32.gmra.mxu0 %v1417
        %v1508 = vpop.f32.mrf.mxu0
        %v1509 = vadd.f32 0.0, %v1508
        %v1510 = vpop.f32.mrf.mxu0
        %1511 = vmatprep.mubr.f32.mxu0 0.0
        %1512 = vmatmul.mubr.f32.gmra.mxu0 %v1422
        %v1513 = vpop.f32.mrf.mxu0
        %v1514 = vadd.f32 0.0, %v1513
        %v1515 = vpop.f32.mrf.mxu0
        %1516 = vdwg.mxu0
        %v1517 = vadd.f32 %v1339, %v1509
        %v1518 = vadd.f32 %v1340, %v1514
        %s1519 = scalar_lea.vmem %s3, 80
        %v1520 = vld [vmem:[%s1519] sm:$0xff]
        %v1521 = vld [vmem:[%s1519 + $0x8] sm:$0x1]
        %v1523 = vsel %vm632, %v1520, 0
        %v1526 = vsel %vm632, %v1521, 0
        %1528 = vmatprep.subr.mxu0 0.0
        %1529 = vmatpush1.msra.mxu0 0.0
        %1530 = vmatprep.subr.mxu0 0.0
        %1531 = vmatpush1.msra.mxu0 0.0
        %1532 = vmatprep.subr.mxu0 0.0
        %1533 = vmatpush1.msra.mxu0 0.0
        %1534 = vmatprep.subr.mxu0 0.0
        %1535 = vmatpush1.msra.mxu0 0.0
        %1536 = vmatprep.subr.mxu0 0.0
        %1537 = vmatpush1.msra.mxu0 0.0
        %1538 = vmatprep.subr.mxu0 0.0
        %1539 = vmatpush1.msra.mxu0 %v641
        %1540 = vmatprep.subr.mxu0 0.0
        %1541 = vmatpush1.msra.mxu0 %v628
        %1542 = vmatprep.subr.mxu0 0.0
        %1543 = vmatpush1.msra.mxu0 %v627
        %1544 = vmatprep.subr.mxu0 0.0
        %1545 = vmatpush1.msra.mxu0 %v626
        %1546 = vmatprep.subr.mxu0 0.0
        %1547 = vmatpush1.msra.mxu0 %v625
        %1548 = vmatprep.subr.mxu0 0.0
        %1549 = vmatpush1.msra.mxu0 %v624
        %1550 = vmatprep.subr.mxu0 0.0
        %1551 = vmatpush1.msra.mxu0 %v623
        %1552 = vmatprep.subr.mxu0 0.0
        %1553 = vmatpush1.msra.mxu0 %v622
        %1554 = vmatprep.subr.mxu0 0.0
        %1555 = vmatpush1.msra.mxu0 %v621
        %1556 = vmatprep.subr.mxu0 0.0
        %1557 = vmatpush1.msra.mxu0 %v620
        %1558 = vmatprep.subr.mxu0 0.0
        %1559 = vmatpush1.msra.mxu0 %v619
        %1560 = vmatprep.subr.mxu0 0.0
        %1561 = vmatpush2.msra.mxu0 0.0
        %1562 = vmatprep.subr.mxu0 0.0
        %1563 = vmatpush2.msra.mxu0 0.0
        %1564 = vmatprep.subr.mxu0 0.0
        %1565 = vmatpush2.msra.mxu0 0.0
        %1566 = vmatprep.subr.mxu0 0.0
        %1567 = vmatpush2.msra.mxu0 0.0
        %1568 = vmatprep.subr.mxu0 0.0
        %1569 = vmatpush2.msra.mxu0 0.0
        %1570 = vmatprep.subr.mxu0 0.0
        %1571 = vmatpush2.msra.mxu0 0.0
        %1572 = vmatprep.subr.mxu0 0.0
        %1573 = vmatpush2.msra.mxu0 0.0
        %1574 = vmatprep.subr.mxu0 0.0
        %1575 = vmatpush2.msra.mxu0 0.0
        %1576 = vmatprep.subr.mxu0 0.0
        %1577 = vmatpush2.msra.mxu0 0.0
        %1578 = vmatprep.subr.mxu0 0.0
        %1579 = vmatpush2.msra.mxu0 0.0
        %1580 = vmatprep.subr.mxu0 0.0
        %1581 = vmatpush2.msra.mxu0 0.0
        %1582 = vmatprep.subr.mxu0 0.0
        %1583 = vmatpush2.msra.mxu0 0.0
        %1584 = vmatprep.subr.mxu0 0.0
        %1585 = vmatpush2.msra.mxu0 0.0
        %1586 = vmatprep.subr.mxu0 0.0
        %1587 = vmatpush2.msra.mxu0 0.0
        %1588 = vmatprep.subr.mxu0 0.0
        %1589 = vmatpush2.msra.mxu0 0.0
        %1590 = vmatprep.subr.mxu0 0.0
        %1591 = vmatpush2.msra.mxu0 0.0
        %1592 = vmatprep.mubr.f32.mxu0 0.0
        %1593 = vmatmul.mubr.f32.gmra.mxu0 %v1523
        %v1594 = vpop.f32.mrf.mxu0
        %v1595 = vadd.f32 0.0, %v1594
        %v1596 = vpop.f32.mrf.mxu0
        %1597 = vmatprep.mubr.f32.mxu0 0.0
        %1598 = vmatmul.mubr.f32.gmra.mxu0 %v1526
        %v1599 = vpop.f32.mrf.mxu0
        %v1600 = vadd.f32 0.0, %v1599
        %v1601 = vpop.f32.mrf.mxu0
        %1602 = vdwg.mxu0
        %s1603 = scalar_lea.vmem %s4, 640
        %v1604 = vld [vmem:[%s1603] sm:$0xff]
        %v1605 = vld [vmem:[%s1603 + $0x8] sm:$0xff]
        %v1606 = vld [vmem:[%s1603 + $0x10] sm:$0xff]
        %v1607 = vld [vmem:[%s1603 + $0x18] sm:$0xff]
        %v1608 = vld [vmem:[%s1603 + $0x20] sm:$0xff]
        %v1609 = vld [vmem:[%s1603 + $0x28] sm:$0xff]
        %v1610 = vld [vmem:[%s1603 + $0x30] sm:$0xff]
        %v1611 = vld [vmem:[%s1603 + $0x38] sm:$0xff]
        %v1612 = vld [vmem:[%s1603 + $0x40] sm:$0xff]
        %v1613 = vld [vmem:[%s1603 + $0x48] sm:$0xff]
        %v1614 = vld [vmem:[%s1603 + $0x50] sm:$0xff]
        %v1615 = vld [vmem:[%s1603 + $0x58] sm:$0xff]
        %v1616 = vld [vmem:[%s1603 + $0x60] sm:$0xff]
        %v1617 = vld [vmem:[%s1603 + $0x68] sm:$0xff]
        %v1618 = vld [vmem:[%s1603 + $0x70] sm:$0xff]
        %v1619 = vld [vmem:[%s1603 + $0x78] sm:$0xff]
        %1620 = vmatprep.subr.mxu0 0.0
        %1621 = vmatpush1.msra.mxu0 %v1619
        %1622 = vmatprep.subr.mxu0 0.0
        %1623 = vmatpush1.msra.mxu0 %v1618
        %1624 = vmatprep.subr.mxu0 0.0
        %1625 = vmatpush1.msra.mxu0 %v1617
        %1626 = vmatprep.subr.mxu0 0.0
        %1627 = vmatpush1.msra.mxu0 %v1616
        %1628 = vmatprep.subr.mxu0 0.0
        %1629 = vmatpush1.msra.mxu0 %v1615
        %1630 = vmatprep.subr.mxu0 0.0
        %1631 = vmatpush1.msra.mxu0 %v1614
        %1632 = vmatprep.subr.mxu0 0.0
        %1633 = vmatpush1.msra.mxu0 %v1613
        %1634 = vmatprep.subr.mxu0 0.0
        %1635 = vmatpush1.msra.mxu0 %v1612
        %1636 = vmatprep.subr.mxu0 0.0
        %1637 = vmatpush1.msra.mxu0 %v1611
        %1638 = vmatprep.subr.mxu0 0.0
        %1639 = vmatpush1.msra.mxu0 %v1610
        %1640 = vmatprep.subr.mxu0 0.0
        %1641 = vmatpush1.msra.mxu0 %v1609
        %1642 = vmatprep.subr.mxu0 0.0
        %1643 = vmatpush1.msra.mxu0 %v1608
        %1644 = vmatprep.subr.mxu0 0.0
        %1645 = vmatpush1.msra.mxu0 %v1607
        %1646 = vmatprep.subr.mxu0 0.0
        %1647 = vmatpush1.msra.mxu0 %v1606
        %1648 = vmatprep.subr.mxu0 0.0
        %1649 = vmatpush1.msra.mxu0 %v1605
        %1650 = vmatprep.subr.mxu0 0.0
        %1651 = vmatpush1.msra.mxu0 %v1604
        %1652 = vmatprep.subr.mxu0 0.0
        %1653 = vmatpush2.msra.mxu0 0.0
        %1654 = vmatprep.subr.mxu0 0.0
        %1655 = vmatpush2.msra.mxu0 0.0
        %1656 = vmatprep.subr.mxu0 0.0
        %1657 = vmatpush2.msra.mxu0 0.0
        %1658 = vmatprep.subr.mxu0 0.0
        %1659 = vmatpush2.msra.mxu0 0.0
        %1660 = vmatprep.subr.mxu0 0.0
        %1661 = vmatpush2.msra.mxu0 0.0
        %1662 = vmatprep.subr.mxu0 0.0
        %1663 = vmatpush2.msra.mxu0 0.0
        %1664 = vmatprep.subr.mxu0 0.0
        %1665 = vmatpush2.msra.mxu0 0.0
        %1666 = vmatprep.subr.mxu0 0.0
        %1667 = vmatpush2.msra.mxu0 0.0
        %1668 = vmatprep.subr.mxu0 0.0
        %1669 = vmatpush2.msra.mxu0 0.0
        %1670 = vmatprep.subr.mxu0 0.0
        %1671 = vmatpush2.msra.mxu0 0.0
        %1672 = vmatprep.subr.mxu0 0.0
        %1673 = vmatpush2.msra.mxu0 0.0
        %1674 = vmatprep.subr.mxu0 0.0
        %1675 = vmatpush2.msra.mxu0 0.0
        %1676 = vmatprep.subr.mxu0 0.0
        %1677 = vmatpush2.msra.mxu0 0.0
        %1678 = vmatprep.subr.mxu0 0.0
        %1679 = vmatpush2.msra.mxu0 0.0
        %1680 = vmatprep.subr.mxu0 0.0
        %1681 = vmatpush2.msra.mxu0 0.0
        %1682 = vmatprep.subr.mxu0 0.0
        %1683 = vmatpush2.msra.mxu0 0.0
        %1684 = vmatprep.mubr.f32.mxu0 0.0
        %1685 = vmatmul.mubr.f32.gmra.mxu0 %v1595
        %v1686 = vpop.f32.mrf.mxu0
        %v1687 = vadd.f32 0.0, %v1686
        %v1688 = vpop.f32.mrf.mxu0
        %1689 = vmatprep.mubr.f32.mxu0 0.0
        %1690 = vmatmul.mubr.f32.gmra.mxu0 %v1600
        %v1691 = vpop.f32.mrf.mxu0
        %v1692 = vadd.f32 0.0, %v1691
        %v1693 = vpop.f32.mrf.mxu0
        %1694 = vdwg.mxu0
        %v1695 = vadd.f32 %v1517, %v1687
        %v1696 = vadd.f32 %v1518, %v1692
        %s1697 = scalar_lea.vmem %s3, 96
        %v1698 = vld [vmem:[%s1697] sm:$0xff]
        %v1699 = vld [vmem:[%s1697 + $0x8] sm:$0x1]
        %v1701 = vsel %vm632, %v1698, 0
        %v1704 = vsel %vm632, %v1699, 0
        %1706 = vmatprep.subr.mxu0 0.0
        %1707 = vmatpush1.msra.mxu0 0.0
        %1708 = vmatprep.subr.mxu0 0.0
        %1709 = vmatpush1.msra.mxu0 0.0
        %1710 = vmatprep.subr.mxu0 0.0
        %1711 = vmatpush1.msra.mxu0 0.0
        %1712 = vmatprep.subr.mxu0 0.0
        %1713 = vmatpush1.msra.mxu0 0.0
        %1714 = vmatprep.subr.mxu0 0.0
        %1715 = vmatpush1.msra.mxu0 0.0
        %1716 = vmatprep.subr.mxu0 0.0
        %1717 = vmatpush1.msra.mxu0 %v641
        %1718 = vmatprep.subr.mxu0 0.0
        %1719 = vmatpush1.msra.mxu0 %v628
        %1720 = vmatprep.subr.mxu0 0.0
        %1721 = vmatpush1.msra.mxu0 %v627
        %1722 = vmatprep.subr.mxu0 0.0
        %1723 = vmatpush1.msra.mxu0 %v626
        %1724 = vmatprep.subr.mxu0 0.0
        %1725 = vmatpush1.msra.mxu0 %v625
        %1726 = vmatprep.subr.mxu0 0.0
        %1727 = vmatpush1.msra.mxu0 %v624
        %1728 = vmatprep.subr.mxu0 0.0
        %1729 = vmatpush1.msra.mxu0 %v623
        %1730 = vmatprep.subr.mxu0 0.0
        %1731 = vmatpush1.msra.mxu0 %v622
        %1732 = vmatprep.subr.mxu0 0.0
        %1733 = vmatpush1.msra.mxu0 %v621
        %1734 = vmatprep.subr.mxu0 0.0
        %1735 = vmatpush1.msra.mxu0 %v620
        %1736 = vmatprep.subr.mxu0 0.0
        %1737 = vmatpush1.msra.mxu0 %v619
        %1738 = vmatprep.subr.mxu0 0.0
        %1739 = vmatpush2.msra.mxu0 0.0
        %1740 = vmatprep.subr.mxu0 0.0
        %1741 = vmatpush2.msra.mxu0 0.0
        %1742 = vmatprep.subr.mxu0 0.0
        %1743 = vmatpush2.msra.mxu0 0.0
        %1744 = vmatprep.subr.mxu0 0.0
        %1745 = vmatpush2.msra.mxu0 0.0
        %1746 = vmatprep.subr.mxu0 0.0
        %1747 = vmatpush2.msra.mxu0 0.0
        %1748 = vmatprep.subr.mxu0 0.0
        %1749 = vmatpush2.msra.mxu0 0.0
        %1750 = vmatprep.subr.mxu0 0.0
        %1751 = vmatpush2.msra.mxu0 0.0
        %1752 = vmatprep.subr.mxu0 0.0
        %1753 = vmatpush2.msra.mxu0 0.0
        %1754 = vmatprep.subr.mxu0 0.0
        %1755 = vmatpush2.msra.mxu0 0.0
        %1756 = vmatprep.subr.mxu0 0.0
        %1757 = vmatpush2.msra.mxu0 0.0
        %1758 = vmatprep.subr.mxu0 0.0
        %1759 = vmatpush2.msra.mxu0 0.0
        %1760 = vmatprep.subr.mxu0 0.0
        %1761 = vmatpush2.msra.mxu0 0.0
        %1762 = vmatprep.subr.mxu0 0.0
        %1763 = vmatpush2.msra.mxu0 0.0
        %1764 = vmatprep.subr.mxu0 0.0
        %1765 = vmatpush2.msra.mxu0 0.0
        %1766 = vmatprep.subr.mxu0 0.0
        %1767 = vmatpush2.msra.mxu0 0.0
        %1768 = vmatprep.subr.mxu0 0.0
        %1769 = vmatpush2.msra.mxu0 0.0
        %1770 = vmatprep.mubr.f32.mxu0 0.0
        %1771 = vmatmul.mubr.f32.gmra.mxu0 %v1701
        %v1772 = vpop.f32.mrf.mxu0
        %v1773 = vadd.f32 0.0, %v1772
        %v1774 = vpop.f32.mrf.mxu0
        %1775 = vmatprep.mubr.f32.mxu0 0.0
        %1776 = vmatmul.mubr.f32.gmra.mxu0 %v1704
        %v1777 = vpop.f32.mrf.mxu0
        %v1778 = vadd.f32 0.0, %v1777
        %v1779 = vpop.f32.mrf.mxu0
        %1780 = vdwg.mxu0
        %s1781 = scalar_lea.vmem %s4, 768
        %v1782 = vld [vmem:[%s1781] sm:$0xff]
        %v1783 = vld [vmem:[%s1781 + $0x8] sm:$0xff]
        %v1784 = vld [vmem:[%s1781 + $0x10] sm:$0xff]
        %v1785 = vld [vmem:[%s1781 + $0x18] sm:$0xff]
        %v1786 = vld [vmem:[%s1781 + $0x20] sm:$0xff]
        %v1787 = vld [vmem:[%s1781 + $0x28] sm:$0xff]
        %v1788 = vld [vmem:[%s1781 + $0x30] sm:$0xff]
        %v1789 = vld [vmem:[%s1781 + $0x38] sm:$0xff]
        %v1790 = vld [vmem:[%s1781 + $0x40] sm:$0xff]
        %v1791 = vld [vmem:[%s1781 + $0x48] sm:$0xff]
        %v1792 = vld [vmem:[%s1781 + $0x50] sm:$0xff]
        %v1793 = vld [vmem:[%s1781 + $0x58] sm:$0xff]
        %v1794 = vld [vmem:[%s1781 + $0x60] sm:$0xff]
        %v1795 = vld [vmem:[%s1781 + $0x68] sm:$0xff]
        %v1796 = vld [vmem:[%s1781 + $0x70] sm:$0xff]
        %v1797 = vld [vmem:[%s1781 + $0x78] sm:$0xff]
        %1798 = vmatprep.subr.mxu0 0.0
        %1799 = vmatpush1.msra.mxu0 %v1797
        %1800 = vmatprep.subr.mxu0 0.0
        %1801 = vmatpush1.msra.mxu0 %v1796
        %1802 = vmatprep.subr.mxu0 0.0
        %1803 = vmatpush1.msra.mxu0 %v1795
        %1804 = vmatprep.subr.mxu0 0.0
        %1805 = vmatpush1.msra.mxu0 %v1794
        %1806 = vmatprep.subr.mxu0 0.0
        %1807 = vmatpush1.msra.mxu0 %v1793
        %1808 = vmatprep.subr.mxu0 0.0
        %1809 = vmatpush1.msra.mxu0 %v1792
        %1810 = vmatprep.subr.mxu0 0.0
        %1811 = vmatpush1.msra.mxu0 %v1791
        %1812 = vmatprep.subr.mxu0 0.0
        %1813 = vmatpush1.msra.mxu0 %v1790
        %1814 = vmatprep.subr.mxu0 0.0
        %1815 = vmatpush1.msra.mxu0 %v1789
        %1816 = vmatprep.subr.mxu0 0.0
        %1817 = vmatpush1.msra.mxu0 %v1788
        %1818 = vmatprep.subr.mxu0 0.0
        %1819 = vmatpush1.msra.mxu0 %v1787
        %1820 = vmatprep.subr.mxu0 0.0
        %1821 = vmatpush1.msra.mxu0 %v1786
        %1822 = vmatprep.subr.mxu0 0.0
        %1823 = vmatpush1.msra.mxu0 %v1785
        %1824 = vmatprep.subr.mxu0 0.0
        %1825 = vmatpush1.msra.mxu0 %v1784
        %1826 = vmatprep.subr.mxu0 0.0
        %1827 = vmatpush1.msra.mxu0 %v1783
        %1828 = vmatprep.subr.mxu0 0.0
        %1829 = vmatpush1.msra.mxu0 %v1782
        %1830 = vmatprep.subr.mxu0 0.0
        %1831 = vmatpush2.msra.mxu0 0.0
        %1832 = vmatprep.subr.mxu0 0.0
        %1833 = vmatpush2.msra.mxu0 0.0
        %1834 = vmatprep.subr.mxu0 0.0
        %1835 = vmatpush2.msra.mxu0 0.0
        %1836 = vmatprep.subr.mxu0 0.0
        %1837 = vmatpush2.msra.mxu0 0.0
        %1838 = vmatprep.subr.mxu0 0.0
        %1839 = vmatpush2.msra.mxu0 0.0
        %1840 = vmatprep.subr.mxu0 0.0
        %1841 = vmatpush2.msra.mxu0 0.0
        %1842 = vmatprep.subr.mxu0 0.0
        %1843 = vmatpush2.msra.mxu0 0.0
        %1844 = vmatprep.subr.mxu0 0.0
        %1845 = vmatpush2.msra.mxu0 0.0
        %1846 = vmatprep.subr.mxu0 0.0
        %1847 = vmatpush2.msra.mxu0 0.0
        %1848 = vmatprep.subr.mxu0 0.0
        %1849 = vmatpush2.msra.mxu0 0.0
        %1850 = vmatprep.subr.mxu0 0.0
        %1851 = vmatpush2.msra.mxu0 0.0
        %1852 = vmatprep.subr.mxu0 0.0
        %1853 = vmatpush2.msra.mxu0 0.0
        %1854 = vmatprep.subr.mxu0 0.0
        %1855 = vmatpush2.msra.mxu0 0.0
        %1856 = vmatprep.subr.mxu0 0.0
        %1857 = vmatpush2.msra.mxu0 0.0
        %1858 = vmatprep.subr.mxu0 0.0
        %1859 = vmatpush2.msra.mxu0 0.0
        %1860 = vmatprep.subr.mxu0 0.0
        %1861 = vmatpush2.msra.mxu0 0.0
        %1862 = vmatprep.mubr.f32.mxu0 0.0
        %1863 = vmatmul.mubr.f32.gmra.mxu0 %v1773
        %v1864 = vpop.f32.mrf.mxu0
        %v1865 = vadd.f32 0.0, %v1864
        %v1866 = vpop.f32.mrf.mxu0
        %1867 = vmatprep.mubr.f32.mxu0 0.0
        %1868 = vmatmul.mubr.f32.gmra.mxu0 %v1778
        %v1869 = vpop.f32.mrf.mxu0
        %v1870 = vadd.f32 0.0, %v1869
        %v1871 = vpop.f32.mrf.mxu0
        %1872 = vdwg.mxu0
        %v1873 = vadd.f32 %v1695, %v1865
        %v1874 = vadd.f32 %v1696, %v1870
        %s1875 = scalar_lea.vmem %s3, 112
        %v1876 = vld [vmem:[%s1875] sm:$0xff]
        %v1877 = vld [vmem:[%s1875 + $0x8] sm:$0x1]
        %v1879 = vsel %vm632, %v1876, 0
        %v1882 = vsel %vm632, %v1877, 0
        %1884 = vmatprep.subr.mxu0 0.0
        %1885 = vmatpush1.msra.mxu0 0.0
        %1886 = vmatprep.subr.mxu0 0.0
        %1887 = vmatpush1.msra.mxu0 0.0
        %1888 = vmatprep.subr.mxu0 0.0
        %1889 = vmatpush1.msra.mxu0 0.0
        %1890 = vmatprep.subr.mxu0 0.0
        %1891 = vmatpush1.msra.mxu0 0.0
        %1892 = vmatprep.subr.mxu0 0.0
        %1893 = vmatpush1.msra.mxu0 0.0
        %1894 = vmatprep.subr.mxu0 0.0
        %1895 = vmatpush1.msra.mxu0 %v641
        %1896 = vmatprep.subr.mxu0 0.0
        %1897 = vmatpush1.msra.mxu0 %v628
        %1898 = vmatprep.subr.mxu0 0.0
        %1899 = vmatpush1.msra.mxu0 %v627
        %1900 = vmatprep.subr.mxu0 0.0
        %1901 = vmatpush1.msra.mxu0 %v626
        %1902 = vmatprep.subr.mxu0 0.0
        %1903 = vmatpush1.msra.mxu0 %v625
        %1904 = vmatprep.subr.mxu0 0.0
        %1905 = vmatpush1.msra.mxu0 %v624
        %1906 = vmatprep.subr.mxu0 0.0
        %1907 = vmatpush1.msra.mxu0 %v623
        %1908 = vmatprep.subr.mxu0 0.0
        %1909 = vmatpush1.msra.mxu0 %v622
        %1910 = vmatprep.subr.mxu0 0.0
        %1911 = vmatpush1.msra.mxu0 %v621
        %1912 = vmatprep.subr.mxu0 0.0
        %1913 = vmatpush1.msra.mxu0 %v620
        %1914 = vmatprep.subr.mxu0 0.0
        %1915 = vmatpush1.msra.mxu0 %v619
        %1916 = vmatprep.subr.mxu0 0.0
        %1917 = vmatpush2.msra.mxu0 0.0
        %1918 = vmatprep.subr.mxu0 0.0
        %1919 = vmatpush2.msra.mxu0 0.0
        %1920 = vmatprep.subr.mxu0 0.0
        %1921 = vmatpush2.msra.mxu0 0.0
        %1922 = vmatprep.subr.mxu0 0.0
        %1923 = vmatpush2.msra.mxu0 0.0
        %1924 = vmatprep.subr.mxu0 0.0
        %1925 = vmatpush2.msra.mxu0 0.0
        %1926 = vmatprep.subr.mxu0 0.0
        %1927 = vmatpush2.msra.mxu0 0.0
        %1928 = vmatprep.subr.mxu0 0.0
        %1929 = vmatpush2.msra.mxu0 0.0
        %1930 = vmatprep.subr.mxu0 0.0
        %1931 = vmatpush2.msra.mxu0 0.0
        %1932 = vmatprep.subr.mxu0 0.0
        %1933 = vmatpush2.msra.mxu0 0.0
        %1934 = vmatprep.subr.mxu0 0.0
        %1935 = vmatpush2.msra.mxu0 0.0
        %1936 = vmatprep.subr.mxu0 0.0
        %1937 = vmatpush2.msra.mxu0 0.0
        %1938 = vmatprep.subr.mxu0 0.0
        %1939 = vmatpush2.msra.mxu0 0.0
        %1940 = vmatprep.subr.mxu0 0.0
        %1941 = vmatpush2.msra.mxu0 0.0
        %1942 = vmatprep.subr.mxu0 0.0
        %1943 = vmatpush2.msra.mxu0 0.0
        %1944 = vmatprep.subr.mxu0 0.0
        %1945 = vmatpush2.msra.mxu0 0.0
        %1946 = vmatprep.subr.mxu0 0.0
        %1947 = vmatpush2.msra.mxu0 0.0
        %1948 = vmatprep.mubr.f32.mxu0 0.0
        %1949 = vmatmul.mubr.f32.gmra.mxu0 %v1879
        %v1950 = vpop.f32.mrf.mxu0
        %v1951 = vadd.f32 0.0, %v1950
        %v1952 = vpop.f32.mrf.mxu0
        %1953 = vmatprep.mubr.f32.mxu0 0.0
        %1954 = vmatmul.mubr.f32.gmra.mxu0 %v1882
        %v1955 = vpop.f32.mrf.mxu0
        %v1956 = vadd.f32 0.0, %v1955
        %v1957 = vpop.f32.mrf.mxu0
        %1958 = vdwg.mxu0
        %s1959 = scalar_lea.vmem %s4, 896
        %v1960 = vld [vmem:[%s1959] sm:$0xff]
        %v1961 = vld [vmem:[%s1959 + $0x8] sm:$0xff]
        %v1962 = vld [vmem:[%s1959 + $0x10] sm:$0xff]
        %v1963 = vld [vmem:[%s1959 + $0x18] sm:$0xff]
        %v1964 = vld [vmem:[%s1959 + $0x20] sm:$0xff]
        %v1965 = vld [vmem:[%s1959 + $0x28] sm:$0xff]
        %v1966 = vld [vmem:[%s1959 + $0x30] sm:$0xff]
        %v1967 = vld [vmem:[%s1959 + $0x38] sm:$0xff]
        %v1968 = vld [vmem:[%s1959 + $0x40] sm:$0xff]
        %v1969 = vld [vmem:[%s1959 + $0x48] sm:$0xff]
        %v1970 = vld [vmem:[%s1959 + $0x50] sm:$0xff]
        %v1971 = vld [vmem:[%s1959 + $0x58] sm:$0xff]
        %v1972 = vld [vmem:[%s1959 + $0x60] sm:$0xff]
        %v1973 = vld [vmem:[%s1959 + $0x68] sm:$0xff]
        %v1974 = vld [vmem:[%s1959 + $0x70] sm:$0xff]
        %v1975 = vld [vmem:[%s1959 + $0x78] sm:$0xff]
        %1976 = vmatprep.subr.mxu0 0.0
        %1977 = vmatpush1.msra.mxu0 %v1975
        %1978 = vmatprep.subr.mxu0 0.0
        %1979 = vmatpush1.msra.mxu0 %v1974
        %1980 = vmatprep.subr.mxu0 0.0
        %1981 = vmatpush1.msra.mxu0 %v1973
        %1982 = vmatprep.subr.mxu0 0.0
        %1983 = vmatpush1.msra.mxu0 %v1972
        %1984 = vmatprep.subr.mxu0 0.0
        %1985 = vmatpush1.msra.mxu0 %v1971
        %1986 = vmatprep.subr.mxu0 0.0
        %1987 = vmatpush1.msra.mxu0 %v1970
        %1988 = vmatprep.subr.mxu0 0.0
        %1989 = vmatpush1.msra.mxu0 %v1969
        %1990 = vmatprep.subr.mxu0 0.0
        %1991 = vmatpush1.msra.mxu0 %v1968
        %1992 = vmatprep.subr.mxu0 0.0
        %1993 = vmatpush1.msra.mxu0 %v1967
        %1994 = vmatprep.subr.mxu0 0.0
        %1995 = vmatpush1.msra.mxu0 %v1966
        %1996 = vmatprep.subr.mxu0 0.0
        %1997 = vmatpush1.msra.mxu0 %v1965
        %1998 = vmatprep.subr.mxu0 0.0
        %1999 = vmatpush1.msra.mxu0 %v1964
        %2000 = vmatprep.subr.mxu0 0.0
        %2001 = vmatpush1.msra.mxu0 %v1963
        %2002 = vmatprep.subr.mxu0 0.0
        %2003 = vmatpush1.msra.mxu0 %v1962
        %2004 = vmatprep.subr.mxu0 0.0
        %2005 = vmatpush1.msra.mxu0 %v1961
        %2006 = vmatprep.subr.mxu0 0.0
        %2007 = vmatpush1.msra.mxu0 %v1960
        %2008 = vmatprep.subr.mxu0 0.0
        %2009 = vmatpush2.msra.mxu0 0.0
        %2010 = vmatprep.subr.mxu0 0.0
        %2011 = vmatpush2.msra.mxu0 0.0
        %2012 = vmatprep.subr.mxu0 0.0
        %2013 = vmatpush2.msra.mxu0 0.0
        %2014 = vmatprep.subr.mxu0 0.0
        %2015 = vmatpush2.msra.mxu0 0.0
        %2016 = vmatprep.subr.mxu0 0.0
        %2017 = vmatpush2.msra.mxu0 0.0
        %2018 = vmatprep.subr.mxu0 0.0
        %2019 = vmatpush2.msra.mxu0 0.0
        %2020 = vmatprep.subr.mxu0 0.0
        %2021 = vmatpush2.msra.mxu0 0.0
        %2022 = vmatprep.subr.mxu0 0.0
        %2023 = vmatpush2.msra.mxu0 0.0
        %2024 = vmatprep.subr.mxu0 0.0
        %2025 = vmatpush2.msra.mxu0 0.0
        %2026 = vmatprep.subr.mxu0 0.0
        %2027 = vmatpush2.msra.mxu0 0.0
        %2028 = vmatprep.subr.mxu0 0.0
        %2029 = vmatpush2.msra.mxu0 0.0
        %2030 = vmatprep.subr.mxu0 0.0
        %2031 = vmatpush2.msra.mxu0 0.0
        %2032 = vmatprep.subr.mxu0 0.0
        %2033 = vmatpush2.msra.mxu0 0.0
        %2034 = vmatprep.subr.mxu0 0.0
        %2035 = vmatpush2.msra.mxu0 0.0
        %2036 = vmatprep.subr.mxu0 0.0
        %2037 = vmatpush2.msra.mxu0 0.0
        %2038 = vmatprep.subr.mxu0 0.0
        %2039 = vmatpush2.msra.mxu0 0.0
        %2040 = vmatprep.mubr.f32.mxu0 0.0
        %2041 = vmatmul.mubr.f32.gmra.mxu0 %v1951
        %v2042 = vpop.f32.mrf.mxu0
        %v2043 = vadd.f32 0.0, %v2042
        %v2044 = vpop.f32.mrf.mxu0
        %2045 = vmatprep.mubr.f32.mxu0 0.0
        %2046 = vmatmul.mubr.f32.gmra.mxu0 %v1956
        %v2047 = vpop.f32.mrf.mxu0
        %v2048 = vadd.f32 0.0, %v2047
        %v2049 = vpop.f32.mrf.mxu0
        %2050 = vdwg.mxu0
        %v2051 = vadd.f32 %v1873, %v2043
        %v2052 = vadd.f32 %v1874, %v2048
        %s2053 = scalar_lea.vmem %s3, 128
        %v2054 = vld [vmem:[%s2053] sm:$0xff]
        %v2055 = vld [vmem:[%s2053 + $0x8] sm:$0x1]
        %v2057 = vsel %vm632, %v2054, 0
        %v2060 = vsel %vm632, %v2055, 0
        %2062 = vmatprep.subr.mxu0 0.0
        %2063 = vmatpush1.msra.mxu0 0.0
        %2064 = vmatprep.subr.mxu0 0.0
        %2065 = vmatpush1.msra.mxu0 0.0
        %2066 = vmatprep.subr.mxu0 0.0
        %2067 = vmatpush1.msra.mxu0 0.0
        %2068 = vmatprep.subr.mxu0 0.0
        %2069 = vmatpush1.msra.mxu0 0.0
        %2070 = vmatprep.subr.mxu0 0.0
        %2071 = vmatpush1.msra.mxu0 0.0
        %2072 = vmatprep.subr.mxu0 0.0
        %2073 = vmatpush1.msra.mxu0 %v641
        %2074 = vmatprep.subr.mxu0 0.0
        %2075 = vmatpush1.msra.mxu0 %v628
        %2076 = vmatprep.subr.mxu0 0.0
        %2077 = vmatpush1.msra.mxu0 %v627
        %2078 = vmatprep.subr.mxu0 0.0
        %2079 = vmatpush1.msra.mxu0 %v626
        %2080 = vmatprep.subr.mxu0 0.0
        %2081 = vmatpush1.msra.mxu0 %v625
        %2082 = vmatprep.subr.mxu0 0.0
        %2083 = vmatpush1.msra.mxu0 %v624
        %2084 = vmatprep.subr.mxu0 0.0
        %2085 = vmatpush1.msra.mxu0 %v623
        %2086 = vmatprep.subr.mxu0 0.0
        %2087 = vmatpush1.msra.mxu0 %v622
        %2088 = vmatprep.subr.mxu0 0.0
        %2089 = vmatpush1.msra.mxu0 %v621
        %2090 = vmatprep.subr.mxu0 0.0
        %2091 = vmatpush1.msra.mxu0 %v620
        %2092 = vmatprep.subr.mxu0 0.0
        %2093 = vmatpush1.msra.mxu0 %v619
        %2094 = vmatprep.subr.mxu0 0.0
        %2095 = vmatpush2.msra.mxu0 0.0
        %2096 = vmatprep.subr.mxu0 0.0
        %2097 = vmatpush2.msra.mxu0 0.0
        %2098 = vmatprep.subr.mxu0 0.0
        %2099 = vmatpush2.msra.mxu0 0.0
        %2100 = vmatprep.subr.mxu0 0.0
        %2101 = vmatpush2.msra.mxu0 0.0
        %2102 = vmatprep.subr.mxu0 0.0
        %2103 = vmatpush2.msra.mxu0 0.0
        %2104 = vmatprep.subr.mxu0 0.0
        %2105 = vmatpush2.msra.mxu0 0.0
        %2106 = vmatprep.subr.mxu0 0.0
        %2107 = vmatpush2.msra.mxu0 0.0
        %2108 = vmatprep.subr.mxu0 0.0
        %2109 = vmatpush2.msra.mxu0 0.0
        %2110 = vmatprep.subr.mxu0 0.0
        %2111 = vmatpush2.msra.mxu0 0.0
        %2112 = vmatprep.subr.mxu0 0.0
        %2113 = vmatpush2.msra.mxu0 0.0
        %2114 = vmatprep.subr.mxu0 0.0
        %2115 = vmatpush2.msra.mxu0 0.0
        %2116 = vmatprep.subr.mxu0 0.0
        %2117 = vmatpush2.msra.mxu0 0.0
        %2118 = vmatprep.subr.mxu0 0.0
        %2119 = vmatpush2.msra.mxu0 0.0
        %2120 = vmatprep.subr.mxu0 0.0
        %2121 = vmatpush2.msra.mxu0 0.0
        %2122 = vmatprep.subr.mxu0 0.0
        %2123 = vmatpush2.msra.mxu0 0.0
        %2124 = vmatprep.subr.mxu0 0.0
        %2125 = vmatpush2.msra.mxu0 0.0
        %2126 = vmatprep.mubr.f32.mxu0 0.0
        %2127 = vmatmul.mubr.f32.gmra.mxu0 %v2057
        %v2128 = vpop.f32.mrf.mxu0
        %v2129 = vadd.f32 0.0, %v2128
        %v2130 = vpop.f32.mrf.mxu0
        %2131 = vmatprep.mubr.f32.mxu0 0.0
        %2132 = vmatmul.mubr.f32.gmra.mxu0 %v2060
        %v2133 = vpop.f32.mrf.mxu0
        %v2134 = vadd.f32 0.0, %v2133
        %v2135 = vpop.f32.mrf.mxu0
        %2136 = vdwg.mxu0
        %s2137 = scalar_lea.vmem %s4, 1024
        %v2138 = vld [vmem:[%s2137] sm:$0xff]
        %v2139 = vld [vmem:[%s2137 + $0x8] sm:$0xff]
        %v2140 = vld [vmem:[%s2137 + $0x10] sm:$0xff]
        %v2141 = vld [vmem:[%s2137 + $0x18] sm:$0xff]
        %v2142 = vld [vmem:[%s2137 + $0x20] sm:$0xff]
        %v2143 = vld [vmem:[%s2137 + $0x28] sm:$0xff]
        %v2144 = vld [vmem:[%s2137 + $0x30] sm:$0xff]
        %v2145 = vld [vmem:[%s2137 + $0x38] sm:$0xff]
        %v2146 = vld [vmem:[%s2137 + $0x40] sm:$0xff]
        %v2147 = vld [vmem:[%s2137 + $0x48] sm:$0xff]
        %v2148 = vld [vmem:[%s2137 + $0x50] sm:$0xff]
        %v2149 = vld [vmem:[%s2137 + $0x58] sm:$0xff]
        %v2150 = vld [vmem:[%s2137 + $0x60] sm:$0xff]
        %v2151 = vld [vmem:[%s2137 + $0x68] sm:$0xff]
        %v2152 = vld [vmem:[%s2137 + $0x70] sm:$0xff]
        %v2153 = vld [vmem:[%s2137 + $0x78] sm:$0xff]
        %2154 = vmatprep.subr.mxu0 0.0
        %2155 = vmatpush1.msra.mxu0 %v2153
        %2156 = vmatprep.subr.mxu0 0.0
        %2157 = vmatpush1.msra.mxu0 %v2152
        %2158 = vmatprep.subr.mxu0 0.0
        %2159 = vmatpush1.msra.mxu0 %v2151
        %2160 = vmatprep.subr.mxu0 0.0
        %2161 = vmatpush1.msra.mxu0 %v2150
        %2162 = vmatprep.subr.mxu0 0.0
        %2163 = vmatpush1.msra.mxu0 %v2149
        %2164 = vmatprep.subr.mxu0 0.0
        %2165 = vmatpush1.msra.mxu0 %v2148
        %2166 = vmatprep.subr.mxu0 0.0
        %2167 = vmatpush1.msra.mxu0 %v2147
        %2168 = vmatprep.subr.mxu0 0.0
        %2169 = vmatpush1.msra.mxu0 %v2146
        %2170 = vmatprep.subr.mxu0 0.0
        %2171 = vmatpush1.msra.mxu0 %v2145
        %2172 = vmatprep.subr.mxu0 0.0
        %2173 = vmatpush1.msra.mxu0 %v2144
        %2174 = vmatprep.subr.mxu0 0.0
        %2175 = vmatpush1.msra.mxu0 %v2143
        %2176 = vmatprep.subr.mxu0 0.0
        %2177 = vmatpush1.msra.mxu0 %v2142
        %2178 = vmatprep.subr.mxu0 0.0
        %2179 = vmatpush1.msra.mxu0 %v2141
        %2180 = vmatprep.subr.mxu0 0.0
        %2181 = vmatpush1.msra.mxu0 %v2140
        %2182 = vmatprep.subr.mxu0 0.0
        %2183 = vmatpush1.msra.mxu0 %v2139
        %2184 = vmatprep.subr.mxu0 0.0
        %2185 = vmatpush1.msra.mxu0 %v2138
        %2186 = vmatprep.subr.mxu0 0.0
        %2187 = vmatpush2.msra.mxu0 0.0
        %2188 = vmatprep.subr.mxu0 0.0
        %2189 = vmatpush2.msra.mxu0 0.0
        %2190 = vmatprep.subr.mxu0 0.0
        %2191 = vmatpush2.msra.mxu0 0.0
        %2192 = vmatprep.subr.mxu0 0.0
        %2193 = vmatpush2.msra.mxu0 0.0
        %2194 = vmatprep.subr.mxu0 0.0
        %2195 = vmatpush2.msra.mxu0 0.0
        %2196 = vmatprep.subr.mxu0 0.0
        %2197 = vmatpush2.msra.mxu0 0.0
        %2198 = vmatprep.subr.mxu0 0.0
        %2199 = vmatpush2.msra.mxu0 0.0
        %2200 = vmatprep.subr.mxu0 0.0
        %2201 = vmatpush2.msra.mxu0 0.0
        %2202 = vmatprep.subr.mxu0 0.0
        %2203 = vmatpush2.msra.mxu0 0.0
        %2204 = vmatprep.subr.mxu0 0.0
        %2205 = vmatpush2.msra.mxu0 0.0
        %2206 = vmatprep.subr.mxu0 0.0
        %2207 = vmatpush2.msra.mxu0 0.0
        %2208 = vmatprep.subr.mxu0 0.0
        %2209 = vmatpush2.msra.mxu0 0.0
        %2210 = vmatprep.subr.mxu0 0.0
        %2211 = vmatpush2.msra.mxu0 0.0
        %2212 = vmatprep.subr.mxu0 0.0
        %2213 = vmatpush2.msra.mxu0 0.0
        %2214 = vmatprep.subr.mxu0 0.0
        %2215 = vmatpush2.msra.mxu0 0.0
        %2216 = vmatprep.subr.mxu0 0.0
        %2217 = vmatpush2.msra.mxu0 0.0
        %2218 = vmatprep.mubr.f32.mxu0 0.0
        %2219 = vmatmul.mubr.f32.gmra.mxu0 %v2129
        %v2220 = vpop.f32.mrf.mxu0
        %v2221 = vadd.f32 0.0, %v2220
        %v2222 = vpop.f32.mrf.mxu0
        %2223 = vmatprep.mubr.f32.mxu0 0.0
        %2224 = vmatmul.mubr.f32.gmra.mxu0 %v2134
        %v2225 = vpop.f32.mrf.mxu0
        %v2226 = vadd.f32 0.0, %v2225
        %v2227 = vpop.f32.mrf.mxu0
        %2228 = vdwg.mxu0
        %v2229 = vadd.f32 %v2051, %v2221
        %v2230 = vadd.f32 %v2052, %v2226
        %s2231 = scalar_lea.vmem %s3, 144
        %v2232 = vld [vmem:[%s2231] sm:$0xff]
        %v2233 = vld [vmem:[%s2231 + $0x8] sm:$0x1]
        %v2235 = vsel %vm632, %v2232, 0
        %v2238 = vsel %vm632, %v2233, 0
        %2240 = vmatprep.subr.mxu0 0.0
        %2241 = vmatpush1.msra.mxu0 0.0
        %2242 = vmatprep.subr.mxu0 0.0
        %2243 = vmatpush1.msra.mxu0 0.0
        %2244 = vmatprep.subr.mxu0 0.0
        %2245 = vmatpush1.msra.mxu0 0.0
        %2246 = vmatprep.subr.mxu0 0.0
        %2247 = vmatpush1.msra.mxu0 0.0
        %2248 = vmatprep.subr.mxu0 0.0
        %2249 = vmatpush1.msra.mxu0 0.0
        %2250 = vmatprep.subr.mxu0 0.0
        %2251 = vmatpush1.msra.mxu0 %v641
        %2252 = vmatprep.subr.mxu0 0.0
        %2253 = vmatpush1.msra.mxu0 %v628
        %2254 = vmatprep.subr.mxu0 0.0
        %2255 = vmatpush1.msra.mxu0 %v627
        %2256 = vmatprep.subr.mxu0 0.0
        %2257 = vmatpush1.msra.mxu0 %v626
        %2258 = vmatprep.subr.mxu0 0.0
        %2259 = vmatpush1.msra.mxu0 %v625
        %2260 = vmatprep.subr.mxu0 0.0
        %2261 = vmatpush1.msra.mxu0 %v624
        %2262 = vmatprep.subr.mxu0 0.0
        %2263 = vmatpush1.msra.mxu0 %v623
        %2264 = vmatprep.subr.mxu0 0.0
        %2265 = vmatpush1.msra.mxu0 %v622
        %2266 = vmatprep.subr.mxu0 0.0
        %2267 = vmatpush1.msra.mxu0 %v621
        %2268 = vmatprep.subr.mxu0 0.0
        %2269 = vmatpush1.msra.mxu0 %v620
        %2270 = vmatprep.subr.mxu0 0.0
        %2271 = vmatpush1.msra.mxu0 %v619
        %2272 = vmatprep.subr.mxu0 0.0
        %2273 = vmatpush2.msra.mxu0 0.0
        %2274 = vmatprep.subr.mxu0 0.0
        %2275 = vmatpush2.msra.mxu0 0.0
        %2276 = vmatprep.subr.mxu0 0.0
        %2277 = vmatpush2.msra.mxu0 0.0
        %2278 = vmatprep.subr.mxu0 0.0
        %2279 = vmatpush2.msra.mxu0 0.0
        %2280 = vmatprep.subr.mxu0 0.0
        %2281 = vmatpush2.msra.mxu0 0.0
        %2282 = vmatprep.subr.mxu0 0.0
        %2283 = vmatpush2.msra.mxu0 0.0
        %2284 = vmatprep.subr.mxu0 0.0
        %2285 = vmatpush2.msra.mxu0 0.0
        %2286 = vmatprep.subr.mxu0 0.0
        %2287 = vmatpush2.msra.mxu0 0.0
        %2288 = vmatprep.subr.mxu0 0.0
        %2289 = vmatpush2.msra.mxu0 0.0
        %2290 = vmatprep.subr.mxu0 0.0
        %2291 = vmatpush2.msra.mxu0 0.0
        %2292 = vmatprep.subr.mxu0 0.0
        %2293 = vmatpush2.msra.mxu0 0.0
        %2294 = vmatprep.subr.mxu0 0.0
        %2295 = vmatpush2.msra.mxu0 0.0
        %2296 = vmatprep.subr.mxu0 0.0
        %2297 = vmatpush2.msra.mxu0 0.0
        %2298 = vmatprep.subr.mxu0 0.0
        %2299 = vmatpush2.msra.mxu0 0.0
        %2300 = vmatprep.subr.mxu0 0.0
        %2301 = vmatpush2.msra.mxu0 0.0
        %2302 = vmatprep.subr.mxu0 0.0
        %2303 = vmatpush2.msra.mxu0 0.0
        %2304 = vmatprep.mubr.f32.mxu0 0.0
        %2305 = vmatmul.mubr.f32.gmra.mxu0 %v2235
        %v2306 = vpop.f32.mrf.mxu0
        %v2307 = vadd.f32 0.0, %v2306
        %v2308 = vpop.f32.mrf.mxu0
        %2309 = vmatprep.mubr.f32.mxu0 0.0
        %2310 = vmatmul.mubr.f32.gmra.mxu0 %v2238
        %v2311 = vpop.f32.mrf.mxu0
        %v2312 = vadd.f32 0.0, %v2311
        %v2313 = vpop.f32.mrf.mxu0
        %2314 = vdwg.mxu0
        %s2315 = scalar_lea.vmem %s4, 1152
        %v2316 = vld [vmem:[%s2315] sm:$0xff]
        %v2317 = vld [vmem:[%s2315 + $0x8] sm:$0xff]
        %v2318 = vld [vmem:[%s2315 + $0x10] sm:$0xff]
        %v2319 = vld [vmem:[%s2315 + $0x18] sm:$0xff]
        %v2320 = vld [vmem:[%s2315 + $0x20] sm:$0xff]
        %v2321 = vld [vmem:[%s2315 + $0x28] sm:$0xff]
        %v2322 = vld [vmem:[%s2315 + $0x30] sm:$0xff]
        %v2323 = vld [vmem:[%s2315 + $0x38] sm:$0xff]
        %v2324 = vld [vmem:[%s2315 + $0x40] sm:$0xff]
        %v2325 = vld [vmem:[%s2315 + $0x48] sm:$0xff]
        %v2326 = vld [vmem:[%s2315 + $0x50] sm:$0xff]
        %v2327 = vld [vmem:[%s2315 + $0x58] sm:$0xff]
        %v2328 = vld [vmem:[%s2315 + $0x60] sm:$0xff]
        %v2329 = vld [vmem:[%s2315 + $0x68] sm:$0xff]
        %v2330 = vld [vmem:[%s2315 + $0x70] sm:$0xff]
        %v2331 = vld [vmem:[%s2315 + $0x78] sm:$0xff]
        %2332 = vmatprep.subr.mxu0 0.0
        %2333 = vmatpush1.msra.mxu0 %v2331
        %2334 = vmatprep.subr.mxu0 0.0
        %2335 = vmatpush1.msra.mxu0 %v2330
        %2336 = vmatprep.subr.mxu0 0.0
        %2337 = vmatpush1.msra.mxu0 %v2329
        %2338 = vmatprep.subr.mxu0 0.0
        %2339 = vmatpush1.msra.mxu0 %v2328
        %2340 = vmatprep.subr.mxu0 0.0
        %2341 = vmatpush1.msra.mxu0 %v2327
        %2342 = vmatprep.subr.mxu0 0.0
        %2343 = vmatpush1.msra.mxu0 %v2326
        %2344 = vmatprep.subr.mxu0 0.0
        %2345 = vmatpush1.msra.mxu0 %v2325
        %2346 = vmatprep.subr.mxu0 0.0
        %2347 = vmatpush1.msra.mxu0 %v2324
        %2348 = vmatprep.subr.mxu0 0.0
        %2349 = vmatpush1.msra.mxu0 %v2323
        %2350 = vmatprep.subr.mxu0 0.0
        %2351 = vmatpush1.msra.mxu0 %v2322
        %2352 = vmatprep.subr.mxu0 0.0
        %2353 = vmatpush1.msra.mxu0 %v2321
        %2354 = vmatprep.subr.mxu0 0.0
        %2355 = vmatpush1.msra.mxu0 %v2320
        %2356 = vmatprep.subr.mxu0 0.0
        %2357 = vmatpush1.msra.mxu0 %v2319
        %2358 = vmatprep.subr.mxu0 0.0
        %2359 = vmatpush1.msra.mxu0 %v2318
        %2360 = vmatprep.subr.mxu0 0.0
        %2361 = vmatpush1.msra.mxu0 %v2317
        %2362 = vmatprep.subr.mxu0 0.0
        %2363 = vmatpush1.msra.mxu0 %v2316
        %2364 = vmatprep.subr.mxu0 0.0
        %2365 = vmatpush2.msra.mxu0 0.0
        %2366 = vmatprep.subr.mxu0 0.0
        %2367 = vmatpush2.msra.mxu0 0.0
        %2368 = vmatprep.subr.mxu0 0.0
        %2369 = vmatpush2.msra.mxu0 0.0
        %2370 = vmatprep.subr.mxu0 0.0
        %2371 = vmatpush2.msra.mxu0 0.0
        %2372 = vmatprep.subr.mxu0 0.0
        %2373 = vmatpush2.msra.mxu0 0.0
        %2374 = vmatprep.subr.mxu0 0.0
        %2375 = vmatpush2.msra.mxu0 0.0
        %2376 = vmatprep.subr.mxu0 0.0
        %2377 = vmatpush2.msra.mxu0 0.0
        %2378 = vmatprep.subr.mxu0 0.0
        %2379 = vmatpush2.msra.mxu0 0.0
        %2380 = vmatprep.subr.mxu0 0.0
        %2381 = vmatpush2.msra.mxu0 0.0
        %2382 = vmatprep.subr.mxu0 0.0
        %2383 = vmatpush2.msra.mxu0 0.0
        %2384 = vmatprep.subr.mxu0 0.0
        %2385 = vmatpush2.msra.mxu0 0.0
        %2386 = vmatprep.subr.mxu0 0.0
        %2387 = vmatpush2.msra.mxu0 0.0
        %2388 = vmatprep.subr.mxu0 0.0
        %2389 = vmatpush2.msra.mxu0 0.0
        %2390 = vmatprep.subr.mxu0 0.0
        %2391 = vmatpush2.msra.mxu0 0.0
        %2392 = vmatprep.subr.mxu0 0.0
        %2393 = vmatpush2.msra.mxu0 0.0
        %2394 = vmatprep.subr.mxu0 0.0
        %2395 = vmatpush2.msra.mxu0 0.0
        %2396 = vmatprep.mubr.f32.mxu0 0.0
        %2397 = vmatmul.mubr.f32.gmra.mxu0 %v2307
        %v2398 = vpop.f32.mrf.mxu0
        %v2399 = vadd.f32 0.0, %v2398
        %v2400 = vpop.f32.mrf.mxu0
        %2401 = vmatprep.mubr.f32.mxu0 0.0
        %2402 = vmatmul.mubr.f32.gmra.mxu0 %v2312
        %v2403 = vpop.f32.mrf.mxu0
        %v2404 = vadd.f32 0.0, %v2403
        %v2405 = vpop.f32.mrf.mxu0
        %2406 = vdwg.mxu0
        %v2407 = vadd.f32 %v2229, %v2399
        %v2408 = vadd.f32 %v2230, %v2404
        %s2409 = scalar_lea.vmem %s3, 160
        %v2410 = vld [vmem:[%s2409] sm:$0xff]
        %v2411 = vld [vmem:[%s2409 + $0x8] sm:$0x1]
        %v2413 = vsel %vm632, %v2410, 0
        %v2416 = vsel %vm632, %v2411, 0
        %2418 = vmatprep.subr.mxu0 0.0
        %2419 = vmatpush1.msra.mxu0 0.0
        %2420 = vmatprep.subr.mxu0 0.0
        %2421 = vmatpush1.msra.mxu0 0.0
        %2422 = vmatprep.subr.mxu0 0.0
        %2423 = vmatpush1.msra.mxu0 0.0
        %2424 = vmatprep.subr.mxu0 0.0
        %2425 = vmatpush1.msra.mxu0 0.0
        %2426 = vmatprep.subr.mxu0 0.0
        %2427 = vmatpush1.msra.mxu0 0.0
        %2428 = vmatprep.subr.mxu0 0.0
        %2429 = vmatpush1.msra.mxu0 %v641
        %2430 = vmatprep.subr.mxu0 0.0
        %2431 = vmatpush1.msra.mxu0 %v628
        %2432 = vmatprep.subr.mxu0 0.0
        %2433 = vmatpush1.msra.mxu0 %v627
        %2434 = vmatprep.subr.mxu0 0.0
        %2435 = vmatpush1.msra.mxu0 %v626
        %2436 = vmatprep.subr.mxu0 0.0
        %2437 = vmatpush1.msra.mxu0 %v625
        %2438 = vmatprep.subr.mxu0 0.0
        %2439 = vmatpush1.msra.mxu0 %v624
        %2440 = vmatprep.subr.mxu0 0.0
        %2441 = vmatpush1.msra.mxu0 %v623
        %2442 = vmatprep.subr.mxu0 0.0
        %2443 = vmatpush1.msra.mxu0 %v622
        %2444 = vmatprep.subr.mxu0 0.0
        %2445 = vmatpush1.msra.mxu0 %v621
        %2446 = vmatprep.subr.mxu0 0.0
        %2447 = vmatpush1.msra.mxu0 %v620
        %2448 = vmatprep.subr.mxu0 0.0
        %2449 = vmatpush1.msra.mxu0 %v619
        %2450 = vmatprep.subr.mxu0 0.0
        %2451 = vmatpush2.msra.mxu0 0.0
        %2452 = vmatprep.subr.mxu0 0.0
        %2453 = vmatpush2.msra.mxu0 0.0
        %2454 = vmatprep.subr.mxu0 0.0
        %2455 = vmatpush2.msra.mxu0 0.0
        %2456 = vmatprep.subr.mxu0 0.0
        %2457 = vmatpush2.msra.mxu0 0.0
        %2458 = vmatprep.subr.mxu0 0.0
        %2459 = vmatpush2.msra.mxu0 0.0
        %2460 = vmatprep.subr.mxu0 0.0
        %2461 = vmatpush2.msra.mxu0 0.0
        %2462 = vmatprep.subr.mxu0 0.0
        %2463 = vmatpush2.msra.mxu0 0.0
        %2464 = vmatprep.subr.mxu0 0.0
        %2465 = vmatpush2.msra.mxu0 0.0
        %2466 = vmatprep.subr.mxu0 0.0
        %2467 = vmatpush2.msra.mxu0 0.0
        %2468 = vmatprep.subr.mxu0 0.0
        %2469 = vmatpush2.msra.mxu0 0.0
        %2470 = vmatprep.subr.mxu0 0.0
        %2471 = vmatpush2.msra.mxu0 0.0
        %2472 = vmatprep.subr.mxu0 0.0
        %2473 = vmatpush2.msra.mxu0 0.0
        %2474 = vmatprep.subr.mxu0 0.0
        %2475 = vmatpush2.msra.mxu0 0.0
        %2476 = vmatprep.subr.mxu0 0.0
        %2477 = vmatpush2.msra.mxu0 0.0
        %2478 = vmatprep.subr.mxu0 0.0
        %2479 = vmatpush2.msra.mxu0 0.0
        %2480 = vmatprep.subr.mxu0 0.0
        %2481 = vmatpush2.msra.mxu0 0.0
        %2482 = vmatprep.mubr.f32.mxu0 0.0
        %2483 = vmatmul.mubr.f32.gmra.mxu0 %v2413
        %v2484 = vpop.f32.mrf.mxu0
        %v2485 = vadd.f32 0.0, %v2484
        %v2486 = vpop.f32.mrf.mxu0
        %2487 = vmatprep.mubr.f32.mxu0 0.0
        %2488 = vmatmul.mubr.f32.gmra.mxu0 %v2416
        %v2489 = vpop.f32.mrf.mxu0
        %v2490 = vadd.f32 0.0, %v2489
        %v2491 = vpop.f32.mrf.mxu0
        %2492 = vdwg.mxu0
        %s2493 = scalar_lea.vmem %s4, 1280
        %v2494 = vld [vmem:[%s2493] sm:$0xff]
        %v2495 = vld [vmem:[%s2493 + $0x8] sm:$0xff]
        %v2496 = vld [vmem:[%s2493 + $0x10] sm:$0xff]
        %v2497 = vld [vmem:[%s2493 + $0x18] sm:$0xff]
        %v2498 = vld [vmem:[%s2493 + $0x20] sm:$0xff]
        %v2499 = vld [vmem:[%s2493 + $0x28] sm:$0xff]
        %v2500 = vld [vmem:[%s2493 + $0x30] sm:$0xff]
        %v2501 = vld [vmem:[%s2493 + $0x38] sm:$0xff]
        %v2502 = vld [vmem:[%s2493 + $0x40] sm:$0xff]
        %v2503 = vld [vmem:[%s2493 + $0x48] sm:$0xff]
        %v2504 = vld [vmem:[%s2493 + $0x50] sm:$0xff]
        %v2505 = vld [vmem:[%s2493 + $0x58] sm:$0xff]
        %v2506 = vld [vmem:[%s2493 + $0x60] sm:$0xff]
        %v2507 = vld [vmem:[%s2493 + $0x68] sm:$0xff]
        %v2508 = vld [vmem:[%s2493 + $0x70] sm:$0xff]
        %v2509 = vld [vmem:[%s2493 + $0x78] sm:$0xff]
        %2510 = vmatprep.subr.mxu0 0.0
        %2511 = vmatpush1.msra.mxu0 %v2509
        %2512 = vmatprep.subr.mxu0 0.0
        %2513 = vmatpush1.msra.mxu0 %v2508
        %2514 = vmatprep.subr.mxu0 0.0
        %2515 = vmatpush1.msra.mxu0 %v2507
        %2516 = vmatprep.subr.mxu0 0.0
        %2517 = vmatpush1.msra.mxu0 %v2506
        %2518 = vmatprep.subr.mxu0 0.0
        %2519 = vmatpush1.msra.mxu0 %v2505
        %2520 = vmatprep.subr.mxu0 0.0
        %2521 = vmatpush1.msra.mxu0 %v2504
        %2522 = vmatprep.subr.mxu0 0.0
        %2523 = vmatpush1.msra.mxu0 %v2503
        %2524 = vmatprep.subr.mxu0 0.0
        %2525 = vmatpush1.msra.mxu0 %v2502
        %2526 = vmatprep.subr.mxu0 0.0
        %2527 = vmatpush1.msra.mxu0 %v2501
        %2528 = vmatprep.subr.mxu0 0.0
        %2529 = vmatpush1.msra.mxu0 %v2500
        %2530 = vmatprep.subr.mxu0 0.0
        %2531 = vmatpush1.msra.mxu0 %v2499
        %2532 = vmatprep.subr.mxu0 0.0
        %2533 = vmatpush1.msra.mxu0 %v2498
        %2534 = vmatprep.subr.mxu0 0.0
        %2535 = vmatpush1.msra.mxu0 %v2497
        %2536 = vmatprep.subr.mxu0 0.0
        %2537 = vmatpush1.msra.mxu0 %v2496
        %2538 = vmatprep.subr.mxu0 0.0
        %2539 = vmatpush1.msra.mxu0 %v2495
        %2540 = vmatprep.subr.mxu0 0.0
        %2541 = vmatpush1.msra.mxu0 %v2494
        %2542 = vmatprep.subr.mxu0 0.0
        %2543 = vmatpush2.msra.mxu0 0.0
        %2544 = vmatprep.subr.mxu0 0.0
        %2545 = vmatpush2.msra.mxu0 0.0
        %2546 = vmatprep.subr.mxu0 0.0
        %2547 = vmatpush2.msra.mxu0 0.0
        %2548 = vmatprep.subr.mxu0 0.0
        %2549 = vmatpush2.msra.mxu0 0.0
        %2550 = vmatprep.subr.mxu0 0.0
        %2551 = vmatpush2.msra.mxu0 0.0
        %2552 = vmatprep.subr.mxu0 0.0
        %2553 = vmatpush2.msra.mxu0 0.0
        %2554 = vmatprep.subr.mxu0 0.0
        %2555 = vmatpush2.msra.mxu0 0.0
        %2556 = vmatprep.subr.mxu0 0.0
        %2557 = vmatpush2.msra.mxu0 0.0
        %2558 = vmatprep.subr.mxu0 0.0
        %2559 = vmatpush2.msra.mxu0 0.0
        %2560 = vmatprep.subr.mxu0 0.0
        %2561 = vmatpush2.msra.mxu0 0.0
        %2562 = vmatprep.subr.mxu0 0.0
        %2563 = vmatpush2.msra.mxu0 0.0
        %2564 = vmatprep.subr.mxu0 0.0
        %2565 = vmatpush2.msra.mxu0 0.0
        %2566 = vmatprep.subr.mxu0 0.0
        %2567 = vmatpush2.msra.mxu0 0.0
        %2568 = vmatprep.subr.mxu0 0.0
        %2569 = vmatpush2.msra.mxu0 0.0
        %2570 = vmatprep.subr.mxu0 0.0
        %2571 = vmatpush2.msra.mxu0 0.0
        %2572 = vmatprep.subr.mxu0 0.0
        %2573 = vmatpush2.msra.mxu0 0.0
        %2574 = vmatprep.mubr.f32.mxu0 0.0
        %2575 = vmatmul.mubr.f32.gmra.mxu0 %v2485
        %v2576 = vpop.f32.mrf.mxu0
        %v2577 = vadd.f32 0.0, %v2576
        %v2578 = vpop.f32.mrf.mxu0
        %2579 = vmatprep.mubr.f32.mxu0 0.0
        %2580 = vmatmul.mubr.f32.gmra.mxu0 %v2490
        %v2581 = vpop.f32.mrf.mxu0
        %v2582 = vadd.f32 0.0, %v2581
        %v2583 = vpop.f32.mrf.mxu0
        %2584 = vdwg.mxu0
        %v2585 = vadd.f32 %v2407, %v2577
        %v2586 = vadd.f32 %v2408, %v2582
        %s2587 = scalar_lea.vmem %s3, 176
        %v2588 = vld [vmem:[%s2587] sm:$0xff]
        %v2589 = vld [vmem:[%s2587 + $0x8] sm:$0x1]
        %v2591 = vsel %vm632, %v2588, 0
        %v2594 = vsel %vm632, %v2589, 0
        %2596 = vmatprep.subr.mxu0 0.0
        %2597 = vmatpush1.msra.mxu0 0.0
        %2598 = vmatprep.subr.mxu0 0.0
        %2599 = vmatpush1.msra.mxu0 0.0
        %2600 = vmatprep.subr.mxu0 0.0
        %2601 = vmatpush1.msra.mxu0 0.0
        %2602 = vmatprep.subr.mxu0 0.0
        %2603 = vmatpush1.msra.mxu0 0.0
        %2604 = vmatprep.subr.mxu0 0.0
        %2605 = vmatpush1.msra.mxu0 0.0
        %2606 = vmatprep.subr.mxu0 0.0
        %2607 = vmatpush1.msra.mxu0 %v641
        %2608 = vmatprep.subr.mxu0 0.0
        %2609 = vmatpush1.msra.mxu0 %v628
        %2610 = vmatprep.subr.mxu0 0.0
        %2611 = vmatpush1.msra.mxu0 %v627
        %2612 = vmatprep.subr.mxu0 0.0
        %2613 = vmatpush1.msra.mxu0 %v626
        %2614 = vmatprep.subr.mxu0 0.0
        %2615 = vmatpush1.msra.mxu0 %v625
        %2616 = vmatprep.subr.mxu0 0.0
        %2617 = vmatpush1.msra.mxu0 %v624
        %2618 = vmatprep.subr.mxu0 0.0
        %2619 = vmatpush1.msra.mxu0 %v623
        %2620 = vmatprep.subr.mxu0 0.0
        %2621 = vmatpush1.msra.mxu0 %v622
        %2622 = vmatprep.subr.mxu0 0.0
        %2623 = vmatpush1.msra.mxu0 %v621
        %2624 = vmatprep.subr.mxu0 0.0
        %2625 = vmatpush1.msra.mxu0 %v620
        %2626 = vmatprep.subr.mxu0 0.0
        %2627 = vmatpush1.msra.mxu0 %v619
        %2628 = vmatprep.subr.mxu0 0.0
        %2629 = vmatpush2.msra.mxu0 0.0
        %2630 = vmatprep.subr.mxu0 0.0
        %2631 = vmatpush2.msra.mxu0 0.0
        %2632 = vmatprep.subr.mxu0 0.0
        %2633 = vmatpush2.msra.mxu0 0.0
        %2634 = vmatprep.subr.mxu0 0.0
        %2635 = vmatpush2.msra.mxu0 0.0
        %2636 = vmatprep.subr.mxu0 0.0
        %2637 = vmatpush2.msra.mxu0 0.0
        %2638 = vmatprep.subr.mxu0 0.0
        %2639 = vmatpush2.msra.mxu0 0.0
        %2640 = vmatprep.subr.mxu0 0.0
        %2641 = vmatpush2.msra.mxu0 0.0
        %2642 = vmatprep.subr.mxu0 0.0
        %2643 = vmatpush2.msra.mxu0 0.0
        %2644 = vmatprep.subr.mxu0 0.0
        %2645 = vmatpush2.msra.mxu0 0.0
        %2646 = vmatprep.subr.mxu0 0.0
        %2647 = vmatpush2.msra.mxu0 0.0
        %2648 = vmatprep.subr.mxu0 0.0
        %2649 = vmatpush2.msra.mxu0 0.0
        %2650 = vmatprep.subr.mxu0 0.0
        %2651 = vmatpush2.msra.mxu0 0.0
        %2652 = vmatprep.subr.mxu0 0.0
        %2653 = vmatpush2.msra.mxu0 0.0
        %2654 = vmatprep.subr.mxu0 0.0
        %2655 = vmatpush2.msra.mxu0 0.0
        %2656 = vmatprep.subr.mxu0 0.0
        %2657 = vmatpush2.msra.mxu0 0.0
        %2658 = vmatprep.subr.mxu0 0.0
        %2659 = vmatpush2.msra.mxu0 0.0
        %2660 = vmatprep.mubr.f32.mxu0 0.0
        %2661 = vmatmul.mubr.f32.gmra.mxu0 %v2591
        %v2662 = vpop.f32.mrf.mxu0
        %v2663 = vadd.f32 0.0, %v2662
        %v2664 = vpop.f32.mrf.mxu0
        %2665 = vmatprep.mubr.f32.mxu0 0.0
        %2666 = vmatmul.mubr.f32.gmra.mxu0 %v2594
        %v2667 = vpop.f32.mrf.mxu0
        %v2668 = vadd.f32 0.0, %v2667
        %v2669 = vpop.f32.mrf.mxu0
        %2670 = vdwg.mxu0
        %s2671 = scalar_lea.vmem %s4, 1408
        %v2672 = vld [vmem:[%s2671] sm:$0xff]
        %v2673 = vld [vmem:[%s2671 + $0x8] sm:$0xff]
        %v2674 = vld [vmem:[%s2671 + $0x10] sm:$0xff]
        %v2675 = vld [vmem:[%s2671 + $0x18] sm:$0xff]
        %v2676 = vld [vmem:[%s2671 + $0x20] sm:$0xff]
        %v2677 = vld [vmem:[%s2671 + $0x28] sm:$0xff]
        %v2678 = vld [vmem:[%s2671 + $0x30] sm:$0xff]
        %v2679 = vld [vmem:[%s2671 + $0x38] sm:$0xff]
        %v2680 = vld [vmem:[%s2671 + $0x40] sm:$0xff]
        %v2681 = vld [vmem:[%s2671 + $0x48] sm:$0xff]
        %v2682 = vld [vmem:[%s2671 + $0x50] sm:$0xff]
        %v2683 = vld [vmem:[%s2671 + $0x58] sm:$0xff]
        %v2684 = vld [vmem:[%s2671 + $0x60] sm:$0xff]
        %v2685 = vld [vmem:[%s2671 + $0x68] sm:$0xff]
        %v2686 = vld [vmem:[%s2671 + $0x70] sm:$0xff]
        %v2687 = vld [vmem:[%s2671 + $0x78] sm:$0xff]
        %2688 = vmatprep.subr.mxu0 0.0
        %2689 = vmatpush1.msra.mxu0 %v2687
        %2690 = vmatprep.subr.mxu0 0.0
        %2691 = vmatpush1.msra.mxu0 %v2686
        %2692 = vmatprep.subr.mxu0 0.0
        %2693 = vmatpush1.msra.mxu0 %v2685
        %2694 = vmatprep.subr.mxu0 0.0
        %2695 = vmatpush1.msra.mxu0 %v2684
        %2696 = vmatprep.subr.mxu0 0.0
        %2697 = vmatpush1.msra.mxu0 %v2683
        %2698 = vmatprep.subr.mxu0 0.0
        %2699 = vmatpush1.msra.mxu0 %v2682
        %2700 = vmatprep.subr.mxu0 0.0
        %2701 = vmatpush1.msra.mxu0 %v2681
        %2702 = vmatprep.subr.mxu0 0.0
        %2703 = vmatpush1.msra.mxu0 %v2680
        %2704 = vmatprep.subr.mxu0 0.0
        %2705 = vmatpush1.msra.mxu0 %v2679
        %2706 = vmatprep.subr.mxu0 0.0
        %2707 = vmatpush1.msra.mxu0 %v2678
        %2708 = vmatprep.subr.mxu0 0.0
        %2709 = vmatpush1.msra.mxu0 %v2677
        %2710 = vmatprep.subr.mxu0 0.0
        %2711 = vmatpush1.msra.mxu0 %v2676
        %2712 = vmatprep.subr.mxu0 0.0
        %2713 = vmatpush1.msra.mxu0 %v2675
        %2714 = vmatprep.subr.mxu0 0.0
        %2715 = vmatpush1.msra.mxu0 %v2674
        %2716 = vmatprep.subr.mxu0 0.0
        %2717 = vmatpush1.msra.mxu0 %v2673
        %2718 = vmatprep.subr.mxu0 0.0
        %2719 = vmatpush1.msra.mxu0 %v2672
        %2720 = vmatprep.subr.mxu0 0.0
        %2721 = vmatpush2.msra.mxu0 0.0
        %2722 = vmatprep.subr.mxu0 0.0
        %2723 = vmatpush2.msra.mxu0 0.0
        %2724 = vmatprep.subr.mxu0 0.0
        %2725 = vmatpush2.msra.mxu0 0.0
        %2726 = vmatprep.subr.mxu0 0.0
        %2727 = vmatpush2.msra.mxu0 0.0
        %2728 = vmatprep.subr.mxu0 0.0
        %2729 = vmatpush2.msra.mxu0 0.0
        %2730 = vmatprep.subr.mxu0 0.0
        %2731 = vmatpush2.msra.mxu0 0.0
        %2732 = vmatprep.subr.mxu0 0.0
        %2733 = vmatpush2.msra.mxu0 0.0
        %2734 = vmatprep.subr.mxu0 0.0
        %2735 = vmatpush2.msra.mxu0 0.0
        %2736 = vmatprep.subr.mxu0 0.0
        %2737 = vmatpush2.msra.mxu0 0.0
        %2738 = vmatprep.subr.mxu0 0.0
        %2739 = vmatpush2.msra.mxu0 0.0
        %2740 = vmatprep.subr.mxu0 0.0
        %2741 = vmatpush2.msra.mxu0 0.0
        %2742 = vmatprep.subr.mxu0 0.0
        %2743 = vmatpush2.msra.mxu0 0.0
        %2744 = vmatprep.subr.mxu0 0.0
        %2745 = vmatpush2.msra.mxu0 0.0
        %2746 = vmatprep.subr.mxu0 0.0
        %2747 = vmatpush2.msra.mxu0 0.0
        %2748 = vmatprep.subr.mxu0 0.0
        %2749 = vmatpush2.msra.mxu0 0.0
        %2750 = vmatprep.subr.mxu0 0.0
        %2751 = vmatpush2.msra.mxu0 0.0
        %2752 = vmatprep.mubr.f32.mxu0 0.0
        %2753 = vmatmul.mubr.f32.gmra.mxu0 %v2663
        %v2754 = vpop.f32.mrf.mxu0
        %v2755 = vadd.f32 0.0, %v2754
        %v2756 = vpop.f32.mrf.mxu0
        %2757 = vmatprep.mubr.f32.mxu0 0.0
        %2758 = vmatmul.mubr.f32.gmra.mxu0 %v2668
        %v2759 = vpop.f32.mrf.mxu0
        %v2760 = vadd.f32 0.0, %v2759
        %v2761 = vpop.f32.mrf.mxu0
        %2762 = vdwg.mxu0
        %v2763 = vadd.f32 %v2585, %v2755
        %v2764 = vadd.f32 %v2586, %v2760
        %s2765 = scalar_lea.vmem %s3, 192
        %v2766 = vld [vmem:[%s2765] sm:$0xff]
        %v2767 = vld [vmem:[%s2765 + $0x8] sm:$0x1]
        %v2769 = vsel %vm632, %v2766, 0
        %v2772 = vsel %vm632, %v2767, 0
        %2774 = vmatprep.subr.mxu0 0.0
        %2775 = vmatpush1.msra.mxu0 0.0
        %2776 = vmatprep.subr.mxu0 0.0
        %2777 = vmatpush1.msra.mxu0 0.0
        %2778 = vmatprep.subr.mxu0 0.0
        %2779 = vmatpush1.msra.mxu0 0.0
        %2780 = vmatprep.subr.mxu0 0.0
        %2781 = vmatpush1.msra.mxu0 0.0
        %2782 = vmatprep.subr.mxu0 0.0
        %2783 = vmatpush1.msra.mxu0 0.0
        %2784 = vmatprep.subr.mxu0 0.0
        %2785 = vmatpush1.msra.mxu0 %v641
        %2786 = vmatprep.subr.mxu0 0.0
        %2787 = vmatpush1.msra.mxu0 %v628
        %2788 = vmatprep.subr.mxu0 0.0
        %2789 = vmatpush1.msra.mxu0 %v627
        %2790 = vmatprep.subr.mxu0 0.0
        %2791 = vmatpush1.msra.mxu0 %v626
        %2792 = vmatprep.subr.mxu0 0.0
        %2793 = vmatpush1.msra.mxu0 %v625
        %2794 = vmatprep.subr.mxu0 0.0
        %2795 = vmatpush1.msra.mxu0 %v624
        %2796 = vmatprep.subr.mxu0 0.0
        %2797 = vmatpush1.msra.mxu0 %v623
        %2798 = vmatprep.subr.mxu0 0.0
        %2799 = vmatpush1.msra.mxu0 %v622
        %2800 = vmatprep.subr.mxu0 0.0
        %2801 = vmatpush1.msra.mxu0 %v621
        %2802 = vmatprep.subr.mxu0 0.0
        %2803 = vmatpush1.msra.mxu0 %v620
        %2804 = vmatprep.subr.mxu0 0.0
        %2805 = vmatpush1.msra.mxu0 %v619
        %2806 = vmatprep.subr.mxu0 0.0
        %2807 = vmatpush2.msra.mxu0 0.0
        %2808 = vmatprep.subr.mxu0 0.0
        %2809 = vmatpush2.msra.mxu0 0.0
        %2810 = vmatprep.subr.mxu0 0.0
        %2811 = vmatpush2.msra.mxu0 0.0
        %2812 = vmatprep.subr.mxu0 0.0
        %2813 = vmatpush2.msra.mxu0 0.0
        %2814 = vmatprep.subr.mxu0 0.0
        %2815 = vmatpush2.msra.mxu0 0.0
        %2816 = vmatprep.subr.mxu0 0.0
        %2817 = vmatpush2.msra.mxu0 0.0
        %2818 = vmatprep.subr.mxu0 0.0
        %2819 = vmatpush2.msra.mxu0 0.0
        %2820 = vmatprep.subr.mxu0 0.0
        %2821 = vmatpush2.msra.mxu0 0.0
        %2822 = vmatprep.subr.mxu0 0.0
        %2823 = vmatpush2.msra.mxu0 0.0
        %2824 = vmatprep.subr.mxu0 0.0
        %2825 = vmatpush2.msra.mxu0 0.0
        %2826 = vmatprep.subr.mxu0 0.0
        %2827 = vmatpush2.msra.mxu0 0.0
        %2828 = vmatprep.subr.mxu0 0.0
        %2829 = vmatpush2.msra.mxu0 0.0
        %2830 = vmatprep.subr.mxu0 0.0
        %2831 = vmatpush2.msra.mxu0 0.0
        %2832 = vmatprep.subr.mxu0 0.0
        %2833 = vmatpush2.msra.mxu0 0.0
        %2834 = vmatprep.subr.mxu0 0.0
        %2835 = vmatpush2.msra.mxu0 0.0
        %2836 = vmatprep.subr.mxu0 0.0
        %2837 = vmatpush2.msra.mxu0 0.0
        %2838 = vmatprep.mubr.f32.mxu0 0.0
        %2839 = vmatmul.mubr.f32.gmra.mxu0 %v2769
        %v2840 = vpop.f32.mrf.mxu0
        %v2841 = vadd.f32 0.0, %v2840
        %v2842 = vpop.f32.mrf.mxu0
        %2843 = vmatprep.mubr.f32.mxu0 0.0
        %2844 = vmatmul.mubr.f32.gmra.mxu0 %v2772
        %v2845 = vpop.f32.mrf.mxu0
        %v2846 = vadd.f32 0.0, %v2845
        %v2847 = vpop.f32.mrf.mxu0
        %2848 = vdwg.mxu0
        %s2849 = scalar_lea.vmem %s4, 1536
        %v2850 = vld [vmem:[%s2849] sm:$0xff]
        %v2851 = vld [vmem:[%s2849 + $0x8] sm:$0xff]
        %v2852 = vld [vmem:[%s2849 + $0x10] sm:$0xff]
        %v2853 = vld [vmem:[%s2849 + $0x18] sm:$0xff]
        %v2854 = vld [vmem:[%s2849 + $0x20] sm:$0xff]
        %v2855 = vld [vmem:[%s2849 + $0x28] sm:$0xff]
        %v2856 = vld [vmem:[%s2849 + $0x30] sm:$0xff]
        %v2857 = vld [vmem:[%s2849 + $0x38] sm:$0xff]
        %v2858 = vld [vmem:[%s2849 + $0x40] sm:$0xff]
        %v2859 = vld [vmem:[%s2849 + $0x48] sm:$0xff]
        %v2860 = vld [vmem:[%s2849 + $0x50] sm:$0xff]
        %v2861 = vld [vmem:[%s2849 + $0x58] sm:$0xff]
        %v2862 = vld [vmem:[%s2849 + $0x60] sm:$0xff]
        %v2863 = vld [vmem:[%s2849 + $0x68] sm:$0xff]
        %v2864 = vld [vmem:[%s2849 + $0x70] sm:$0xff]
        %v2865 = vld [vmem:[%s2849 + $0x78] sm:$0xff]
        %2866 = vmatprep.subr.mxu0 0.0
        %2867 = vmatpush1.msra.mxu0 %v2865
        %2868 = vmatprep.subr.mxu0 0.0
        %2869 = vmatpush1.msra.mxu0 %v2864
        %2870 = vmatprep.subr.mxu0 0.0
        %2871 = vmatpush1.msra.mxu0 %v2863
        %2872 = vmatprep.subr.mxu0 0.0
        %2873 = vmatpush1.msra.mxu0 %v2862
        %2874 = vmatprep.subr.mxu0 0.0
        %2875 = vmatpush1.msra.mxu0 %v2861
        %2876 = vmatprep.subr.mxu0 0.0
        %2877 = vmatpush1.msra.mxu0 %v2860
        %2878 = vmatprep.subr.mxu0 0.0
        %2879 = vmatpush1.msra.mxu0 %v2859
        %2880 = vmatprep.subr.mxu0 0.0
        %2881 = vmatpush1.msra.mxu0 %v2858
        %2882 = vmatprep.subr.mxu0 0.0
        %2883 = vmatpush1.msra.mxu0 %v2857
        %2884 = vmatprep.subr.mxu0 0.0
        %2885 = vmatpush1.msra.mxu0 %v2856
        %2886 = vmatprep.subr.mxu0 0.0
        %2887 = vmatpush1.msra.mxu0 %v2855
        %2888 = vmatprep.subr.mxu0 0.0
        %2889 = vmatpush1.msra.mxu0 %v2854
        %2890 = vmatprep.subr.mxu0 0.0
        %2891 = vmatpush1.msra.mxu0 %v2853
        %2892 = vmatprep.subr.mxu0 0.0
        %2893 = vmatpush1.msra.mxu0 %v2852
        %2894 = vmatprep.subr.mxu0 0.0
        %2895 = vmatpush1.msra.mxu0 %v2851
        %2896 = vmatprep.subr.mxu0 0.0
        %2897 = vmatpush1.msra.mxu0 %v2850
        %2898 = vmatprep.subr.mxu0 0.0
        %2899 = vmatpush2.msra.mxu0 0.0
        %2900 = vmatprep.subr.mxu0 0.0
        %2901 = vmatpush2.msra.mxu0 0.0
        %2902 = vmatprep.subr.mxu0 0.0
        %2903 = vmatpush2.msra.mxu0 0.0
        %2904 = vmatprep.subr.mxu0 0.0
        %2905 = vmatpush2.msra.mxu0 0.0
        %2906 = vmatprep.subr.mxu0 0.0
        %2907 = vmatpush2.msra.mxu0 0.0
        %2908 = vmatprep.subr.mxu0 0.0
        %2909 = vmatpush2.msra.mxu0 0.0
        %2910 = vmatprep.subr.mxu0 0.0
        %2911 = vmatpush2.msra.mxu0 0.0
        %2912 = vmatprep.subr.mxu0 0.0
        %2913 = vmatpush2.msra.mxu0 0.0
        %2914 = vmatprep.subr.mxu0 0.0
        %2915 = vmatpush2.msra.mxu0 0.0
        %2916 = vmatprep.subr.mxu0 0.0
        %2917 = vmatpush2.msra.mxu0 0.0
        %2918 = vmatprep.subr.mxu0 0.0
        %2919 = vmatpush2.msra.mxu0 0.0
        %2920 = vmatprep.subr.mxu0 0.0
        %2921 = vmatpush2.msra.mxu0 0.0
        %2922 = vmatprep.subr.mxu0 0.0
        %2923 = vmatpush2.msra.mxu0 0.0
        %2924 = vmatprep.subr.mxu0 0.0
        %2925 = vmatpush2.msra.mxu0 0.0
        %2926 = vmatprep.subr.mxu0 0.0
        %2927 = vmatpush2.msra.mxu0 0.0
        %2928 = vmatprep.subr.mxu0 0.0
        %2929 = vmatpush2.msra.mxu0 0.0
        %2930 = vmatprep.mubr.f32.mxu0 0.0
        %2931 = vmatmul.mubr.f32.gmra.mxu0 %v2841
        %v2932 = vpop.f32.mrf.mxu0
        %v2933 = vadd.f32 0.0, %v2932
        %v2934 = vpop.f32.mrf.mxu0
        %2935 = vmatprep.mubr.f32.mxu0 0.0
        %2936 = vmatmul.mubr.f32.gmra.mxu0 %v2846
        %v2937 = vpop.f32.mrf.mxu0
        %v2938 = vadd.f32 0.0, %v2937
        %v2939 = vpop.f32.mrf.mxu0
        %2940 = vdwg.mxu0
        %v2941 = vadd.f32 %v2763, %v2933
        %v2942 = vadd.f32 %v2764, %v2938
        %s2943 = scalar_lea.vmem %s3, 208
        %v2944 = vld [vmem:[%s2943] sm:$0xff]
        %v2945 = vld [vmem:[%s2943 + $0x8] sm:$0x1]
        %v2947 = vsel %vm632, %v2944, 0
        %v2950 = vsel %vm632, %v2945, 0
        %2952 = vmatprep.subr.mxu0 0.0
        %2953 = vmatpush1.msra.mxu0 0.0
        %2954 = vmatprep.subr.mxu0 0.0
        %2955 = vmatpush1.msra.mxu0 0.0
        %2956 = vmatprep.subr.mxu0 0.0
        %2957 = vmatpush1.msra.mxu0 0.0
        %2958 = vmatprep.subr.mxu0 0.0
        %2959 = vmatpush1.msra.mxu0 0.0
        %2960 = vmatprep.subr.mxu0 0.0
        %2961 = vmatpush1.msra.mxu0 0.0
        %2962 = vmatprep.subr.mxu0 0.0
        %2963 = vmatpush1.msra.mxu0 %v641
        %2964 = vmatprep.subr.mxu0 0.0
        %2965 = vmatpush1.msra.mxu0 %v628
        %2966 = vmatprep.subr.mxu0 0.0
        %2967 = vmatpush1.msra.mxu0 %v627
        %2968 = vmatprep.subr.mxu0 0.0
        %2969 = vmatpush1.msra.mxu0 %v626
        %2970 = vmatprep.subr.mxu0 0.0
        %2971 = vmatpush1.msra.mxu0 %v625
        %2972 = vmatprep.subr.mxu0 0.0
        %2973 = vmatpush1.msra.mxu0 %v624
        %2974 = vmatprep.subr.mxu0 0.0
        %2975 = vmatpush1.msra.mxu0 %v623
        %2976 = vmatprep.subr.mxu0 0.0
        %2977 = vmatpush1.msra.mxu0 %v622
        %2978 = vmatprep.subr.mxu0 0.0
        %2979 = vmatpush1.msra.mxu0 %v621
        %2980 = vmatprep.subr.mxu0 0.0
        %2981 = vmatpush1.msra.mxu0 %v620
        %2982 = vmatprep.subr.mxu0 0.0
        %2983 = vmatpush1.msra.mxu0 %v619
        %2984 = vmatprep.subr.mxu0 0.0
        %2985 = vmatpush2.msra.mxu0 0.0
        %2986 = vmatprep.subr.mxu0 0.0
        %2987 = vmatpush2.msra.mxu0 0.0
        %2988 = vmatprep.subr.mxu0 0.0
        %2989 = vmatpush2.msra.mxu0 0.0
        %2990 = vmatprep.subr.mxu0 0.0
        %2991 = vmatpush2.msra.mxu0 0.0
        %2992 = vmatprep.subr.mxu0 0.0
        %2993 = vmatpush2.msra.mxu0 0.0
        %2994 = vmatprep.subr.mxu0 0.0
        %2995 = vmatpush2.msra.mxu0 0.0
        %2996 = vmatprep.subr.mxu0 0.0
        %2997 = vmatpush2.msra.mxu0 0.0
        %2998 = vmatprep.subr.mxu0 0.0
        %2999 = vmatpush2.msra.mxu0 0.0
        %3000 = vmatprep.subr.mxu0 0.0
        %3001 = vmatpush2.msra.mxu0 0.0
        %3002 = vmatprep.subr.mxu0 0.0
        %3003 = vmatpush2.msra.mxu0 0.0
        %3004 = vmatprep.subr.mxu0 0.0
        %3005 = vmatpush2.msra.mxu0 0.0
        %3006 = vmatprep.subr.mxu0 0.0
        %3007 = vmatpush2.msra.mxu0 0.0
        %3008 = vmatprep.subr.mxu0 0.0
        %3009 = vmatpush2.msra.mxu0 0.0
        %3010 = vmatprep.subr.mxu0 0.0
        %3011 = vmatpush2.msra.mxu0 0.0
        %3012 = vmatprep.subr.mxu0 0.0
        %3013 = vmatpush2.msra.mxu0 0.0
        %3014 = vmatprep.subr.mxu0 0.0
        %3015 = vmatpush2.msra.mxu0 0.0
        %3016 = vmatprep.mubr.f32.mxu0 0.0
        %3017 = vmatmul.mubr.f32.gmra.mxu0 %v2947
        %v3018 = vpop.f32.mrf.mxu0
        %v3019 = vadd.f32 0.0, %v3018
        %v3020 = vpop.f32.mrf.mxu0
        %3021 = vmatprep.mubr.f32.mxu0 0.0
        %3022 = vmatmul.mubr.f32.gmra.mxu0 %v2950
        %v3023 = vpop.f32.mrf.mxu0
        %v3024 = vadd.f32 0.0, %v3023
        %v3025 = vpop.f32.mrf.mxu0
        %3026 = vdwg.mxu0
        %s3027 = scalar_lea.vmem %s4, 1664
        %v3028 = vld [vmem:[%s3027] sm:$0xff]
        %v3029 = vld [vmem:[%s3027 + $0x8] sm:$0xff]
        %v3030 = vld [vmem:[%s3027 + $0x10] sm:$0xff]
        %v3031 = vld [vmem:[%s3027 + $0x18] sm:$0xff]
        %v3032 = vld [vmem:[%s3027 + $0x20] sm:$0xff]
        %v3033 = vld [vmem:[%s3027 + $0x28] sm:$0xff]
        %v3034 = vld [vmem:[%s3027 + $0x30] sm:$0xff]
        %v3035 = vld [vmem:[%s3027 + $0x38] sm:$0xff]
        %v3036 = vld [vmem:[%s3027 + $0x40] sm:$0xff]
        %v3037 = vld [vmem:[%s3027 + $0x48] sm:$0xff]
        %v3038 = vld [vmem:[%s3027 + $0x50] sm:$0xff]
        %v3039 = vld [vmem:[%s3027 + $0x58] sm:$0xff]
        %v3040 = vld [vmem:[%s3027 + $0x60] sm:$0xff]
        %v3041 = vld [vmem:[%s3027 + $0x68] sm:$0xff]
        %v3042 = vld [vmem:[%s3027 + $0x70] sm:$0xff]
        %v3043 = vld [vmem:[%s3027 + $0x78] sm:$0xff]
        %3044 = vmatprep.subr.mxu0 0.0
        %3045 = vmatpush1.msra.mxu0 %v3043
        %3046 = vmatprep.subr.mxu0 0.0
        %3047 = vmatpush1.msra.mxu0 %v3042
        %3048 = vmatprep.subr.mxu0 0.0
        %3049 = vmatpush1.msra.mxu0 %v3041
        %3050 = vmatprep.subr.mxu0 0.0
        %3051 = vmatpush1.msra.mxu0 %v3040
        %3052 = vmatprep.subr.mxu0 0.0
        %3053 = vmatpush1.msra.mxu0 %v3039
        %3054 = vmatprep.subr.mxu0 0.0
        %3055 = vmatpush1.msra.mxu0 %v3038
        %3056 = vmatprep.subr.mxu0 0.0
        %3057 = vmatpush1.msra.mxu0 %v3037
        %3058 = vmatprep.subr.mxu0 0.0
        %3059 = vmatpush1.msra.mxu0 %v3036
        %3060 = vmatprep.subr.mxu0 0.0
        %3061 = vmatpush1.msra.mxu0 %v3035
        %3062 = vmatprep.subr.mxu0 0.0
        %3063 = vmatpush1.msra.mxu0 %v3034
        %3064 = vmatprep.subr.mxu0 0.0
        %3065 = vmatpush1.msra.mxu0 %v3033
        %3066 = vmatprep.subr.mxu0 0.0
        %3067 = vmatpush1.msra.mxu0 %v3032
        %3068 = vmatprep.subr.mxu0 0.0
        %3069 = vmatpush1.msra.mxu0 %v3031
        %3070 = vmatprep.subr.mxu0 0.0
        %3071 = vmatpush1.msra.mxu0 %v3030
        %3072 = vmatprep.subr.mxu0 0.0
        %3073 = vmatpush1.msra.mxu0 %v3029
        %3074 = vmatprep.subr.mxu0 0.0
        %3075 = vmatpush1.msra.mxu0 %v3028
        %3076 = vmatprep.subr.mxu0 0.0
        %3077 = vmatpush2.msra.mxu0 0.0
        %3078 = vmatprep.subr.mxu0 0.0
        %3079 = vmatpush2.msra.mxu0 0.0
        %3080 = vmatprep.subr.mxu0 0.0
        %3081 = vmatpush2.msra.mxu0 0.0
        %3082 = vmatprep.subr.mxu0 0.0
        %3083 = vmatpush2.msra.mxu0 0.0
        %3084 = vmatprep.subr.mxu0 0.0
        %3085 = vmatpush2.msra.mxu0 0.0
        %3086 = vmatprep.subr.mxu0 0.0
        %3087 = vmatpush2.msra.mxu0 0.0
        %3088 = vmatprep.subr.mxu0 0.0
        %3089 = vmatpush2.msra.mxu0 0.0
        %3090 = vmatprep.subr.mxu0 0.0
        %3091 = vmatpush2.msra.mxu0 0.0
        %3092 = vmatprep.subr.mxu0 0.0
        %3093 = vmatpush2.msra.mxu0 0.0
        %3094 = vmatprep.subr.mxu0 0.0
        %3095 = vmatpush2.msra.mxu0 0.0
        %3096 = vmatprep.subr.mxu0 0.0
        %3097 = vmatpush2.msra.mxu0 0.0
        %3098 = vmatprep.subr.mxu0 0.0
        %3099 = vmatpush2.msra.mxu0 0.0
        %3100 = vmatprep.subr.mxu0 0.0
        %3101 = vmatpush2.msra.mxu0 0.0
        %3102 = vmatprep.subr.mxu0 0.0
        %3103 = vmatpush2.msra.mxu0 0.0
        %3104 = vmatprep.subr.mxu0 0.0
        %3105 = vmatpush2.msra.mxu0 0.0
        %3106 = vmatprep.subr.mxu0 0.0
        %3107 = vmatpush2.msra.mxu0 0.0
        %3108 = vmatprep.mubr.f32.mxu0 0.0
        %3109 = vmatmul.mubr.f32.gmra.mxu0 %v3019
        %v3110 = vpop.f32.mrf.mxu0
        %v3111 = vadd.f32 0.0, %v3110
        %v3112 = vpop.f32.mrf.mxu0
        %3113 = vmatprep.mubr.f32.mxu0 0.0
        %3114 = vmatmul.mubr.f32.gmra.mxu0 %v3024
        %v3115 = vpop.f32.mrf.mxu0
        %v3116 = vadd.f32 0.0, %v3115
        %v3117 = vpop.f32.mrf.mxu0
        %3118 = vdwg.mxu0
        %v3119 = vadd.f32 %v2941, %v3111
        %v3120 = vadd.f32 %v2942, %v3116
        %s3121 = scalar_lea.vmem %s3, 224
        %v3122 = vld [vmem:[%s3121] sm:$0xff]
        %v3123 = vld [vmem:[%s3121 + $0x8] sm:$0x1]
        %v3125 = vsel %vm632, %v3122, 0
        %v3128 = vsel %vm632, %v3123, 0
        %3130 = vmatprep.subr.mxu0 0.0
        %3131 = vmatpush1.msra.mxu0 0.0
        %3132 = vmatprep.subr.mxu0 0.0
        %3133 = vmatpush1.msra.mxu0 0.0
        %3134 = vmatprep.subr.mxu0 0.0
        %3135 = vmatpush1.msra.mxu0 0.0
        %3136 = vmatprep.subr.mxu0 0.0
        %3137 = vmatpush1.msra.mxu0 0.0
        %3138 = vmatprep.subr.mxu0 0.0
        %3139 = vmatpush1.msra.mxu0 0.0
        %3140 = vmatprep.subr.mxu0 0.0
        %3141 = vmatpush1.msra.mxu0 %v641
        %3142 = vmatprep.subr.mxu0 0.0
        %3143 = vmatpush1.msra.mxu0 %v628
        %3144 = vmatprep.subr.mxu0 0.0
        %3145 = vmatpush1.msra.mxu0 %v627
        %3146 = vmatprep.subr.mxu0 0.0
        %3147 = vmatpush1.msra.mxu0 %v626
        %3148 = vmatprep.subr.mxu0 0.0
        %3149 = vmatpush1.msra.mxu0 %v625
        %3150 = vmatprep.subr.mxu0 0.0
        %3151 = vmatpush1.msra.mxu0 %v624
        %3152 = vmatprep.subr.mxu0 0.0
        %3153 = vmatpush1.msra.mxu0 %v623
        %3154 = vmatprep.subr.mxu0 0.0
        %3155 = vmatpush1.msra.mxu0 %v622
        %3156 = vmatprep.subr.mxu0 0.0
        %3157 = vmatpush1.msra.mxu0 %v621
        %3158 = vmatprep.subr.mxu0 0.0
        %3159 = vmatpush1.msra.mxu0 %v620
        %3160 = vmatprep.subr.mxu0 0.0
        %3161 = vmatpush1.msra.mxu0 %v619
        %3162 = vmatprep.subr.mxu0 0.0
        %3163 = vmatpush2.msra.mxu0 0.0
        %3164 = vmatprep.subr.mxu0 0.0
        %3165 = vmatpush2.msra.mxu0 0.0
        %3166 = vmatprep.subr.mxu0 0.0
        %3167 = vmatpush2.msra.mxu0 0.0
        %3168 = vmatprep.subr.mxu0 0.0
        %3169 = vmatpush2.msra.mxu0 0.0
        %3170 = vmatprep.subr.mxu0 0.0
        %3171 = vmatpush2.msra.mxu0 0.0
        %3172 = vmatprep.subr.mxu0 0.0
        %3173 = vmatpush2.msra.mxu0 0.0
        %3174 = vmatprep.subr.mxu0 0.0
        %3175 = vmatpush2.msra.mxu0 0.0
        %3176 = vmatprep.subr.mxu0 0.0
        %3177 = vmatpush2.msra.mxu0 0.0
        %3178 = vmatprep.subr.mxu0 0.0
        %3179 = vmatpush2.msra.mxu0 0.0
        %3180 = vmatprep.subr.mxu0 0.0
        %3181 = vmatpush2.msra.mxu0 0.0
        %3182 = vmatprep.subr.mxu0 0.0
        %3183 = vmatpush2.msra.mxu0 0.0
        %3184 = vmatprep.subr.mxu0 0.0
        %3185 = vmatpush2.msra.mxu0 0.0
        %3186 = vmatprep.subr.mxu0 0.0
        %3187 = vmatpush2.msra.mxu0 0.0
        %3188 = vmatprep.subr.mxu0 0.0
        %3189 = vmatpush2.msra.mxu0 0.0
        %3190 = vmatprep.subr.mxu0 0.0
        %3191 = vmatpush2.msra.mxu0 0.0
        %3192 = vmatprep.subr.mxu0 0.0
        %3193 = vmatpush2.msra.mxu0 0.0
        %3194 = vmatprep.mubr.f32.mxu0 0.0
        %3195 = vmatmul.mubr.f32.gmra.mxu0 %v3125
        %v3196 = vpop.f32.mrf.mxu0
        %v3197 = vadd.f32 0.0, %v3196
        %v3198 = vpop.f32.mrf.mxu0
        %3199 = vmatprep.mubr.f32.mxu0 0.0
        %3200 = vmatmul.mubr.f32.gmra.mxu0 %v3128
        %v3201 = vpop.f32.mrf.mxu0
        %v3202 = vadd.f32 0.0, %v3201
        %v3203 = vpop.f32.mrf.mxu0
        %3204 = vdwg.mxu0
        %s3205 = scalar_lea.vmem %s4, 1792
        %v3206 = vld [vmem:[%s3205] sm:$0xff]
        %v3207 = vld [vmem:[%s3205 + $0x8] sm:$0xff]
        %v3208 = vld [vmem:[%s3205 + $0x10] sm:$0xff]
        %v3209 = vld [vmem:[%s3205 + $0x18] sm:$0xff]
        %v3210 = vld [vmem:[%s3205 + $0x20] sm:$0xff]
        %v3211 = vld [vmem:[%s3205 + $0x28] sm:$0xff]
        %v3212 = vld [vmem:[%s3205 + $0x30] sm:$0xff]
        %v3213 = vld [vmem:[%s3205 + $0x38] sm:$0xff]
        %v3214 = vld [vmem:[%s3205 + $0x40] sm:$0xff]
        %v3215 = vld [vmem:[%s3205 + $0x48] sm:$0xff]
        %v3216 = vld [vmem:[%s3205 + $0x50] sm:$0xff]
        %v3217 = vld [vmem:[%s3205 + $0x58] sm:$0xff]
        %v3218 = vld [vmem:[%s3205 + $0x60] sm:$0xff]
        %v3219 = vld [vmem:[%s3205 + $0x68] sm:$0xff]
        %v3220 = vld [vmem:[%s3205 + $0x70] sm:$0xff]
        %v3221 = vld [vmem:[%s3205 + $0x78] sm:$0xff]
        %3222 = vmatprep.subr.mxu0 0.0
        %3223 = vmatpush1.msra.mxu0 %v3221
        %3224 = vmatprep.subr.mxu0 0.0
        %3225 = vmatpush1.msra.mxu0 %v3220
        %3226 = vmatprep.subr.mxu0 0.0
        %3227 = vmatpush1.msra.mxu0 %v3219
        %3228 = vmatprep.subr.mxu0 0.0
        %3229 = vmatpush1.msra.mxu0 %v3218
        %3230 = vmatprep.subr.mxu0 0.0
        %3231 = vmatpush1.msra.mxu0 %v3217
        %3232 = vmatprep.subr.mxu0 0.0
        %3233 = vmatpush1.msra.mxu0 %v3216
        %3234 = vmatprep.subr.mxu0 0.0
        %3235 = vmatpush1.msra.mxu0 %v3215
        %3236 = vmatprep.subr.mxu0 0.0
        %3237 = vmatpush1.msra.mxu0 %v3214
        %3238 = vmatprep.subr.mxu0 0.0
        %3239 = vmatpush1.msra.mxu0 %v3213
        %3240 = vmatprep.subr.mxu0 0.0
        %3241 = vmatpush1.msra.mxu0 %v3212
        %3242 = vmatprep.subr.mxu0 0.0
        %3243 = vmatpush1.msra.mxu0 %v3211
        %3244 = vmatprep.subr.mxu0 0.0
        %3245 = vmatpush1.msra.mxu0 %v3210
        %3246 = vmatprep.subr.mxu0 0.0
        %3247 = vmatpush1.msra.mxu0 %v3209
        %3248 = vmatprep.subr.mxu0 0.0
        %3249 = vmatpush1.msra.mxu0 %v3208
        %3250 = vmatprep.subr.mxu0 0.0
        %3251 = vmatpush1.msra.mxu0 %v3207
        %3252 = vmatprep.subr.mxu0 0.0
        %3253 = vmatpush1.msra.mxu0 %v3206
        %3254 = vmatprep.subr.mxu0 0.0
        %3255 = vmatpush2.msra.mxu0 0.0
        %3256 = vmatprep.subr.mxu0 0.0
        %3257 = vmatpush2.msra.mxu0 0.0
        %3258 = vmatprep.subr.mxu0 0.0
        %3259 = vmatpush2.msra.mxu0 0.0
        %3260 = vmatprep.subr.mxu0 0.0
        %3261 = vmatpush2.msra.mxu0 0.0
        %3262 = vmatprep.subr.mxu0 0.0
        %3263 = vmatpush2.msra.mxu0 0.0
        %3264 = vmatprep.subr.mxu0 0.0
        %3265 = vmatpush2.msra.mxu0 0.0
        %3266 = vmatprep.subr.mxu0 0.0
        %3267 = vmatpush2.msra.mxu0 0.0
        %3268 = vmatprep.subr.mxu0 0.0
        %3269 = vmatpush2.msra.mxu0 0.0
        %3270 = vmatprep.subr.mxu0 0.0
        %3271 = vmatpush2.msra.mxu0 0.0
        %3272 = vmatprep.subr.mxu0 0.0
        %3273 = vmatpush2.msra.mxu0 0.0
        %3274 = vmatprep.subr.mxu0 0.0
        %3275 = vmatpush2.msra.mxu0 0.0
        %3276 = vmatprep.subr.mxu0 0.0
        %3277 = vmatpush2.msra.mxu0 0.0
        %3278 = vmatprep.subr.mxu0 0.0
        %3279 = vmatpush2.msra.mxu0 0.0
        %3280 = vmatprep.subr.mxu0 0.0
        %3281 = vmatpush2.msra.mxu0 0.0
        %3282 = vmatprep.subr.mxu0 0.0
        %3283 = vmatpush2.msra.mxu0 0.0
        %3284 = vmatprep.subr.mxu0 0.0
        %3285 = vmatpush2.msra.mxu0 0.0
        %3286 = vmatprep.mubr.f32.mxu0 0.0
        %3287 = vmatmul.mubr.f32.gmra.mxu0 %v3197
        %v3288 = vpop.f32.mrf.mxu0
        %v3289 = vadd.f32 0.0, %v3288
        %v3290 = vpop.f32.mrf.mxu0
        %3291 = vmatprep.mubr.f32.mxu0 0.0
        %3292 = vmatmul.mubr.f32.gmra.mxu0 %v3202
        %v3293 = vpop.f32.mrf.mxu0
        %v3294 = vadd.f32 0.0, %v3293
        %v3295 = vpop.f32.mrf.mxu0
        %3296 = vdwg.mxu0
        %v3297 = vadd.f32 %v3119, %v3289
        %v3298 = vadd.f32 %v3120, %v3294
        %s3299 = scalar_lea.vmem %s3, 240
        %v3300 = vld [vmem:[%s3299] sm:$0xff]
        %v3301 = vld [vmem:[%s3299 + $0x8] sm:$0x1]
        %v3303 = vsel %vm632, %v3300, 0
        %v3306 = vsel %vm632, %v3301, 0
        %3308 = vmatprep.subr.mxu0 0.0
        %3309 = vmatpush1.msra.mxu0 0.0
        %3310 = vmatprep.subr.mxu0 0.0
        %3311 = vmatpush1.msra.mxu0 0.0
        %3312 = vmatprep.subr.mxu0 0.0
        %3313 = vmatpush1.msra.mxu0 0.0
        %3314 = vmatprep.subr.mxu0 0.0
        %3315 = vmatpush1.msra.mxu0 0.0
        %3316 = vmatprep.subr.mxu0 0.0
        %3317 = vmatpush1.msra.mxu0 0.0
        %3318 = vmatprep.subr.mxu0 0.0
        %3319 = vmatpush1.msra.mxu0 %v641
        %3320 = vmatprep.subr.mxu0 0.0
        %3321 = vmatpush1.msra.mxu0 %v628
        %3322 = vmatprep.subr.mxu0 0.0
        %3323 = vmatpush1.msra.mxu0 %v627
        %3324 = vmatprep.subr.mxu0 0.0
        %3325 = vmatpush1.msra.mxu0 %v626
        %3326 = vmatprep.subr.mxu0 0.0
        %3327 = vmatpush1.msra.mxu0 %v625
        %3328 = vmatprep.subr.mxu0 0.0
        %3329 = vmatpush1.msra.mxu0 %v624
        %3330 = vmatprep.subr.mxu0 0.0
        %3331 = vmatpush1.msra.mxu0 %v623
        %3332 = vmatprep.subr.mxu0 0.0
        %3333 = vmatpush1.msra.mxu0 %v622
        %3334 = vmatprep.subr.mxu0 0.0
        %3335 = vmatpush1.msra.mxu0 %v621
        %3336 = vmatprep.subr.mxu0 0.0
        %3337 = vmatpush1.msra.mxu0 %v620
        %3338 = vmatprep.subr.mxu0 0.0
        %3339 = vmatpush1.msra.mxu0 %v619
        %3340 = vmatprep.subr.mxu0 0.0
        %3341 = vmatpush2.msra.mxu0 0.0
        %3342 = vmatprep.subr.mxu0 0.0
        %3343 = vmatpush2.msra.mxu0 0.0
        %3344 = vmatprep.subr.mxu0 0.0
        %3345 = vmatpush2.msra.mxu0 0.0
        %3346 = vmatprep.subr.mxu0 0.0
        %3347 = vmatpush2.msra.mxu0 0.0
        %3348 = vmatprep.subr.mxu0 0.0
        %3349 = vmatpush2.msra.mxu0 0.0
        %3350 = vmatprep.subr.mxu0 0.0
        %3351 = vmatpush2.msra.mxu0 0.0
        %3352 = vmatprep.subr.mxu0 0.0
        %3353 = vmatpush2.msra.mxu0 0.0
        %3354 = vmatprep.subr.mxu0 0.0
        %3355 = vmatpush2.msra.mxu0 0.0
        %3356 = vmatprep.subr.mxu0 0.0
        %3357 = vmatpush2.msra.mxu0 0.0
        %3358 = vmatprep.subr.mxu0 0.0
        %3359 = vmatpush2.msra.mxu0 0.0
        %3360 = vmatprep.subr.mxu0 0.0
        %3361 = vmatpush2.msra.mxu0 0.0
        %3362 = vmatprep.subr.mxu0 0.0
        %3363 = vmatpush2.msra.mxu0 0.0
        %3364 = vmatprep.subr.mxu0 0.0
        %3365 = vmatpush2.msra.mxu0 0.0
        %3366 = vmatprep.subr.mxu0 0.0
        %3367 = vmatpush2.msra.mxu0 0.0
        %3368 = vmatprep.subr.mxu0 0.0
        %3369 = vmatpush2.msra.mxu0 0.0
        %3370 = vmatprep.subr.mxu0 0.0
        %3371 = vmatpush2.msra.mxu0 0.0
        %3372 = vmatprep.mubr.f32.mxu0 0.0
        %3373 = vmatmul.mubr.f32.gmra.mxu0 %v3303
        %v3374 = vpop.f32.mrf.mxu0
        %v3375 = vadd.f32 0.0, %v3374
        %v3376 = vpop.f32.mrf.mxu0
        %3377 = vmatprep.mubr.f32.mxu0 0.0
        %3378 = vmatmul.mubr.f32.gmra.mxu0 %v3306
        %v3379 = vpop.f32.mrf.mxu0
        %v3380 = vadd.f32 0.0, %v3379
        %v3381 = vpop.f32.mrf.mxu0
        %3382 = vdwg.mxu0
        %s3383 = scalar_lea.vmem %s4, 1920
        %v3384 = vld [vmem:[%s3383] sm:$0xff]
        %v3385 = vld [vmem:[%s3383 + $0x8] sm:$0xff]
        %v3386 = vld [vmem:[%s3383 + $0x10] sm:$0xff]
        %v3387 = vld [vmem:[%s3383 + $0x18] sm:$0xff]
        %v3388 = vld [vmem:[%s3383 + $0x20] sm:$0xff]
        %v3389 = vld [vmem:[%s3383 + $0x28] sm:$0xff]
        %v3390 = vld [vmem:[%s3383 + $0x30] sm:$0xff]
        %v3391 = vld [vmem:[%s3383 + $0x38] sm:$0xff]
        %v3392 = vld [vmem:[%s3383 + $0x40] sm:$0xff]
        %v3393 = vld [vmem:[%s3383 + $0x48] sm:$0xff]
        %v3394 = vld [vmem:[%s3383 + $0x50] sm:$0xff]
        %v3395 = vld [vmem:[%s3383 + $0x58] sm:$0xff]
        %v3396 = vld [vmem:[%s3383 + $0x60] sm:$0xff]
        %v3397 = vld [vmem:[%s3383 + $0x68] sm:$0xff]
        %v3398 = vld [vmem:[%s3383 + $0x70] sm:$0xff]
        %v3399 = vld [vmem:[%s3383 + $0x78] sm:$0xff]
        %3400 = vmatprep.subr.mxu0 0.0
        %3401 = vmatpush1.msra.mxu0 %v3399
        %3402 = vmatprep.subr.mxu0 0.0
        %3403 = vmatpush1.msra.mxu0 %v3398
        %3404 = vmatprep.subr.mxu0 0.0
        %3405 = vmatpush1.msra.mxu0 %v3397
        %3406 = vmatprep.subr.mxu0 0.0
        %3407 = vmatpush1.msra.mxu0 %v3396
        %3408 = vmatprep.subr.mxu0 0.0
        %3409 = vmatpush1.msra.mxu0 %v3395
        %3410 = vmatprep.subr.mxu0 0.0
        %3411 = vmatpush1.msra.mxu0 %v3394
        %3412 = vmatprep.subr.mxu0 0.0
        %3413 = vmatpush1.msra.mxu0 %v3393
        %3414 = vmatprep.subr.mxu0 0.0
        %3415 = vmatpush1.msra.mxu0 %v3392
        %3416 = vmatprep.subr.mxu0 0.0
        %3417 = vmatpush1.msra.mxu0 %v3391
        %3418 = vmatprep.subr.mxu0 0.0
        %3419 = vmatpush1.msra.mxu0 %v3390
        %3420 = vmatprep.subr.mxu0 0.0
        %3421 = vmatpush1.msra.mxu0 %v3389
        %3422 = vmatprep.subr.mxu0 0.0
        %3423 = vmatpush1.msra.mxu0 %v3388
        %3424 = vmatprep.subr.mxu0 0.0
        %3425 = vmatpush1.msra.mxu0 %v3387
        %3426 = vmatprep.subr.mxu0 0.0
        %3427 = vmatpush1.msra.mxu0 %v3386
        %3428 = vmatprep.subr.mxu0 0.0
        %3429 = vmatpush1.msra.mxu0 %v3385
        %3430 = vmatprep.subr.mxu0 0.0
        %3431 = vmatpush1.msra.mxu0 %v3384
        %3432 = vmatprep.subr.mxu0 0.0
        %3433 = vmatpush2.msra.mxu0 0.0
        %3434 = vmatprep.subr.mxu0 0.0
        %3435 = vmatpush2.msra.mxu0 0.0
        %3436 = vmatprep.subr.mxu0 0.0
        %3437 = vmatpush2.msra.mxu0 0.0
        %3438 = vmatprep.subr.mxu0 0.0
        %3439 = vmatpush2.msra.mxu0 0.0
        %3440 = vmatprep.subr.mxu0 0.0
        %3441 = vmatpush2.msra.mxu0 0.0
        %3442 = vmatprep.subr.mxu0 0.0
        %3443 = vmatpush2.msra.mxu0 0.0
        %3444 = vmatprep.subr.mxu0 0.0
        %3445 = vmatpush2.msra.mxu0 0.0
        %3446 = vmatprep.subr.mxu0 0.0
        %3447 = vmatpush2.msra.mxu0 0.0
        %3448 = vmatprep.subr.mxu0 0.0
        %3449 = vmatpush2.msra.mxu0 0.0
        %3450 = vmatprep.subr.mxu0 0.0
        %3451 = vmatpush2.msra.mxu0 0.0
        %3452 = vmatprep.subr.mxu0 0.0
        %3453 = vmatpush2.msra.mxu0 0.0
        %3454 = vmatprep.subr.mxu0 0.0
        %3455 = vmatpush2.msra.mxu0 0.0
        %3456 = vmatprep.subr.mxu0 0.0
        %3457 = vmatpush2.msra.mxu0 0.0
        %3458 = vmatprep.subr.mxu0 0.0
        %3459 = vmatpush2.msra.mxu0 0.0
        %3460 = vmatprep.subr.mxu0 0.0
        %3461 = vmatpush2.msra.mxu0 0.0
        %3462 = vmatprep.subr.mxu0 0.0
        %3463 = vmatpush2.msra.mxu0 0.0
        %3464 = vmatprep.mubr.f32.mxu0 0.0
        %3465 = vmatmul.mubr.f32.gmra.mxu0 %v3375
        %v3466 = vpop.f32.mrf.mxu0
        %v3467 = vadd.f32 0.0, %v3466
        %v3468 = vpop.f32.mrf.mxu0
        %3469 = vmatprep.mubr.f32.mxu0 0.0
        %3470 = vmatmul.mubr.f32.gmra.mxu0 %v3380
        %v3471 = vpop.f32.mrf.mxu0
        %v3472 = vadd.f32 0.0, %v3471
        %v3473 = vpop.f32.mrf.mxu0
        %3474 = vdwg.mxu0
        %v3475 = vadd.f32 %v3297, %v3467
        %v3476 = vadd.f32 %v3298, %v3472
        %v3477 = vld [vmem:[%s5] sm:$0x1]
        %v3479 = vlaneseq
        %v3480 = vshrl.u32 %v3479, 7
        %v3481 = vsub.s32 0, %v3480
        %v3482 = vrot.slane %v3477, %v3481
        %v3484 = vadd.f32 %v3475, %v3482
        %v3485 = vadd.f32 %v3476, %v3482
        %v3486 = vmax.f32 %v3484, 0.0
        %v3487 = vmax.f32 %v3485, 0.0
        %v3488 = vld [vmem:[%s6] sm:$0x1]
        %vm3489 = vcmask 72704
        %v3491 = vsel %vm3489, %v3488, 0
        %v3494 = vsel %vm639, %v3487, 0
        %3496 = vmatprep.subr.mxu0 0.0
        %3497 = vmatpush1.msra.mxu0 0.0
        %3498 = vmatprep.subr.mxu0 0.0
        %3499 = vmatpush1.msra.mxu0 0.0
        %3500 = vmatprep.subr.mxu0 0.0
        %3501 = vmatpush1.msra.mxu0 0.0
        %3502 = vmatprep.subr.mxu0 0.0
        %3503 = vmatpush1.msra.mxu0 0.0
        %3504 = vmatprep.subr.mxu0 0.0
        %3505 = vmatpush1.msra.mxu0 0.0
        %3506 = vmatprep.subr.mxu0 0.0
        %3507 = vmatpush1.msra.mxu0 0.0
        %3508 = vmatprep.subr.mxu0 0.0
        %3509 = vmatpush1.msra.mxu0 0.0
        %3510 = vmatprep.subr.mxu0 0.0
        %3511 = vmatpush1.msra.mxu0 0.0
        %3512 = vmatprep.subr.mxu0 0.0
        %3513 = vmatpush1.msra.mxu0 0.0
        %3514 = vmatprep.subr.mxu0 0.0
        %3515 = vmatpush1.msra.mxu0 0.0
        %3516 = vmatprep.subr.mxu0 0.0
        %3517 = vmatpush1.msra.mxu0 0.0
        %3518 = vmatprep.subr.mxu0 0.0
        %3519 = vmatpush1.msra.mxu0 0.0
        %3520 = vmatprep.subr.mxu0 0.0
        %3521 = vmatpush1.msra.mxu0 0.0
        %3522 = vmatprep.subr.mxu0 0.0
        %3523 = vmatpush1.msra.mxu0 0.0
        %3524 = vmatprep.subr.mxu0 0.0
        %3525 = vmatpush1.msra.mxu0 %v3494
        %3526 = vmatprep.subr.mxu0 0.0
        %3527 = vmatpush1.msra.mxu0 %v3486
        %3528 = vmatprep.subr.mxu0 0.0
        %3529 = vmatpush2.msra.mxu0 0.0
        %3530 = vmatprep.subr.mxu0 0.0
        %3531 = vmatpush2.msra.mxu0 0.0
        %3532 = vmatprep.subr.mxu0 0.0
        %3533 = vmatpush2.msra.mxu0 0.0
        %3534 = vmatprep.subr.mxu0 0.0
        %3535 = vmatpush2.msra.mxu0 0.0
        %3536 = vmatprep.subr.mxu0 0.0
        %3537 = vmatpush2.msra.mxu0 0.0
        %3538 = vmatprep.subr.mxu0 0.0
        %3539 = vmatpush2.msra.mxu0 0.0
        %3540 = vmatprep.subr.mxu0 0.0
        %3541 = vmatpush2.msra.mxu0 0.0
        %3542 = vmatprep.subr.mxu0 0.0
        %3543 = vmatpush2.msra.mxu0 0.0
        %3544 = vmatprep.subr.mxu0 0.0
        %3545 = vmatpush2.msra.mxu0 0.0
        %3546 = vmatprep.subr.mxu0 0.0
        %3547 = vmatpush2.msra.mxu0 0.0
        %3548 = vmatprep.subr.mxu0 0.0
        %3549 = vmatpush2.msra.mxu0 0.0
        %3550 = vmatprep.subr.mxu0 0.0
        %3551 = vmatpush2.msra.mxu0 0.0
        %3552 = vmatprep.subr.mxu0 0.0
        %3553 = vmatpush2.msra.mxu0 0.0
        %3554 = vmatprep.subr.mxu0 0.0
        %3555 = vmatpush2.msra.mxu0 0.0
        %3556 = vmatprep.subr.mxu0 0.0
        %3557 = vmatpush2.msra.mxu0 0.0
        %3558 = vmatprep.subr.mxu0 0.0
        %3559 = vmatpush2.msra.mxu0 0.0
        %3560 = vmatprep.mubr.f32.mxu0 0.0
        %3561 = vmatmul.mubr.f32.gmra.mxu0 %v3491
        %v3562 = vpop.f32.mrf.mxu0
        %v3563 = vadd.f32 0.0, %v3562
        %v3564 = vpop.f32.mrf.mxu0
        %3565 = vdwg.mxu0
        %v3566 = vld [vmem:[%s7] sm:$0xff]
        %v3567 = vld [vmem:[%s7 + $0x8] sm:$0xff]
        %v3568 = vld [vmem:[%s7 + $0x10] sm:$0xff]
        %v3569 = vld [vmem:[%s7 + $0x18] sm:$0xff]
        %v3570 = vld [vmem:[%s7 + $0x20] sm:$0xff]
        %v3571 = vld [vmem:[%s7 + $0x28] sm:$0xff]
        %v3572 = vld [vmem:[%s7 + $0x30] sm:$0xff]
        %v3573 = vld [vmem:[%s7 + $0x38] sm:$0xff]
        %v3574 = vld [vmem:[%s7 + $0x40] sm:$0xff]
        %v3575 = vld [vmem:[%s7 + $0x48] sm:$0xff]
        %v3576 = vld [vmem:[%s7 + $0x50] sm:$0xff]
        %v3577 = vld [vmem:[%s7 + $0x58] sm:$0xff]
        %v3578 = vld [vmem:[%s7 + $0x60] sm:$0xff]
        %v3579 = vld [vmem:[%s7 + $0x68] sm:$0xff]
        %v3580 = vld [vmem:[%s7 + $0x70] sm:$0xff]
        %v3581 = vld [vmem:[%s7 + $0x78] sm:$0xff]
        %s3582 = scalar_lea.vmem %s6, 1
        %v3583 = vld [vmem:[%s3582] sm:$0x1]
        %v3585 = vsel %vm3489, %v3583, 0
        %3587 = vmatprep.subr.mxu0 0.0
        %3588 = vmatpush1.msra.mxu0 0.0
        %3589 = vmatprep.subr.mxu0 0.0
        %3590 = vmatpush1.msra.mxu0 0.0
        %3591 = vmatprep.subr.mxu0 0.0
        %3592 = vmatpush1.msra.mxu0 0.0
        %3593 = vmatprep.subr.mxu0 0.0
        %3594 = vmatpush1.msra.mxu0 0.0
        %3595 = vmatprep.subr.mxu0 0.0
        %3596 = vmatpush1.msra.mxu0 0.0
        %3597 = vmatprep.subr.mxu0 0.0
        %3598 = vmatpush1.msra.mxu0 0.0
        %3599 = vmatprep.subr.mxu0 0.0
        %3600 = vmatpush1.msra.mxu0 0.0
        %3601 = vmatprep.subr.mxu0 0.0
        %3602 = vmatpush1.msra.mxu0 0.0
        %3603 = vmatprep.subr.mxu0 0.0
        %3604 = vmatpush1.msra.mxu0 0.0
        %3605 = vmatprep.subr.mxu0 0.0
        %3606 = vmatpush1.msra.mxu0 0.0
        %3607 = vmatprep.subr.mxu0 0.0
        %3608 = vmatpush1.msra.mxu0 0.0
        %3609 = vmatprep.subr.mxu0 0.0
        %3610 = vmatpush1.msra.mxu0 0.0
        %3611 = vmatprep.subr.mxu0 0.0
        %3612 = vmatpush1.msra.mxu0 0.0
        %3613 = vmatprep.subr.mxu0 0.0
        %3614 = vmatpush1.msra.mxu0 0.0
        %3615 = vmatprep.subr.mxu0 0.0
        %3616 = vmatpush1.msra.mxu0 %v3494
        %3617 = vmatprep.subr.mxu0 0.0
        %3618 = vmatpush1.msra.mxu0 %v3486
        %3619 = vmatprep.subr.mxu0 0.0
        %3620 = vmatpush2.msra.mxu0 0.0
        %3621 = vmatprep.subr.mxu0 0.0
        %3622 = vmatpush2.msra.mxu0 0.0
        %3623 = vmatprep.subr.mxu0 0.0
        %3624 = vmatpush2.msra.mxu0 0.0
        %3625 = vmatprep.subr.mxu0 0.0
        %3626 = vmatpush2.msra.mxu0 0.0
        %3627 = vmatprep.subr.mxu0 0.0
        %3628 = vmatpush2.msra.mxu0 0.0
        %3629 = vmatprep.subr.mxu0 0.0
        %3630 = vmatpush2.msra.mxu0 0.0
        %3631 = vmatprep.subr.mxu0 0.0
        %3632 = vmatpush2.msra.mxu0 0.0
        %3633 = vmatprep.subr.mxu0 0.0
        %3634 = vmatpush2.msra.mxu0 0.0
        %3635 = vmatprep.subr.mxu0 0.0
        %3636 = vmatpush2.msra.mxu0 0.0
        %3637 = vmatprep.subr.mxu0 0.0
        %3638 = vmatpush2.msra.mxu0 0.0
        %3639 = vmatprep.subr.mxu0 0.0
        %3640 = vmatpush2.msra.mxu0 0.0
        %3641 = vmatprep.subr.mxu0 0.0
        %3642 = vmatpush2.msra.mxu0 0.0
        %3643 = vmatprep.subr.mxu0 0.0
        %3644 = vmatpush2.msra.mxu0 0.0
        %3645 = vmatprep.subr.mxu0 0.0
        %3646 = vmatpush2.msra.mxu0 0.0
        %3647 = vmatprep.subr.mxu0 0.0
        %3648 = vmatpush2.msra.mxu0 0.0
        %3649 = vmatprep.subr.mxu0 0.0
        %3650 = vmatpush2.msra.mxu0 0.0
        %3651 = vmatprep.mubr.f32.mxu0 0.0
        %3652 = vmatmul.mubr.f32.gmra.mxu0 %v3585
        %v3653 = vpop.f32.mrf.mxu0
        %v3654 = vadd.f32 0.0, %v3653
        %v3655 = vpop.f32.mrf.mxu0
        %3656 = vdwg.mxu0
        %s3657 = scalar_lea.vmem %s7, 128
        %v3658 = vld [vmem:[%s3657] sm:$0xff]
        %v3659 = vld [vmem:[%s3657 + $0x8] sm:$0xff]
        %v3660 = vld [vmem:[%s3657 + $0x10] sm:$0xff]
        %v3661 = vld [vmem:[%s3657 + $0x18] sm:$0xff]
        %v3662 = vld [vmem:[%s3657 + $0x20] sm:$0xff]
        %v3663 = vld [vmem:[%s3657 + $0x28] sm:$0xff]
        %v3664 = vld [vmem:[%s3657 + $0x30] sm:$0xff]
        %v3665 = vld [vmem:[%s3657 + $0x38] sm:$0xff]
        %v3666 = vld [vmem:[%s3657 + $0x40] sm:$0xff]
        %v3667 = vld [vmem:[%s3657 + $0x48] sm:$0xff]
        %v3668 = vld [vmem:[%s3657 + $0x50] sm:$0xff]
        %v3669 = vld [vmem:[%s3657 + $0x58] sm:$0xff]
        %v3670 = vld [vmem:[%s3657 + $0x60] sm:$0xff]
        %v3671 = vld [vmem:[%s3657 + $0x68] sm:$0xff]
        %v3672 = vld [vmem:[%s3657 + $0x70] sm:$0xff]
        %v3673 = vld [vmem:[%s3657 + $0x78] sm:$0xff]
        %3674 = vmatprep.subr.mxu0 0.0
        %3675 = vmatpush1.msra.mxu0 %v3673
        %3676 = vmatprep.subr.mxu0 0.0
        %3677 = vmatpush1.msra.mxu0 %v3672
        %3678 = vmatprep.subr.mxu0 0.0
        %3679 = vmatpush1.msra.mxu0 %v3671
        %3680 = vmatprep.subr.mxu0 0.0
        %3681 = vmatpush1.msra.mxu0 %v3670
        %3682 = vmatprep.subr.mxu0 0.0
        %3683 = vmatpush1.msra.mxu0 %v3669
        %3684 = vmatprep.subr.mxu0 0.0
        %3685 = vmatpush1.msra.mxu0 %v3668
        %3686 = vmatprep.subr.mxu0 0.0
        %3687 = vmatpush1.msra.mxu0 %v3667
        %3688 = vmatprep.subr.mxu0 0.0
        %3689 = vmatpush1.msra.mxu0 %v3666
        %3690 = vmatprep.subr.mxu0 0.0
        %3691 = vmatpush1.msra.mxu0 %v3665
        %3692 = vmatprep.subr.mxu0 0.0
        %3693 = vmatpush1.msra.mxu0 %v3664
        %3694 = vmatprep.subr.mxu0 0.0
        %3695 = vmatpush1.msra.mxu0 %v3663
        %3696 = vmatprep.subr.mxu0 0.0
        %3697 = vmatpush1.msra.mxu0 %v3662
        %3698 = vmatprep.subr.mxu0 0.0
        %3699 = vmatpush1.msra.mxu0 %v3661
        %3700 = vmatprep.subr.mxu0 0.0
        %3701 = vmatpush1.msra.mxu0 %v3660
        %3702 = vmatprep.subr.mxu0 0.0
        %3703 = vmatpush1.msra.mxu0 %v3659
        %3704 = vmatprep.subr.mxu0 0.0
        %3705 = vmatpush1.msra.mxu0 %v3658
        %3706 = vmatprep.subr.mxu0 0.0
        %3707 = vmatpush2.msra.mxu0 0.0
        %3708 = vmatprep.subr.mxu0 0.0
        %3709 = vmatpush2.msra.mxu0 0.0
        %3710 = vmatprep.subr.mxu0 0.0
        %3711 = vmatpush2.msra.mxu0 0.0
        %3712 = vmatprep.subr.mxu0 0.0
        %3713 = vmatpush2.msra.mxu0 0.0
        %3714 = vmatprep.subr.mxu0 0.0
        %3715 = vmatpush2.msra.mxu0 0.0
        %3716 = vmatprep.subr.mxu0 0.0
        %3717 = vmatpush2.msra.mxu0 0.0
        %3718 = vmatprep.subr.mxu0 0.0
        %3719 = vmatpush2.msra.mxu0 0.0
        %3720 = vmatprep.subr.mxu0 0.0
        %3721 = vmatpush2.msra.mxu0 0.0
        %3722 = vmatprep.subr.mxu0 0.0
        %3723 = vmatpush2.msra.mxu0 0.0
        %3724 = vmatprep.subr.mxu0 0.0
        %3725 = vmatpush2.msra.mxu0 0.0
        %3726 = vmatprep.subr.mxu0 0.0
        %3727 = vmatpush2.msra.mxu0 0.0
        %3728 = vmatprep.subr.mxu0 0.0
        %3729 = vmatpush2.msra.mxu0 0.0
        %3730 = vmatprep.subr.mxu0 0.0
        %3731 = vmatpush2.msra.mxu0 0.0
        %3732 = vmatprep.subr.mxu0 0.0
        %3733 = vmatpush2.msra.mxu0 0.0
        %3734 = vmatprep.subr.mxu0 0.0
        %3735 = vmatpush2.msra.mxu0 0.0
        %3736 = vmatprep.subr.mxu0 0.0
        %3737 = vmatpush2.msra.mxu0 0.0
        %3738 = vmatprep.mubr.f32.mxu0 0.0
        %3739 = vmatmul.mubr.f32.gmra.mxu0 %v3654
        %v3740 = vpop.f32.mrf.mxu0
        %v3741 = vadd.f32 0.0, %v3740
        %v3742 = vpop.f32.mrf.mxu0
        %3743 = vdwg.mxu0
        %3744 = vmatprep.subr.mxu0 0.0
        %3745 = vmatpush1.msra.mxu0 %v3581
        %3746 = vmatprep.subr.mxu0 0.0
        %3747 = vmatpush1.msra.mxu0 %v3580
        %3748 = vmatprep.subr.mxu0 0.0
        %3749 = vmatpush1.msra.mxu0 %v3579
        %3750 = vmatprep.subr.mxu0 0.0
        %3751 = vmatpush1.msra.mxu0 %v3578
        %3752 = vmatprep.subr.mxu0 0.0
        %3753 = vmatpush1.msra.mxu0 %v3577
        %3754 = vmatprep.subr.mxu0 0.0
        %3755 = vmatpush1.msra.mxu0 %v3576
        %3756 = vmatprep.subr.mxu0 0.0
        %3757 = vmatpush1.msra.mxu0 %v3575
        %3758 = vmatprep.subr.mxu0 0.0
        %3759 = vmatpush1.msra.mxu0 %v3574
        %3760 = vmatprep.subr.mxu0 0.0
        %3761 = vmatpush1.msra.mxu0 %v3573
        %3762 = vmatprep.subr.mxu0 0.0
        %3763 = vmatpush1.msra.mxu0 %v3572
        %3764 = vmatprep.subr.mxu0 0.0
        %3765 = vmatpush1.msra.mxu0 %v3571
        %3766 = vmatprep.subr.mxu0 0.0
        %3767 = vmatpush1.msra.mxu0 %v3570
        %3768 = vmatprep.subr.mxu0 0.0
        %3769 = vmatpush1.msra.mxu0 %v3569
        %3770 = vmatprep.subr.mxu0 0.0
        %3771 = vmatpush1.msra.mxu0 %v3568
        %3772 = vmatprep.subr.mxu0 0.0
        %3773 = vmatpush1.msra.mxu0 %v3567
        %3774 = vmatprep.subr.mxu0 0.0
        %3775 = vmatpush1.msra.mxu0 %v3566
        %3776 = vmatprep.subr.mxu0 0.0
        %3777 = vmatpush2.msra.mxu0 0.0
        %3778 = vmatprep.subr.mxu0 0.0
        %3779 = vmatpush2.msra.mxu0 0.0
        %3780 = vmatprep.subr.mxu0 0.0
        %3781 = vmatpush2.msra.mxu0 0.0
        %3782 = vmatprep.subr.mxu0 0.0
        %3783 = vmatpush2.msra.mxu0 0.0
        %3784 = vmatprep.subr.mxu0 0.0
        %3785 = vmatpush2.msra.mxu0 0.0
        %3786 = vmatprep.subr.mxu0 0.0
        %3787 = vmatpush2.msra.mxu0 0.0
        %3788 = vmatprep.subr.mxu0 0.0
        %3789 = vmatpush2.msra.mxu0 0.0
        %3790 = vmatprep.subr.mxu0 0.0
        %3791 = vmatpush2.msra.mxu0 0.0
        %3792 = vmatprep.subr.mxu0 0.0
        %3793 = vmatpush2.msra.mxu0 0.0
        %3794 = vmatprep.subr.mxu0 0.0
        %3795 = vmatpush2.msra.mxu0 0.0
        %3796 = vmatprep.subr.mxu0 0.0
        %3797 = vmatpush2.msra.mxu0 0.0
        %3798 = vmatprep.subr.mxu0 0.0
        %3799 = vmatpush2.msra.mxu0 0.0
        %3800 = vmatprep.subr.mxu0 0.0
        %3801 = vmatpush2.msra.mxu0 0.0
        %3802 = vmatprep.subr.mxu0 0.0
        %3803 = vmatpush2.msra.mxu0 0.0
        %3804 = vmatprep.subr.mxu0 0.0
        %3805 = vmatpush2.msra.mxu0 0.0
        %3806 = vmatprep.subr.mxu0 0.0
        %3807 = vmatpush2.msra.mxu0 0.0
        %3808 = vmatprep.mubr.f32.mxu0 0.0
        %3809 = vmatmul.mubr.f32.gmra.mxu0 %v3563
        %v3810 = vpop.f32.mrf.mxu0
        %v3811 = vadd.f32 %v3741, %v3810
        %v3812 = vpop.f32.mrf.mxu0
        %3813 = vdwg.mxu0
        %s3814 = scalar_lea.vmem %s6, 2
        %v3815 = vld [vmem:[%s3814] sm:$0x1]
        %v3817 = vsel %vm3489, %v3815, 0
        %3819 = vmatprep.subr.mxu0 0.0
        %3820 = vmatpush1.msra.mxu0 0.0
        %3821 = vmatprep.subr.mxu0 0.0
        %3822 = vmatpush1.msra.mxu0 0.0
        %3823 = vmatprep.subr.mxu0 0.0
        %3824 = vmatpush1.msra.mxu0 0.0
        %3825 = vmatprep.subr.mxu0 0.0
        %3826 = vmatpush1.msra.mxu0 0.0
        %3827 = vmatprep.subr.mxu0 0.0
        %3828 = vmatpush1.msra.mxu0 0.0
        %3829 = vmatprep.subr.mxu0 0.0
        %3830 = vmatpush1.msra.mxu0 0.0
        %3831 = vmatprep.subr.mxu0 0.0
        %3832 = vmatpush1.msra.mxu0 0.0
        %3833 = vmatprep.subr.mxu0 0.0
        %3834 = vmatpush1.msra.mxu0 0.0
        %3835 = vmatprep.subr.mxu0 0.0
        %3836 = vmatpush1.msra.mxu0 0.0
        %3837 = vmatprep.subr.mxu0 0.0
        %3838 = vmatpush1.msra.mxu0 0.0
        %3839 = vmatprep.subr.mxu0 0.0
        %3840 = vmatpush1.msra.mxu0 0.0
        %3841 = vmatprep.subr.mxu0 0.0
        %3842 = vmatpush1.msra.mxu0 0.0
        %3843 = vmatprep.subr.mxu0 0.0
        %3844 = vmatpush1.msra.mxu0 0.0
        %3845 = vmatprep.subr.mxu0 0.0
        %3846 = vmatpush1.msra.mxu0 0.0
        %3847 = vmatprep.subr.mxu0 0.0
        %3848 = vmatpush1.msra.mxu0 %v3494
        %3849 = vmatprep.subr.mxu0 0.0
        %3850 = vmatpush1.msra.mxu0 %v3486
        %3851 = vmatprep.subr.mxu0 0.0
        %3852 = vmatpush2.msra.mxu0 0.0
        %3853 = vmatprep.subr.mxu0 0.0
        %3854 = vmatpush2.msra.mxu0 0.0
        %3855 = vmatprep.subr.mxu0 0.0
        %3856 = vmatpush2.msra.mxu0 0.0
        %3857 = vmatprep.subr.mxu0 0.0
        %3858 = vmatpush2.msra.mxu0 0.0
        %3859 = vmatprep.subr.mxu0 0.0
        %3860 = vmatpush2.msra.mxu0 0.0
        %3861 = vmatprep.subr.mxu0 0.0
        %3862 = vmatpush2.msra.mxu0 0.0
        %3863 = vmatprep.subr.mxu0 0.0
        %3864 = vmatpush2.msra.mxu0 0.0
        %3865 = vmatprep.subr.mxu0 0.0
        %3866 = vmatpush2.msra.mxu0 0.0
        %3867 = vmatprep.subr.mxu0 0.0
        %3868 = vmatpush2.msra.mxu0 0.0
        %3869 = vmatprep.subr.mxu0 0.0
        %3870 = vmatpush2.msra.mxu0 0.0
        %3871 = vmatprep.subr.mxu0 0.0
        %3872 = vmatpush2.msra.mxu0 0.0
        %3873 = vmatprep.subr.mxu0 0.0
        %3874 = vmatpush2.msra.mxu0 0.0
        %3875 = vmatprep.subr.mxu0 0.0
        %3876 = vmatpush2.msra.mxu0 0.0
        %3877 = vmatprep.subr.mxu0 0.0
        %3878 = vmatpush2.msra.mxu0 0.0
        %3879 = vmatprep.subr.mxu0 0.0
        %3880 = vmatpush2.msra.mxu0 0.0
        %3881 = vmatprep.subr.mxu0 0.0
        %3882 = vmatpush2.msra.mxu0 0.0
        %3883 = vmatprep.mubr.f32.mxu0 0.0
        %3884 = vmatmul.mubr.f32.gmra.mxu0 %v3817
        %v3885 = vpop.f32.mrf.mxu0
        %v3886 = vadd.f32 0.0, %v3885
        %v3887 = vpop.f32.mrf.mxu0
        %3888 = vdwg.mxu0
        %s3889 = scalar_lea.vmem %s7, 256
        %v3890 = vld [vmem:[%s3889] sm:$0xff]
        %v3891 = vld [vmem:[%s3889 + $0x8] sm:$0xff]
        %v3892 = vld [vmem:[%s3889 + $0x10] sm:$0xff]
        %v3893 = vld [vmem:[%s3889 + $0x18] sm:$0xff]
        %v3894 = vld [vmem:[%s3889 + $0x20] sm:$0xff]
        %v3895 = vld [vmem:[%s3889 + $0x28] sm:$0xff]
        %v3896 = vld [vmem:[%s3889 + $0x30] sm:$0xff]
        %v3897 = vld [vmem:[%s3889 + $0x38] sm:$0xff]
        %v3898 = vld [vmem:[%s3889 + $0x40] sm:$0xff]
        %v3899 = vld [vmem:[%s3889 + $0x48] sm:$0xff]
        %v3900 = vld [vmem:[%s3889 + $0x50] sm:$0xff]
        %v3901 = vld [vmem:[%s3889 + $0x58] sm:$0xff]
        %v3902 = vld [vmem:[%s3889 + $0x60] sm:$0xff]
        %v3903 = vld [vmem:[%s3889 + $0x68] sm:$0xff]
        %v3904 = vld [vmem:[%s3889 + $0x70] sm:$0xff]
        %v3905 = vld [vmem:[%s3889 + $0x78] sm:$0xff]
        %3906 = vmatprep.subr.mxu0 0.0
        %3907 = vmatpush1.msra.mxu0 %v3905
        %3908 = vmatprep.subr.mxu0 0.0
        %3909 = vmatpush1.msra.mxu0 %v3904
        %3910 = vmatprep.subr.mxu0 0.0
        %3911 = vmatpush1.msra.mxu0 %v3903
        %3912 = vmatprep.subr.mxu0 0.0
        %3913 = vmatpush1.msra.mxu0 %v3902
        %3914 = vmatprep.subr.mxu0 0.0
        %3915 = vmatpush1.msra.mxu0 %v3901
        %3916 = vmatprep.subr.mxu0 0.0
        %3917 = vmatpush1.msra.mxu0 %v3900
        %3918 = vmatprep.subr.mxu0 0.0
        %3919 = vmatpush1.msra.mxu0 %v3899
        %3920 = vmatprep.subr.mxu0 0.0
        %3921 = vmatpush1.msra.mxu0 %v3898
        %3922 = vmatprep.subr.mxu0 0.0
        %3923 = vmatpush1.msra.mxu0 %v3897
        %3924 = vmatprep.subr.mxu0 0.0
        %3925 = vmatpush1.msra.mxu0 %v3896
        %3926 = vmatprep.subr.mxu0 0.0
        %3927 = vmatpush1.msra.mxu0 %v3895
        %3928 = vmatprep.subr.mxu0 0.0
        %3929 = vmatpush1.msra.mxu0 %v3894
        %3930 = vmatprep.subr.mxu0 0.0
        %3931 = vmatpush1.msra.mxu0 %v3893
        %3932 = vmatprep.subr.mxu0 0.0
        %3933 = vmatpush1.msra.mxu0 %v3892
        %3934 = vmatprep.subr.mxu0 0.0
        %3935 = vmatpush1.msra.mxu0 %v3891
        %3936 = vmatprep.subr.mxu0 0.0
        %3937 = vmatpush1.msra.mxu0 %v3890
        %3938 = vmatprep.subr.mxu0 0.0
        %3939 = vmatpush2.msra.mxu0 0.0
        %3940 = vmatprep.subr.mxu0 0.0
        %3941 = vmatpush2.msra.mxu0 0.0
        %3942 = vmatprep.subr.mxu0 0.0
        %3943 = vmatpush2.msra.mxu0 0.0
        %3944 = vmatprep.subr.mxu0 0.0
        %3945 = vmatpush2.msra.mxu0 0.0
        %3946 = vmatprep.subr.mxu0 0.0
        %3947 = vmatpush2.msra.mxu0 0.0
        %3948 = vmatprep.subr.mxu0 0.0
        %3949 = vmatpush2.msra.mxu0 0.0
        %3950 = vmatprep.subr.mxu0 0.0
        %3951 = vmatpush2.msra.mxu0 0.0
        %3952 = vmatprep.subr.mxu0 0.0
        %3953 = vmatpush2.msra.mxu0 0.0
        %3954 = vmatprep.subr.mxu0 0.0
        %3955 = vmatpush2.msra.mxu0 0.0
        %3956 = vmatprep.subr.mxu0 0.0
        %3957 = vmatpush2.msra.mxu0 0.0
        %3958 = vmatprep.subr.mxu0 0.0
        %3959 = vmatpush2.msra.mxu0 0.0
        %3960 = vmatprep.subr.mxu0 0.0
        %3961 = vmatpush2.msra.mxu0 0.0
        %3962 = vmatprep.subr.mxu0 0.0
        %3963 = vmatpush2.msra.mxu0 0.0
        %3964 = vmatprep.subr.mxu0 0.0
        %3965 = vmatpush2.msra.mxu0 0.0
        %3966 = vmatprep.subr.mxu0 0.0
        %3967 = vmatpush2.msra.mxu0 0.0
        %3968 = vmatprep.subr.mxu0 0.0
        %3969 = vmatpush2.msra.mxu0 0.0
        %3970 = vmatprep.mubr.f32.mxu0 0.0
        %3971 = vmatmul.mubr.f32.gmra.mxu0 %v3886
        %v3972 = vpop.f32.mrf.mxu0
        %v3973 = vadd.f32 0.0, %v3972
        %v3974 = vpop.f32.mrf.mxu0
        %3975 = vdwg.mxu0
        %v3976 = vadd.f32 %v3811, %v3973
        %s3977 = scalar_lea.vmem %s6, 3
        %v3978 = vld [vmem:[%s3977] sm:$0x1]
        %v3980 = vsel %vm3489, %v3978, 0
        %3982 = vmatprep.subr.mxu0 0.0
        %3983 = vmatpush1.msra.mxu0 0.0
        %3984 = vmatprep.subr.mxu0 0.0
        %3985 = vmatpush1.msra.mxu0 0.0
        %3986 = vmatprep.subr.mxu0 0.0
        %3987 = vmatpush1.msra.mxu0 0.0
        %3988 = vmatprep.subr.mxu0 0.0
        %3989 = vmatpush1.msra.mxu0 0.0
        %3990 = vmatprep.subr.mxu0 0.0
        %3991 = vmatpush1.msra.mxu0 0.0
        %3992 = vmatprep.subr.mxu0 0.0
        %3993 = vmatpush1.msra.mxu0 0.0
        %3994 = vmatprep.subr.mxu0 0.0
        %3995 = vmatpush1.msra.mxu0 0.0
        %3996 = vmatprep.subr.mxu0 0.0
        %3997 = vmatpush1.msra.mxu0 0.0
        %3998 = vmatprep.subr.mxu0 0.0
        %3999 = vmatpush1.msra.mxu0 0.0
        %4000 = vmatprep.subr.mxu0 0.0
        %4001 = vmatpush1.msra.mxu0 0.0
        %4002 = vmatprep.subr.mxu0 0.0
        %4003 = vmatpush1.msra.mxu0 0.0
        %4004 = vmatprep.subr.mxu0 0.0
        %4005 = vmatpush1.msra.mxu0 0.0
        %4006 = vmatprep.subr.mxu0 0.0
        %4007 = vmatpush1.msra.mxu0 0.0
        %4008 = vmatprep.subr.mxu0 0.0
        %4009 = vmatpush1.msra.mxu0 0.0
        %4010 = vmatprep.subr.mxu0 0.0
        %4011 = vmatpush1.msra.mxu0 %v3494
        %4012 = vmatprep.subr.mxu0 0.0
        %4013 = vmatpush1.msra.mxu0 %v3486
        %4014 = vmatprep.subr.mxu0 0.0
        %4015 = vmatpush2.msra.mxu0 0.0
        %4016 = vmatprep.subr.mxu0 0.0
        %4017 = vmatpush2.msra.mxu0 0.0
        %4018 = vmatprep.subr.mxu0 0.0
        %4019 = vmatpush2.msra.mxu0 0.0
        %4020 = vmatprep.subr.mxu0 0.0
        %4021 = vmatpush2.msra.mxu0 0.0
        %4022 = vmatprep.subr.mxu0 0.0
        %4023 = vmatpush2.msra.mxu0 0.0
        %4024 = vmatprep.subr.mxu0 0.0
        %4025 = vmatpush2.msra.mxu0 0.0
        %4026 = vmatprep.subr.mxu0 0.0
        %4027 = vmatpush2.msra.mxu0 0.0
        %4028 = vmatprep.subr.mxu0 0.0
        %4029 = vmatpush2.msra.mxu0 0.0
        %4030 = vmatprep.subr.mxu0 0.0
        %4031 = vmatpush2.msra.mxu0 0.0
        %4032 = vmatprep.subr.mxu0 0.0
        %4033 = vmatpush2.msra.mxu0 0.0
        %4034 = vmatprep.subr.mxu0 0.0
        %4035 = vmatpush2.msra.mxu0 0.0
        %4036 = vmatprep.subr.mxu0 0.0
        %4037 = vmatpush2.msra.mxu0 0.0
        %4038 = vmatprep.subr.mxu0 0.0
        %4039 = vmatpush2.msra.mxu0 0.0
        %4040 = vmatprep.subr.mxu0 0.0
        %4041 = vmatpush2.msra.mxu0 0.0
        %4042 = vmatprep.subr.mxu0 0.0
        %4043 = vmatpush2.msra.mxu0 0.0
        %4044 = vmatprep.subr.mxu0 0.0
        %4045 = vmatpush2.msra.mxu0 0.0
        %4046 = vmatprep.mubr.f32.mxu0 0.0
        %4047 = vmatmul.mubr.f32.gmra.mxu0 %v3980
        %v4048 = vpop.f32.mrf.mxu0
        %v4049 = vadd.f32 0.0, %v4048
        %v4050 = vpop.f32.mrf.mxu0
        %4051 = vdwg.mxu0
        %s4052 = scalar_lea.vmem %s7, 384
        %v4053 = vld [vmem:[%s4052] sm:$0xff]
        %v4054 = vld [vmem:[%s4052 + $0x8] sm:$0xff]
        %v4055 = vld [vmem:[%s4052 + $0x10] sm:$0xff]
        %v4056 = vld [vmem:[%s4052 + $0x18] sm:$0xff]
        %v4057 = vld [vmem:[%s4052 + $0x20] sm:$0xff]
        %v4058 = vld [vmem:[%s4052 + $0x28] sm:$0xff]
        %v4059 = vld [vmem:[%s4052 + $0x30] sm:$0xff]
        %v4060 = vld [vmem:[%s4052 + $0x38] sm:$0xff]
        %v4061 = vld [vmem:[%s4052 + $0x40] sm:$0xff]
        %v4062 = vld [vmem:[%s4052 + $0x48] sm:$0xff]
        %v4063 = vld [vmem:[%s4052 + $0x50] sm:$0xff]
        %v4064 = vld [vmem:[%s4052 + $0x58] sm:$0xff]
        %v4065 = vld [vmem:[%s4052 + $0x60] sm:$0xff]
        %v4066 = vld [vmem:[%s4052 + $0x68] sm:$0xff]
        %v4067 = vld [vmem:[%s4052 + $0x70] sm:$0xff]
        %v4068 = vld [vmem:[%s4052 + $0x78] sm:$0xff]
        %4069 = vmatprep.subr.mxu0 0.0
        %4070 = vmatpush1.msra.mxu0 %v4068
        %4071 = vmatprep.subr.mxu0 0.0
        %4072 = vmatpush1.msra.mxu0 %v4067
        %4073 = vmatprep.subr.mxu0 0.0
        %4074 = vmatpush1.msra.mxu0 %v4066
        %4075 = vmatprep.subr.mxu0 0.0
        %4076 = vmatpush1.msra.mxu0 %v4065
        %4077 = vmatprep.subr.mxu0 0.0
        %4078 = vmatpush1.msra.mxu0 %v4064
        %4079 = vmatprep.subr.mxu0 0.0
        %4080 = vmatpush1.msra.mxu0 %v4063
        %4081 = vmatprep.subr.mxu0 0.0
        %4082 = vmatpush1.msra.mxu0 %v4062
        %4083 = vmatprep.subr.mxu0 0.0
        %4084 = vmatpush1.msra.mxu0 %v4061
        %4085 = vmatprep.subr.mxu0 0.0
        %4086 = vmatpush1.msra.mxu0 %v4060
        %4087 = vmatprep.subr.mxu0 0.0
        %4088 = vmatpush1.msra.mxu0 %v4059
        %4089 = vmatprep.subr.mxu0 0.0
        %4090 = vmatpush1.msra.mxu0 %v4058
        %4091 = vmatprep.subr.mxu0 0.0
        %4092 = vmatpush1.msra.mxu0 %v4057
        %4093 = vmatprep.subr.mxu0 0.0
        %4094 = vmatpush1.msra.mxu0 %v4056
        %4095 = vmatprep.subr.mxu0 0.0
        %4096 = vmatpush1.msra.mxu0 %v4055
        %4097 = vmatprep.subr.mxu0 0.0
        %4098 = vmatpush1.msra.mxu0 %v4054
        %4099 = vmatprep.subr.mxu0 0.0
        %4100 = vmatpush1.msra.mxu0 %v4053
        %4101 = vmatprep.subr.mxu0 0.0
        %4102 = vmatpush2.msra.mxu0 0.0
        %4103 = vmatprep.subr.mxu0 0.0
        %4104 = vmatpush2.msra.mxu0 0.0
        %4105 = vmatprep.subr.mxu0 0.0
        %4106 = vmatpush2.msra.mxu0 0.0
        %4107 = vmatprep.subr.mxu0 0.0
        %4108 = vmatpush2.msra.mxu0 0.0
        %4109 = vmatprep.subr.mxu0 0.0
        %4110 = vmatpush2.msra.mxu0 0.0
        %4111 = vmatprep.subr.mxu0 0.0
        %4112 = vmatpush2.msra.mxu0 0.0
        %4113 = vmatprep.subr.mxu0 0.0
        %4114 = vmatpush2.msra.mxu0 0.0
        %4115 = vmatprep.subr.mxu0 0.0
        %4116 = vmatpush2.msra.mxu0 0.0
        %4117 = vmatprep.subr.mxu0 0.0
        %4118 = vmatpush2.msra.mxu0 0.0
        %4119 = vmatprep.subr.mxu0 0.0
        %4120 = vmatpush2.msra.mxu0 0.0
        %4121 = vmatprep.subr.mxu0 0.0
        %4122 = vmatpush2.msra.mxu0 0.0
        %4123 = vmatprep.subr.mxu0 0.0
        %4124 = vmatpush2.msra.mxu0 0.0
        %4125 = vmatprep.subr.mxu0 0.0
        %4126 = vmatpush2.msra.mxu0 0.0
        %4127 = vmatprep.subr.mxu0 0.0
        %4128 = vmatpush2.msra.mxu0 0.0
        %4129 = vmatprep.subr.mxu0 0.0
        %4130 = vmatpush2.msra.mxu0 0.0
        %4131 = vmatprep.subr.mxu0 0.0
        %4132 = vmatpush2.msra.mxu0 0.0
        %4133 = vmatprep.mubr.f32.mxu0 0.0
        %4134 = vmatmul.mubr.f32.gmra.mxu0 %v4049
        %v4135 = vpop.f32.mrf.mxu0
        %v4136 = vadd.f32 0.0, %v4135
        %v4137 = vpop.f32.mrf.mxu0
        %4138 = vdwg.mxu0
        %v4139 = vadd.f32 %v3976, %v4136
        %s4140 = scalar_lea.vmem %s6, 4
        %v4141 = vld [vmem:[%s4140] sm:$0x1]
        %v4143 = vsel %vm3489, %v4141, 0
        %4145 = vmatprep.subr.mxu0 0.0
        %4146 = vmatpush1.msra.mxu0 0.0
        %4147 = vmatprep.subr.mxu0 0.0
        %4148 = vmatpush1.msra.mxu0 0.0
        %4149 = vmatprep.subr.mxu0 0.0
        %4150 = vmatpush1.msra.mxu0 0.0
        %4151 = vmatprep.subr.mxu0 0.0
        %4152 = vmatpush1.msra.mxu0 0.0
        %4153 = vmatprep.subr.mxu0 0.0
        %4154 = vmatpush1.msra.mxu0 0.0
        %4155 = vmatprep.subr.mxu0 0.0
        %4156 = vmatpush1.msra.mxu0 0.0
        %4157 = vmatprep.subr.mxu0 0.0
        %4158 = vmatpush1.msra.mxu0 0.0
        %4159 = vmatprep.subr.mxu0 0.0
        %4160 = vmatpush1.msra.mxu0 0.0
        %4161 = vmatprep.subr.mxu0 0.0
        %4162 = vmatpush1.msra.mxu0 0.0
        %4163 = vmatprep.subr.mxu0 0.0
        %4164 = vmatpush1.msra.mxu0 0.0
        %4165 = vmatprep.subr.mxu0 0.0
        %4166 = vmatpush1.msra.mxu0 0.0
        %4167 = vmatprep.subr.mxu0 0.0
        %4168 = vmatpush1.msra.mxu0 0.0
        %4169 = vmatprep.subr.mxu0 0.0
        %4170 = vmatpush1.msra.mxu0 0.0
        %4171 = vmatprep.subr.mxu0 0.0
        %4172 = vmatpush1.msra.mxu0 0.0
        %4173 = vmatprep.subr.mxu0 0.0
        %4174 = vmatpush1.msra.mxu0 %v3494
        %4175 = vmatprep.subr.mxu0 0.0
        %4176 = vmatpush1.msra.mxu0 %v3486
        %4177 = vmatprep.subr.mxu0 0.0
        %4178 = vmatpush2.msra.mxu0 0.0
        %4179 = vmatprep.subr.mxu0 0.0
        %4180 = vmatpush2.msra.mxu0 0.0
        %4181 = vmatprep.subr.mxu0 0.0
        %4182 = vmatpush2.msra.mxu0 0.0
        %4183 = vmatprep.subr.mxu0 0.0
        %4184 = vmatpush2.msra.mxu0 0.0
        %4185 = vmatprep.subr.mxu0 0.0
        %4186 = vmatpush2.msra.mxu0 0.0
        %4187 = vmatprep.subr.mxu0 0.0
        %4188 = vmatpush2.msra.mxu0 0.0
        %4189 = vmatprep.subr.mxu0 0.0
        %4190 = vmatpush2.msra.mxu0 0.0
        %4191 = vmatprep.subr.mxu0 0.0
        %4192 = vmatpush2.msra.mxu0 0.0
        %4193 = vmatprep.subr.mxu0 0.0
        %4194 = vmatpush2.msra.mxu0 0.0
        %4195 = vmatprep.subr.mxu0 0.0
        %4196 = vmatpush2.msra.mxu0 0.0
        %4197 = vmatprep.subr.mxu0 0.0
        %4198 = vmatpush2.msra.mxu0 0.0
        %4199 = vmatprep.subr.mxu0 0.0
        %4200 = vmatpush2.msra.mxu0 0.0
        %4201 = vmatprep.subr.mxu0 0.0
        %4202 = vmatpush2.msra.mxu0 0.0
        %4203 = vmatprep.subr.mxu0 0.0
        %4204 = vmatpush2.msra.mxu0 0.0
        %4205 = vmatprep.subr.mxu0 0.0
        %4206 = vmatpush2.msra.mxu0 0.0
        %4207 = vmatprep.subr.mxu0 0.0
        %4208 = vmatpush2.msra.mxu0 0.0
        %4209 = vmatprep.mubr.f32.mxu0 0.0
        %4210 = vmatmul.mubr.f32.gmra.mxu0 %v4143
        %v4211 = vpop.f32.mrf.mxu0
        %v4212 = vadd.f32 0.0, %v4211
        %v4213 = vpop.f32.mrf.mxu0
        %4214 = vdwg.mxu0
        %s4215 = scalar_lea.vmem %s7, 512
        %v4216 = vld [vmem:[%s4215] sm:$0xff]
        %v4217 = vld [vmem:[%s4215 + $0x8] sm:$0xff]
        %v4218 = vld [vmem:[%s4215 + $0x10] sm:$0xff]
        %v4219 = vld [vmem:[%s4215 + $0x18] sm:$0xff]
        %v4220 = vld [vmem:[%s4215 + $0x20] sm:$0xff]
        %v4221 = vld [vmem:[%s4215 + $0x28] sm:$0xff]
        %v4222 = vld [vmem:[%s4215 + $0x30] sm:$0xff]
        %v4223 = vld [vmem:[%s4215 + $0x38] sm:$0xff]
        %v4224 = vld [vmem:[%s4215 + $0x40] sm:$0xff]
        %v4225 = vld [vmem:[%s4215 + $0x48] sm:$0xff]
        %v4226 = vld [vmem:[%s4215 + $0x50] sm:$0xff]
        %v4227 = vld [vmem:[%s4215 + $0x58] sm:$0xff]
        %v4228 = vld [vmem:[%s4215 + $0x60] sm:$0xff]
        %v4229 = vld [vmem:[%s4215 + $0x68] sm:$0xff]
        %v4230 = vld [vmem:[%s4215 + $0x70] sm:$0xff]
        %v4231 = vld [vmem:[%s4215 + $0x78] sm:$0xff]
        %4232 = vmatprep.subr.mxu0 0.0
        %4233 = vmatpush1.msra.mxu0 %v4231
        %4234 = vmatprep.subr.mxu0 0.0
        %4235 = vmatpush1.msra.mxu0 %v4230
        %4236 = vmatprep.subr.mxu0 0.0
        %4237 = vmatpush1.msra.mxu0 %v4229
        %4238 = vmatprep.subr.mxu0 0.0
        %4239 = vmatpush1.msra.mxu0 %v4228
        %4240 = vmatprep.subr.mxu0 0.0
        %4241 = vmatpush1.msra.mxu0 %v4227
        %4242 = vmatprep.subr.mxu0 0.0
        %4243 = vmatpush1.msra.mxu0 %v4226
        %4244 = vmatprep.subr.mxu0 0.0
        %4245 = vmatpush1.msra.mxu0 %v4225
        %4246 = vmatprep.subr.mxu0 0.0
        %4247 = vmatpush1.msra.mxu0 %v4224
        %4248 = vmatprep.subr.mxu0 0.0
        %4249 = vmatpush1.msra.mxu0 %v4223
        %4250 = vmatprep.subr.mxu0 0.0
        %4251 = vmatpush1.msra.mxu0 %v4222
        %4252 = vmatprep.subr.mxu0 0.0
        %4253 = vmatpush1.msra.mxu0 %v4221
        %4254 = vmatprep.subr.mxu0 0.0
        %4255 = vmatpush1.msra.mxu0 %v4220
        %4256 = vmatprep.subr.mxu0 0.0
        %4257 = vmatpush1.msra.mxu0 %v4219
        %4258 = vmatprep.subr.mxu0 0.0
        %4259 = vmatpush1.msra.mxu0 %v4218
        %4260 = vmatprep.subr.mxu0 0.0
        %4261 = vmatpush1.msra.mxu0 %v4217
        %4262 = vmatprep.subr.mxu0 0.0
        %4263 = vmatpush1.msra.mxu0 %v4216
        %4264 = vmatprep.subr.mxu0 0.0
        %4265 = vmatpush2.msra.mxu0 0.0
        %4266 = vmatprep.subr.mxu0 0.0
        %4267 = vmatpush2.msra.mxu0 0.0
        %4268 = vmatprep.subr.mxu0 0.0
        %4269 = vmatpush2.msra.mxu0 0.0
        %4270 = vmatprep.subr.mxu0 0.0
        %4271 = vmatpush2.msra.mxu0 0.0
        %4272 = vmatprep.subr.mxu0 0.0
        %4273 = vmatpush2.msra.mxu0 0.0
        %4274 = vmatprep.subr.mxu0 0.0
        %4275 = vmatpush2.msra.mxu0 0.0
        %4276 = vmatprep.subr.mxu0 0.0
        %4277 = vmatpush2.msra.mxu0 0.0
        %4278 = vmatprep.subr.mxu0 0.0
        %4279 = vmatpush2.msra.mxu0 0.0
        %4280 = vmatprep.subr.mxu0 0.0
        %4281 = vmatpush2.msra.mxu0 0.0
        %4282 = vmatprep.subr.mxu0 0.0
        %4283 = vmatpush2.msra.mxu0 0.0
        %4284 = vmatprep.subr.mxu0 0.0
        %4285 = vmatpush2.msra.mxu0 0.0
        %4286 = vmatprep.subr.mxu0 0.0
        %4287 = vmatpush2.msra.mxu0 0.0
        %4288 = vmatprep.subr.mxu0 0.0
        %4289 = vmatpush2.msra.mxu0 0.0
        %4290 = vmatprep.subr.mxu0 0.0
        %4291 = vmatpush2.msra.mxu0 0.0
        %4292 = vmatprep.subr.mxu0 0.0
        %4293 = vmatpush2.msra.mxu0 0.0
        %4294 = vmatprep.subr.mxu0 0.0
        %4295 = vmatpush2.msra.mxu0 0.0
        %4296 = vmatprep.mubr.f32.mxu0 0.0
        %4297 = vmatmul.mubr.f32.gmra.mxu0 %v4212
        %v4298 = vpop.f32.mrf.mxu0
        %v4299 = vadd.f32 0.0, %v4298
        %v4300 = vpop.f32.mrf.mxu0
        %4301 = vdwg.mxu0
        %v4302 = vadd.f32 %v4139, %v4299
        %s4303 = scalar_lea.vmem %s6, 5
        %v4304 = vld [vmem:[%s4303] sm:$0x1]
        %v4306 = vsel %vm3489, %v4304, 0
        %4308 = vmatprep.subr.mxu0 0.0
        %4309 = vmatpush1.msra.mxu0 0.0
        %4310 = vmatprep.subr.mxu0 0.0
        %4311 = vmatpush1.msra.mxu0 0.0
        %4312 = vmatprep.subr.mxu0 0.0
        %4313 = vmatpush1.msra.mxu0 0.0
        %4314 = vmatprep.subr.mxu0 0.0
        %4315 = vmatpush1.msra.mxu0 0.0
        %4316 = vmatprep.subr.mxu0 0.0
        %4317 = vmatpush1.msra.mxu0 0.0
        %4318 = vmatprep.subr.mxu0 0.0
        %4319 = vmatpush1.msra.mxu0 0.0
        %4320 = vmatprep.subr.mxu0 0.0
        %4321 = vmatpush1.msra.mxu0 0.0
        %4322 = vmatprep.subr.mxu0 0.0
        %4323 = vmatpush1.msra.mxu0 0.0
        %4324 = vmatprep.subr.mxu0 0.0
        %4325 = vmatpush1.msra.mxu0 0.0
        %4326 = vmatprep.subr.mxu0 0.0
        %4327 = vmatpush1.msra.mxu0 0.0
        %4328 = vmatprep.subr.mxu0 0.0
        %4329 = vmatpush1.msra.mxu0 0.0
        %4330 = vmatprep.subr.mxu0 0.0
        %4331 = vmatpush1.msra.mxu0 0.0
        %4332 = vmatprep.subr.mxu0 0.0
        %4333 = vmatpush1.msra.mxu0 0.0
        %4334 = vmatprep.subr.mxu0 0.0
        %4335 = vmatpush1.msra.mxu0 0.0
        %4336 = vmatprep.subr.mxu0 0.0
        %4337 = vmatpush1.msra.mxu0 %v3494
        %4338 = vmatprep.subr.mxu0 0.0
        %4339 = vmatpush1.msra.mxu0 %v3486
        %4340 = vmatprep.subr.mxu0 0.0
        %4341 = vmatpush2.msra.mxu0 0.0
        %4342 = vmatprep.subr.mxu0 0.0
        %4343 = vmatpush2.msra.mxu0 0.0
        %4344 = vmatprep.subr.mxu0 0.0
        %4345 = vmatpush2.msra.mxu0 0.0
        %4346 = vmatprep.subr.mxu0 0.0
        %4347 = vmatpush2.msra.mxu0 0.0
        %4348 = vmatprep.subr.mxu0 0.0
        %4349 = vmatpush2.msra.mxu0 0.0
        %4350 = vmatprep.subr.mxu0 0.0
        %4351 = vmatpush2.msra.mxu0 0.0
        %4352 = vmatprep.subr.mxu0 0.0
        %4353 = vmatpush2.msra.mxu0 0.0
        %4354 = vmatprep.subr.mxu0 0.0
        %4355 = vmatpush2.msra.mxu0 0.0
        %4356 = vmatprep.subr.mxu0 0.0
        %4357 = vmatpush2.msra.mxu0 0.0
        %4358 = vmatprep.subr.mxu0 0.0
        %4359 = vmatpush2.msra.mxu0 0.0
        %4360 = vmatprep.subr.mxu0 0.0
        %4361 = vmatpush2.msra.mxu0 0.0
        %4362 = vmatprep.subr.mxu0 0.0
        %4363 = vmatpush2.msra.mxu0 0.0
        %4364 = vmatprep.subr.mxu0 0.0
        %4365 = vmatpush2.msra.mxu0 0.0
        %4366 = vmatprep.subr.mxu0 0.0
        %4367 = vmatpush2.msra.mxu0 0.0
        %4368 = vmatprep.subr.mxu0 0.0
        %4369 = vmatpush2.msra.mxu0 0.0
        %4370 = vmatprep.subr.mxu0 0.0
        %4371 = vmatpush2.msra.mxu0 0.0
        %4372 = vmatprep.mubr.f32.mxu0 0.0
        %4373 = vmatmul.mubr.f32.gmra.mxu0 %v4306
        %v4374 = vpop.f32.mrf.mxu0
        %v4375 = vadd.f32 0.0, %v4374
        %v4376 = vpop.f32.mrf.mxu0
        %4377 = vdwg.mxu0
        %s4378 = scalar_lea.vmem %s7, 640
        %v4379 = vld [vmem:[%s4378] sm:$0xff]
        %v4380 = vld [vmem:[%s4378 + $0x8] sm:$0xff]
        %v4381 = vld [vmem:[%s4378 + $0x10] sm:$0xff]
        %v4382 = vld [vmem:[%s4378 + $0x18] sm:$0xff]
        %v4383 = vld [vmem:[%s4378 + $0x20] sm:$0xff]
        %v4384 = vld [vmem:[%s4378 + $0x28] sm:$0xff]
        %v4385 = vld [vmem:[%s4378 + $0x30] sm:$0xff]
        %v4386 = vld [vmem:[%s4378 + $0x38] sm:$0xff]
        %v4387 = vld [vmem:[%s4378 + $0x40] sm:$0xff]
        %v4388 = vld [vmem:[%s4378 + $0x48] sm:$0xff]
        %v4389 = vld [vmem:[%s4378 + $0x50] sm:$0xff]
        %v4390 = vld [vmem:[%s4378 + $0x58] sm:$0xff]
        %v4391 = vld [vmem:[%s4378 + $0x60] sm:$0xff]
        %v4392 = vld [vmem:[%s4378 + $0x68] sm:$0xff]
        %v4393 = vld [vmem:[%s4378 + $0x70] sm:$0xff]
        %v4394 = vld [vmem:[%s4378 + $0x78] sm:$0xff]
        %4395 = vmatprep.subr.mxu0 0.0
        %4396 = vmatpush1.msra.mxu0 %v4394
        %4397 = vmatprep.subr.mxu0 0.0
        %4398 = vmatpush1.msra.mxu0 %v4393
        %4399 = vmatprep.subr.mxu0 0.0
        %4400 = vmatpush1.msra.mxu0 %v4392
        %4401 = vmatprep.subr.mxu0 0.0
        %4402 = vmatpush1.msra.mxu0 %v4391
        %4403 = vmatprep.subr.mxu0 0.0
        %4404 = vmatpush1.msra.mxu0 %v4390
        %4405 = vmatprep.subr.mxu0 0.0
        %4406 = vmatpush1.msra.mxu0 %v4389
        %4407 = vmatprep.subr.mxu0 0.0
        %4408 = vmatpush1.msra.mxu0 %v4388
        %4409 = vmatprep.subr.mxu0 0.0
        %4410 = vmatpush1.msra.mxu0 %v4387
        %4411 = vmatprep.subr.mxu0 0.0
        %4412 = vmatpush1.msra.mxu0 %v4386
        %4413 = vmatprep.subr.mxu0 0.0
        %4414 = vmatpush1.msra.mxu0 %v4385
        %4415 = vmatprep.subr.mxu0 0.0
        %4416 = vmatpush1.msra.mxu0 %v4384
        %4417 = vmatprep.subr.mxu0 0.0
        %4418 = vmatpush1.msra.mxu0 %v4383
        %4419 = vmatprep.subr.mxu0 0.0
        %4420 = vmatpush1.msra.mxu0 %v4382
        %4421 = vmatprep.subr.mxu0 0.0
        %4422 = vmatpush1.msra.mxu0 %v4381
        %4423 = vmatprep.subr.mxu0 0.0
        %4424 = vmatpush1.msra.mxu0 %v4380
        %4425 = vmatprep.subr.mxu0 0.0
        %4426 = vmatpush1.msra.mxu0 %v4379
        %4427 = vmatprep.subr.mxu0 0.0
        %4428 = vmatpush2.msra.mxu0 0.0
        %4429 = vmatprep.subr.mxu0 0.0
        %4430 = vmatpush2.msra.mxu0 0.0
        %4431 = vmatprep.subr.mxu0 0.0
        %4432 = vmatpush2.msra.mxu0 0.0
        %4433 = vmatprep.subr.mxu0 0.0
        %4434 = vmatpush2.msra.mxu0 0.0
        %4435 = vmatprep.subr.mxu0 0.0
        %4436 = vmatpush2.msra.mxu0 0.0
        %4437 = vmatprep.subr.mxu0 0.0
        %4438 = vmatpush2.msra.mxu0 0.0
        %4439 = vmatprep.subr.mxu0 0.0
        %4440 = vmatpush2.msra.mxu0 0.0
        %4441 = vmatprep.subr.mxu0 0.0
        %4442 = vmatpush2.msra.mxu0 0.0
        %4443 = vmatprep.subr.mxu0 0.0
        %4444 = vmatpush2.msra.mxu0 0.0
        %4445 = vmatprep.subr.mxu0 0.0
        %4446 = vmatpush2.msra.mxu0 0.0
        %4447 = vmatprep.subr.mxu0 0.0
        %4448 = vmatpush2.msra.mxu0 0.0
        %4449 = vmatprep.subr.mxu0 0.0
        %4450 = vmatpush2.msra.mxu0 0.0
        %4451 = vmatprep.subr.mxu0 0.0
        %4452 = vmatpush2.msra.mxu0 0.0
        %4453 = vmatprep.subr.mxu0 0.0
        %4454 = vmatpush2.msra.mxu0 0.0
        %4455 = vmatprep.subr.mxu0 0.0
        %4456 = vmatpush2.msra.mxu0 0.0
        %4457 = vmatprep.subr.mxu0 0.0
        %4458 = vmatpush2.msra.mxu0 0.0
        %4459 = vmatprep.mubr.f32.mxu0 0.0
        %4460 = vmatmul.mubr.f32.gmra.mxu0 %v4375
        %v4461 = vpop.f32.mrf.mxu0
        %v4462 = vadd.f32 0.0, %v4461
        %v4463 = vpop.f32.mrf.mxu0
        %4464 = vdwg.mxu0
        %v4465 = vadd.f32 %v4302, %v4462
        %s4466 = scalar_lea.vmem %s6, 6
        %v4467 = vld [vmem:[%s4466] sm:$0x1]
        %v4469 = vsel %vm3489, %v4467, 0
        %4471 = vmatprep.subr.mxu0 0.0
        %4472 = vmatpush1.msra.mxu0 0.0
        %4473 = vmatprep.subr.mxu0 0.0
        %4474 = vmatpush1.msra.mxu0 0.0
        %4475 = vmatprep.subr.mxu0 0.0
        %4476 = vmatpush1.msra.mxu0 0.0
        %4477 = vmatprep.subr.mxu0 0.0
        %4478 = vmatpush1.msra.mxu0 0.0
        %4479 = vmatprep.subr.mxu0 0.0
        %4480 = vmatpush1.msra.mxu0 0.0
        %4481 = vmatprep.subr.mxu0 0.0
        %4482 = vmatpush1.msra.mxu0 0.0
        %4483 = vmatprep.subr.mxu0 0.0
        %4484 = vmatpush1.msra.mxu0 0.0
        %4485 = vmatprep.subr.mxu0 0.0
        %4486 = vmatpush1.msra.mxu0 0.0
        %4487 = vmatprep.subr.mxu0 0.0
        %4488 = vmatpush1.msra.mxu0 0.0
        %4489 = vmatprep.subr.mxu0 0.0
        %4490 = vmatpush1.msra.mxu0 0.0
        %4491 = vmatprep.subr.mxu0 0.0
        %4492 = vmatpush1.msra.mxu0 0.0
        %4493 = vmatprep.subr.mxu0 0.0
        %4494 = vmatpush1.msra.mxu0 0.0
        %4495 = vmatprep.subr.mxu0 0.0
        %4496 = vmatpush1.msra.mxu0 0.0
        %4497 = vmatprep.subr.mxu0 0.0
        %4498 = vmatpush1.msra.mxu0 0.0
        %4499 = vmatprep.subr.mxu0 0.0
        %4500 = vmatpush1.msra.mxu0 %v3494
        %4501 = vmatprep.subr.mxu0 0.0
        %4502 = vmatpush1.msra.mxu0 %v3486
        %4503 = vmatprep.subr.mxu0 0.0
        %4504 = vmatpush2.msra.mxu0 0.0
        %4505 = vmatprep.subr.mxu0 0.0
        %4506 = vmatpush2.msra.mxu0 0.0
        %4507 = vmatprep.subr.mxu0 0.0
        %4508 = vmatpush2.msra.mxu0 0.0
        %4509 = vmatprep.subr.mxu0 0.0
        %4510 = vmatpush2.msra.mxu0 0.0
        %4511 = vmatprep.subr.mxu0 0.0
        %4512 = vmatpush2.msra.mxu0 0.0
        %4513 = vmatprep.subr.mxu0 0.0
        %4514 = vmatpush2.msra.mxu0 0.0
        %4515 = vmatprep.subr.mxu0 0.0
        %4516 = vmatpush2.msra.mxu0 0.0
        %4517 = vmatprep.subr.mxu0 0.0
        %4518 = vmatpush2.msra.mxu0 0.0
        %4519 = vmatprep.subr.mxu0 0.0
        %4520 = vmatpush2.msra.mxu0 0.0
        %4521 = vmatprep.subr.mxu0 0.0
        %4522 = vmatpush2.msra.mxu0 0.0
        %4523 = vmatprep.subr.mxu0 0.0
        %4524 = vmatpush2.msra.mxu0 0.0
        %4525 = vmatprep.subr.mxu0 0.0
        %4526 = vmatpush2.msra.mxu0 0.0
        %4527 = vmatprep.subr.mxu0 0.0
        %4528 = vmatpush2.msra.mxu0 0.0
        %4529 = vmatprep.subr.mxu0 0.0
        %4530 = vmatpush2.msra.mxu0 0.0
        %4531 = vmatprep.subr.mxu0 0.0
        %4532 = vmatpush2.msra.mxu0 0.0
        %4533 = vmatprep.subr.mxu0 0.0
        %4534 = vmatpush2.msra.mxu0 0.0
        %4535 = vmatprep.mubr.f32.mxu0 0.0
        %4536 = vmatmul.mubr.f32.gmra.mxu0 %v4469
        %v4537 = vpop.f32.mrf.mxu0
        %v4538 = vadd.f32 0.0, %v4537
        %v4539 = vpop.f32.mrf.mxu0
        %4540 = vdwg.mxu0
        %s4541 = scalar_lea.vmem %s7, 768
        %v4542 = vld [vmem:[%s4541] sm:$0xff]
        %v4543 = vld [vmem:[%s4541 + $0x8] sm:$0xff]
        %v4544 = vld [vmem:[%s4541 + $0x10] sm:$0xff]
        %v4545 = vld [vmem:[%s4541 + $0x18] sm:$0xff]
        %v4546 = vld [vmem:[%s4541 + $0x20] sm:$0xff]
        %v4547 = vld [vmem:[%s4541 + $0x28] sm:$0xff]
        %v4548 = vld [vmem:[%s4541 + $0x30] sm:$0xff]
        %v4549 = vld [vmem:[%s4541 + $0x38] sm:$0xff]
        %v4550 = vld [vmem:[%s4541 + $0x40] sm:$0xff]
        %v4551 = vld [vmem:[%s4541 + $0x48] sm:$0xff]
        %v4552 = vld [vmem:[%s4541 + $0x50] sm:$0xff]
        %v4553 = vld [vmem:[%s4541 + $0x58] sm:$0xff]
        %v4554 = vld [vmem:[%s4541 + $0x60] sm:$0xff]
        %v4555 = vld [vmem:[%s4541 + $0x68] sm:$0xff]
        %v4556 = vld [vmem:[%s4541 + $0x70] sm:$0xff]
        %v4557 = vld [vmem:[%s4541 + $0x78] sm:$0xff]
        %4558 = vmatprep.subr.mxu0 0.0
        %4559 = vmatpush1.msra.mxu0 %v4557
        %4560 = vmatprep.subr.mxu0 0.0
        %4561 = vmatpush1.msra.mxu0 %v4556
        %4562 = vmatprep.subr.mxu0 0.0
        %4563 = vmatpush1.msra.mxu0 %v4555
        %4564 = vmatprep.subr.mxu0 0.0
        %4565 = vmatpush1.msra.mxu0 %v4554
        %4566 = vmatprep.subr.mxu0 0.0
        %4567 = vmatpush1.msra.mxu0 %v4553
        %4568 = vmatprep.subr.mxu0 0.0
        %4569 = vmatpush1.msra.mxu0 %v4552
        %4570 = vmatprep.subr.mxu0 0.0
        %4571 = vmatpush1.msra.mxu0 %v4551
        %4572 = vmatprep.subr.mxu0 0.0
        %4573 = vmatpush1.msra.mxu0 %v4550
        %4574 = vmatprep.subr.mxu0 0.0
        %4575 = vmatpush1.msra.mxu0 %v4549
        %4576 = vmatprep.subr.mxu0 0.0
        %4577 = vmatpush1.msra.mxu0 %v4548
        %4578 = vmatprep.subr.mxu0 0.0
        %4579 = vmatpush1.msra.mxu0 %v4547
        %4580 = vmatprep.subr.mxu0 0.0
        %4581 = vmatpush1.msra.mxu0 %v4546
        %4582 = vmatprep.subr.mxu0 0.0
        %4583 = vmatpush1.msra.mxu0 %v4545
        %4584 = vmatprep.subr.mxu0 0.0
        %4585 = vmatpush1.msra.mxu0 %v4544
        %4586 = vmatprep.subr.mxu0 0.0
        %4587 = vmatpush1.msra.mxu0 %v4543
        %4588 = vmatprep.subr.mxu0 0.0
        %4589 = vmatpush1.msra.mxu0 %v4542
        %4590 = vmatprep.subr.mxu0 0.0
        %4591 = vmatpush2.msra.mxu0 0.0
        %4592 = vmatprep.subr.mxu0 0.0
        %4593 = vmatpush2.msra.mxu0 0.0
        %4594 = vmatprep.subr.mxu0 0.0
        %4595 = vmatpush2.msra.mxu0 0.0
        %4596 = vmatprep.subr.mxu0 0.0
        %4597 = vmatpush2.msra.mxu0 0.0
        %4598 = vmatprep.subr.mxu0 0.0
        %4599 = vmatpush2.msra.mxu0 0.0
        %4600 = vmatprep.subr.mxu0 0.0
        %4601 = vmatpush2.msra.mxu0 0.0
        %4602 = vmatprep.subr.mxu0 0.0
        %4603 = vmatpush2.msra.mxu0 0.0
        %4604 = vmatprep.subr.mxu0 0.0
        %4605 = vmatpush2.msra.mxu0 0.0
        %4606 = vmatprep.subr.mxu0 0.0
        %4607 = vmatpush2.msra.mxu0 0.0
        %4608 = vmatprep.subr.mxu0 0.0
        %4609 = vmatpush2.msra.mxu0 0.0
        %4610 = vmatprep.subr.mxu0 0.0
        %4611 = vmatpush2.msra.mxu0 0.0
        %4612 = vmatprep.subr.mxu0 0.0
        %4613 = vmatpush2.msra.mxu0 0.0
        %4614 = vmatprep.subr.mxu0 0.0
        %4615 = vmatpush2.msra.mxu0 0.0
        %4616 = vmatprep.subr.mxu0 0.0
        %4617 = vmatpush2.msra.mxu0 0.0
        %4618 = vmatprep.subr.mxu0 0.0
        %4619 = vmatpush2.msra.mxu0 0.0
        %4620 = vmatprep.subr.mxu0 0.0
        %4621 = vmatpush2.msra.mxu0 0.0
        %4622 = vmatprep.mubr.f32.mxu0 0.0
        %4623 = vmatmul.mubr.f32.gmra.mxu0 %v4538
        %v4624 = vpop.f32.mrf.mxu0
        %v4625 = vadd.f32 0.0, %v4624
        %v4626 = vpop.f32.mrf.mxu0
        %4627 = vdwg.mxu0
        %v4628 = vadd.f32 %v4465, %v4625
        %s4629 = scalar_lea.vmem %s6, 7
        %v4630 = vld [vmem:[%s4629] sm:$0x1]
        %v4632 = vsel %vm3489, %v4630, 0
        %4634 = vmatprep.subr.mxu0 0.0
        %4635 = vmatpush1.msra.mxu0 0.0
        %4636 = vmatprep.subr.mxu0 0.0
        %4637 = vmatpush1.msra.mxu0 0.0
        %4638 = vmatprep.subr.mxu0 0.0
        %4639 = vmatpush1.msra.mxu0 0.0
        %4640 = vmatprep.subr.mxu0 0.0
        %4641 = vmatpush1.msra.mxu0 0.0
        %4642 = vmatprep.subr.mxu0 0.0
        %4643 = vmatpush1.msra.mxu0 0.0
        %4644 = vmatprep.subr.mxu0 0.0
        %4645 = vmatpush1.msra.mxu0 0.0
        %4646 = vmatprep.subr.mxu0 0.0
        %4647 = vmatpush1.msra.mxu0 0.0
        %4648 = vmatprep.subr.mxu0 0.0
        %4649 = vmatpush1.msra.mxu0 0.0
        %4650 = vmatprep.subr.mxu0 0.0
        %4651 = vmatpush1.msra.mxu0 0.0
        %4652 = vmatprep.subr.mxu0 0.0
        %4653 = vmatpush1.msra.mxu0 0.0
        %4654 = vmatprep.subr.mxu0 0.0
        %4655 = vmatpush1.msra.mxu0 0.0
        %4656 = vmatprep.subr.mxu0 0.0
        %4657 = vmatpush1.msra.mxu0 0.0
        %4658 = vmatprep.subr.mxu0 0.0
        %4659 = vmatpush1.msra.mxu0 0.0
        %4660 = vmatprep.subr.mxu0 0.0
        %4661 = vmatpush1.msra.mxu0 0.0
        %4662 = vmatprep.subr.mxu0 0.0
        %4663 = vmatpush1.msra.mxu0 %v3494
        %4664 = vmatprep.subr.mxu0 0.0
        %4665 = vmatpush1.msra.mxu0 %v3486
        %4666 = vmatprep.subr.mxu0 0.0
        %4667 = vmatpush2.msra.mxu0 0.0
        %4668 = vmatprep.subr.mxu0 0.0
        %4669 = vmatpush2.msra.mxu0 0.0
        %4670 = vmatprep.subr.mxu0 0.0
        %4671 = vmatpush2.msra.mxu0 0.0
        %4672 = vmatprep.subr.mxu0 0.0
        %4673 = vmatpush2.msra.mxu0 0.0
        %4674 = vmatprep.subr.mxu0 0.0
        %4675 = vmatpush2.msra.mxu0 0.0
        %4676 = vmatprep.subr.mxu0 0.0
        %4677 = vmatpush2.msra.mxu0 0.0
        %4678 = vmatprep.subr.mxu0 0.0
        %4679 = vmatpush2.msra.mxu0 0.0
        %4680 = vmatprep.subr.mxu0 0.0
        %4681 = vmatpush2.msra.mxu0 0.0
        %4682 = vmatprep.subr.mxu0 0.0
        %4683 = vmatpush2.msra.mxu0 0.0
        %4684 = vmatprep.subr.mxu0 0.0
        %4685 = vmatpush2.msra.mxu0 0.0
        %4686 = vmatprep.subr.mxu0 0.0
        %4687 = vmatpush2.msra.mxu0 0.0
        %4688 = vmatprep.subr.mxu0 0.0
        %4689 = vmatpush2.msra.mxu0 0.0
        %4690 = vmatprep.subr.mxu0 0.0
        %4691 = vmatpush2.msra.mxu0 0.0
        %4692 = vmatprep.subr.mxu0 0.0
        %4693 = vmatpush2.msra.mxu0 0.0
        %4694 = vmatprep.subr.mxu0 0.0
        %4695 = vmatpush2.msra.mxu0 0.0
        %4696 = vmatprep.subr.mxu0 0.0
        %4697 = vmatpush2.msra.mxu0 0.0
        %4698 = vmatprep.mubr.f32.mxu0 0.0
        %4699 = vmatmul.mubr.f32.gmra.mxu0 %v4632
        %v4700 = vpop.f32.mrf.mxu0
        %v4701 = vadd.f32 0.0, %v4700
        %v4702 = vpop.f32.mrf.mxu0
        %4703 = vdwg.mxu0
        %s4704 = scalar_lea.vmem %s7, 896
        %v4705 = vld [vmem:[%s4704] sm:$0xff]
        %v4706 = vld [vmem:[%s4704 + $0x8] sm:$0xff]
        %v4707 = vld [vmem:[%s4704 + $0x10] sm:$0xff]
        %v4708 = vld [vmem:[%s4704 + $0x18] sm:$0xff]
        %v4709 = vld [vmem:[%s4704 + $0x20] sm:$0xff]
        %v4710 = vld [vmem:[%s4704 + $0x28] sm:$0xff]
        %v4711 = vld [vmem:[%s4704 + $0x30] sm:$0xff]
        %v4712 = vld [vmem:[%s4704 + $0x38] sm:$0xff]
        %v4713 = vld [vmem:[%s4704 + $0x40] sm:$0xff]
        %v4714 = vld [vmem:[%s4704 + $0x48] sm:$0xff]
        %v4715 = vld [vmem:[%s4704 + $0x50] sm:$0xff]
        %v4716 = vld [vmem:[%s4704 + $0x58] sm:$0xff]
        %v4717 = vld [vmem:[%s4704 + $0x60] sm:$0xff]
        %v4718 = vld [vmem:[%s4704 + $0x68] sm:$0xff]
        %v4719 = vld [vmem:[%s4704 + $0x70] sm:$0xff]
        %v4720 = vld [vmem:[%s4704 + $0x78] sm:$0xff]
        %4721 = vmatprep.subr.mxu0 0.0
        %4722 = vmatpush1.msra.mxu0 %v4720
        %4723 = vmatprep.subr.mxu0 0.0
        %4724 = vmatpush1.msra.mxu0 %v4719
        %4725 = vmatprep.subr.mxu0 0.0
        %4726 = vmatpush1.msra.mxu0 %v4718
        %4727 = vmatprep.subr.mxu0 0.0
        %4728 = vmatpush1.msra.mxu0 %v4717
        %4729 = vmatprep.subr.mxu0 0.0
        %4730 = vmatpush1.msra.mxu0 %v4716
        %4731 = vmatprep.subr.mxu0 0.0
        %4732 = vmatpush1.msra.mxu0 %v4715
        %4733 = vmatprep.subr.mxu0 0.0
        %4734 = vmatpush1.msra.mxu0 %v4714
        %4735 = vmatprep.subr.mxu0 0.0
        %4736 = vmatpush1.msra.mxu0 %v4713
        %4737 = vmatprep.subr.mxu0 0.0
        %4738 = vmatpush1.msra.mxu0 %v4712
        %4739 = vmatprep.subr.mxu0 0.0
        %4740 = vmatpush1.msra.mxu0 %v4711
        %4741 = vmatprep.subr.mxu0 0.0
        %4742 = vmatpush1.msra.mxu0 %v4710
        %4743 = vmatprep.subr.mxu0 0.0
        %4744 = vmatpush1.msra.mxu0 %v4709
        %4745 = vmatprep.subr.mxu0 0.0
        %4746 = vmatpush1.msra.mxu0 %v4708
        %4747 = vmatprep.subr.mxu0 0.0
        %4748 = vmatpush1.msra.mxu0 %v4707
        %4749 = vmatprep.subr.mxu0 0.0
        %4750 = vmatpush1.msra.mxu0 %v4706
        %4751 = vmatprep.subr.mxu0 0.0
        %4752 = vmatpush1.msra.mxu0 %v4705
        %4753 = vmatprep.subr.mxu0 0.0
        %4754 = vmatpush2.msra.mxu0 0.0
        %4755 = vmatprep.subr.mxu0 0.0
        %4756 = vmatpush2.msra.mxu0 0.0
        %4757 = vmatprep.subr.mxu0 0.0
        %4758 = vmatpush2.msra.mxu0 0.0
        %4759 = vmatprep.subr.mxu0 0.0
        %4760 = vmatpush2.msra.mxu0 0.0
        %4761 = vmatprep.subr.mxu0 0.0
        %4762 = vmatpush2.msra.mxu0 0.0
        %4763 = vmatprep.subr.mxu0 0.0
        %4764 = vmatpush2.msra.mxu0 0.0
        %4765 = vmatprep.subr.mxu0 0.0
        %4766 = vmatpush2.msra.mxu0 0.0
        %4767 = vmatprep.subr.mxu0 0.0
        %4768 = vmatpush2.msra.mxu0 0.0
        %4769 = vmatprep.subr.mxu0 0.0
        %4770 = vmatpush2.msra.mxu0 0.0
        %4771 = vmatprep.subr.mxu0 0.0
        %4772 = vmatpush2.msra.mxu0 0.0
        %4773 = vmatprep.subr.mxu0 0.0
        %4774 = vmatpush2.msra.mxu0 0.0
        %4775 = vmatprep.subr.mxu0 0.0
        %4776 = vmatpush2.msra.mxu0 0.0
        %4777 = vmatprep.subr.mxu0 0.0
        %4778 = vmatpush2.msra.mxu0 0.0
        %4779 = vmatprep.subr.mxu0 0.0
        %4780 = vmatpush2.msra.mxu0 0.0
        %4781 = vmatprep.subr.mxu0 0.0
        %4782 = vmatpush2.msra.mxu0 0.0
        %4783 = vmatprep.subr.mxu0 0.0
        %4784 = vmatpush2.msra.mxu0 0.0
        %4785 = vmatprep.mubr.f32.mxu0 0.0
        %4786 = vmatmul.mubr.f32.gmra.mxu0 %v4701
        %v4787 = vpop.f32.mrf.mxu0
        %v4788 = vadd.f32 0.0, %v4787
        %v4789 = vpop.f32.mrf.mxu0
        %4790 = vdwg.mxu0
        %v4791 = vadd.f32 %v4628, %v4788
        %s4792 = scalar_lea.vmem %s6, 8
        %v4793 = vld [vmem:[%s4792] sm:$0x1]
        %v4795 = vsel %vm3489, %v4793, 0
        %4797 = vmatprep.subr.mxu0 0.0
        %4798 = vmatpush1.msra.mxu0 0.0
        %4799 = vmatprep.subr.mxu0 0.0
        %4800 = vmatpush1.msra.mxu0 0.0
        %4801 = vmatprep.subr.mxu0 0.0
        %4802 = vmatpush1.msra.mxu0 0.0
        %4803 = vmatprep.subr.mxu0 0.0
        %4804 = vmatpush1.msra.mxu0 0.0
        %4805 = vmatprep.subr.mxu0 0.0
        %4806 = vmatpush1.msra.mxu0 0.0
        %4807 = vmatprep.subr.mxu0 0.0
        %4808 = vmatpush1.msra.mxu0 0.0
        %4809 = vmatprep.subr.mxu0 0.0
        %4810 = vmatpush1.msra.mxu0 0.0
        %4811 = vmatprep.subr.mxu0 0.0
        %4812 = vmatpush1.msra.mxu0 0.0
        %4813 = vmatprep.subr.mxu0 0.0
        %4814 = vmatpush1.msra.mxu0 0.0
        %4815 = vmatprep.subr.mxu0 0.0
        %4816 = vmatpush1.msra.mxu0 0.0
        %4817 = vmatprep.subr.mxu0 0.0
        %4818 = vmatpush1.msra.mxu0 0.0
        %4819 = vmatprep.subr.mxu0 0.0
        %4820 = vmatpush1.msra.mxu0 0.0
        %4821 = vmatprep.subr.mxu0 0.0
        %4822 = vmatpush1.msra.mxu0 0.0
        %4823 = vmatprep.subr.mxu0 0.0
        %4824 = vmatpush1.msra.mxu0 0.0
        %4825 = vmatprep.subr.mxu0 0.0
        %4826 = vmatpush1.msra.mxu0 %v3494
        %4827 = vmatprep.subr.mxu0 0.0
        %4828 = vmatpush1.msra.mxu0 %v3486
        %4829 = vmatprep.subr.mxu0 0.0
        %4830 = vmatpush2.msra.mxu0 0.0
        %4831 = vmatprep.subr.mxu0 0.0
        %4832 = vmatpush2.msra.mxu0 0.0
        %4833 = vmatprep.subr.mxu0 0.0
        %4834 = vmatpush2.msra.mxu0 0.0
        %4835 = vmatprep.subr.mxu0 0.0
        %4836 = vmatpush2.msra.mxu0 0.0
        %4837 = vmatprep.subr.mxu0 0.0
        %4838 = vmatpush2.msra.mxu0 0.0
        %4839 = vmatprep.subr.mxu0 0.0
        %4840 = vmatpush2.msra.mxu0 0.0
        %4841 = vmatprep.subr.mxu0 0.0
        %4842 = vmatpush2.msra.mxu0 0.0
        %4843 = vmatprep.subr.mxu0 0.0
        %4844 = vmatpush2.msra.mxu0 0.0
        %4845 = vmatprep.subr.mxu0 0.0
        %4846 = vmatpush2.msra.mxu0 0.0
        %4847 = vmatprep.subr.mxu0 0.0
        %4848 = vmatpush2.msra.mxu0 0.0
        %4849 = vmatprep.subr.mxu0 0.0
        %4850 = vmatpush2.msra.mxu0 0.0
        %4851 = vmatprep.subr.mxu0 0.0
        %4852 = vmatpush2.msra.mxu0 0.0
        %4853 = vmatprep.subr.mxu0 0.0
        %4854 = vmatpush2.msra.mxu0 0.0
        %4855 = vmatprep.subr.mxu0 0.0
        %4856 = vmatpush2.msra.mxu0 0.0
        %4857 = vmatprep.subr.mxu0 0.0
        %4858 = vmatpush2.msra.mxu0 0.0
        %4859 = vmatprep.subr.mxu0 0.0
        %4860 = vmatpush2.msra.mxu0 0.0
        %4861 = vmatprep.mubr.f32.mxu0 0.0
        %4862 = vmatmul.mubr.f32.gmra.mxu0 %v4795
        %v4863 = vpop.f32.mrf.mxu0
        %v4864 = vadd.f32 0.0, %v4863
        %v4865 = vpop.f32.mrf.mxu0
        %4866 = vdwg.mxu0
        %s4867 = scalar_lea.vmem %s7, 1024
        %v4868 = vld [vmem:[%s4867] sm:$0xff]
        %v4869 = vld [vmem:[%s4867 + $0x8] sm:$0xff]
        %v4870 = vld [vmem:[%s4867 + $0x10] sm:$0xff]
        %v4871 = vld [vmem:[%s4867 + $0x18] sm:$0xff]
        %v4872 = vld [vmem:[%s4867 + $0x20] sm:$0xff]
        %v4873 = vld [vmem:[%s4867 + $0x28] sm:$0xff]
        %v4874 = vld [vmem:[%s4867 + $0x30] sm:$0xff]
        %v4875 = vld [vmem:[%s4867 + $0x38] sm:$0xff]
        %v4876 = vld [vmem:[%s4867 + $0x40] sm:$0xff]
        %v4877 = vld [vmem:[%s4867 + $0x48] sm:$0xff]
        %v4878 = vld [vmem:[%s4867 + $0x50] sm:$0xff]
        %v4879 = vld [vmem:[%s4867 + $0x58] sm:$0xff]
        %v4880 = vld [vmem:[%s4867 + $0x60] sm:$0xff]
        %v4881 = vld [vmem:[%s4867 + $0x68] sm:$0xff]
        %v4882 = vld [vmem:[%s4867 + $0x70] sm:$0xff]
        %v4883 = vld [vmem:[%s4867 + $0x78] sm:$0xff]
        %4884 = vmatprep.subr.mxu0 0.0
        %4885 = vmatpush1.msra.mxu0 %v4883
        %4886 = vmatprep.subr.mxu0 0.0
        %4887 = vmatpush1.msra.mxu0 %v4882
        %4888 = vmatprep.subr.mxu0 0.0
        %4889 = vmatpush1.msra.mxu0 %v4881
        %4890 = vmatprep.subr.mxu0 0.0
        %4891 = vmatpush1.msra.mxu0 %v4880
        %4892 = vmatprep.subr.mxu0 0.0
        %4893 = vmatpush1.msra.mxu0 %v4879
        %4894 = vmatprep.subr.mxu0 0.0
        %4895 = vmatpush1.msra.mxu0 %v4878
        %4896 = vmatprep.subr.mxu0 0.0
        %4897 = vmatpush1.msra.mxu0 %v4877
        %4898 = vmatprep.subr.mxu0 0.0
        %4899 = vmatpush1.msra.mxu0 %v4876
        %4900 = vmatprep.subr.mxu0 0.0
        %4901 = vmatpush1.msra.mxu0 %v4875
        %4902 = vmatprep.subr.mxu0 0.0
        %4903 = vmatpush1.msra.mxu0 %v4874
        %4904 = vmatprep.subr.mxu0 0.0
        %4905 = vmatpush1.msra.mxu0 %v4873
        %4906 = vmatprep.subr.mxu0 0.0
        %4907 = vmatpush1.msra.mxu0 %v4872
        %4908 = vmatprep.subr.mxu0 0.0
        %4909 = vmatpush1.msra.mxu0 %v4871
        %4910 = vmatprep.subr.mxu0 0.0
        %4911 = vmatpush1.msra.mxu0 %v4870
        %4912 = vmatprep.subr.mxu0 0.0
        %4913 = vmatpush1.msra.mxu0 %v4869
        %4914 = vmatprep.subr.mxu0 0.0
        %4915 = vmatpush1.msra.mxu0 %v4868
        %4916 = vmatprep.subr.mxu0 0.0
        %4917 = vmatpush2.msra.mxu0 0.0
        %4918 = vmatprep.subr.mxu0 0.0
        %4919 = vmatpush2.msra.mxu0 0.0
        %4920 = vmatprep.subr.mxu0 0.0
        %4921 = vmatpush2.msra.mxu0 0.0
        %4922 = vmatprep.subr.mxu0 0.0
        %4923 = vmatpush2.msra.mxu0 0.0
        %4924 = vmatprep.subr.mxu0 0.0
        %4925 = vmatpush2.msra.mxu0 0.0
        %4926 = vmatprep.subr.mxu0 0.0
        %4927 = vmatpush2.msra.mxu0 0.0
        %4928 = vmatprep.subr.mxu0 0.0
        %4929 = vmatpush2.msra.mxu0 0.0
        %4930 = vmatprep.subr.mxu0 0.0
        %4931 = vmatpush2.msra.mxu0 0.0
        %4932 = vmatprep.subr.mxu0 0.0
        %4933 = vmatpush2.msra.mxu0 0.0
        %4934 = vmatprep.subr.mxu0 0.0
        %4935 = vmatpush2.msra.mxu0 0.0
        %4936 = vmatprep.subr.mxu0 0.0
        %4937 = vmatpush2.msra.mxu0 0.0
        %4938 = vmatprep.subr.mxu0 0.0
        %4939 = vmatpush2.msra.mxu0 0.0
        %4940 = vmatprep.subr.mxu0 0.0
        %4941 = vmatpush2.msra.mxu0 0.0
        %4942 = vmatprep.subr.mxu0 0.0
        %4943 = vmatpush2.msra.mxu0 0.0
        %4944 = vmatprep.subr.mxu0 0.0
        %4945 = vmatpush2.msra.mxu0 0.0
        %4946 = vmatprep.subr.mxu0 0.0
        %4947 = vmatpush2.msra.mxu0 0.0
        %4948 = vmatprep.mubr.f32.mxu0 0.0
        %4949 = vmatmul.mubr.f32.gmra.mxu0 %v4864
        %v4950 = vpop.f32.mrf.mxu0
        %v4951 = vadd.f32 0.0, %v4950
        %v4952 = vpop.f32.mrf.mxu0
        %4953 = vdwg.mxu0
        %v4954 = vadd.f32 %v4791, %v4951
        %v4955 = vld [vmem:[%s8] sm:$0x1]
        %v4956 = vadd.f32 %v4954, %v4955
        %v4957 = vmax.f32 %v4956, 0.0
        %v4958 = vld [vmem:[%s9] sm:$0xff]
        %v4959 = vld [vmem:[%s9 + $0x8] sm:$0xff]
        %v4960 = vld [vmem:[%s9 + $0x10] sm:$0xff]
        %v4961 = vld [vmem:[%s9 + $0x18] sm:$0xff]
        %v4962 = vld [vmem:[%s9 + $0x20] sm:$0xff]
        %v4963 = vld [vmem:[%s9 + $0x28] sm:$0xff]
        %v4964 = vld [vmem:[%s9 + $0x30] sm:$0xff]
        %v4965 = vld [vmem:[%s9 + $0x38] sm:$0xff]
        %v4966 = vld [vmem:[%s9 + $0x40] sm:$0xff]
        %v4967 = vld [vmem:[%s9 + $0x48] sm:$0xff]
        %v4968 = vld [vmem:[%s9 + $0x50] sm:$0xff]
        %v4969 = vld [vmem:[%s9 + $0x58] sm:$0xff]
        %v4970 = vld [vmem:[%s9 + $0x60] sm:$0xff]
        %v4971 = vld [vmem:[%s9 + $0x68] sm:$0xff]
        %v4972 = vld [vmem:[%s9 + $0x70] sm:$0xff]
        %v4973 = vld [vmem:[%s9 + $0x78] sm:$0xff]
        %v4974 = vld [vmem:[%s9 + $0x80] sm:$0xff]
        %v4975 = vld [vmem:[%s9 + $0x88] sm:$0xff]
        %v4976 = vld [vmem:[%s9 + $0x90] sm:$0xff]
        %v4977 = vld [vmem:[%s9 + $0x98] sm:$0xff]
        %v4978 = vld [vmem:[%s9 + $0xa0] sm:$0xff]
        %v4979 = vld [vmem:[%s9 + $0xa8] sm:$0xff]
        %v4980 = vld [vmem:[%s9 + $0xb0] sm:$0xff]
        %v4981 = vld [vmem:[%s9 + $0xb8] sm:$0xff]
        %v4982 = vld [vmem:[%s9 + $0xc0] sm:$0xff]
        %v4983 = vld [vmem:[%s9 + $0xc8] sm:$0xff]
        %v4984 = vld [vmem:[%s9 + $0xd0] sm:$0xff]
        %v4985 = vld [vmem:[%s9 + $0xd8] sm:$0xff]
        %v4986 = vld [vmem:[%s9 + $0xe0] sm:$0xff]
        %v4987 = vld [vmem:[%s9 + $0xe8] sm:$0xff]
        %v4988 = vld [vmem:[%s9 + $0xf0] sm:$0xff]
        %v4989 = vld [vmem:[%s9 + $0xf8] sm:$0xff]
        %v4990 = vld [vmem:[%s9 + $0x100] sm:$0xff]
        %v4991 = vld [vmem:[%s9 + $0x108] sm:$0xff]
        %v4992 = vld [vmem:[%s9 + $0x110] sm:$0xff]
        %v4993 = vld [vmem:[%s9 + $0x118] sm:$0xff]
        %v4994 = vld [vmem:[%s9 + $0x120] sm:$0xff]
        %v4995 = vld [vmem:[%s9 + $0x128] sm:$0xff]
        %v4996 = vld [vmem:[%s9 + $0x130] sm:$0xff]
        %v4997 = vld [vmem:[%s9 + $0x138] sm:$0xff]
        %v4998 = vld [vmem:[%s9 + $0x140] sm:$0xff]
        %v4999 = vld [vmem:[%s9 + $0x148] sm:$0xff]
        %v5000 = vld [vmem:[%s9 + $0x150] sm:$0xff]
        %v5001 = vld [vmem:[%s9 + $0x158] sm:$0xff]
        %v5002 = vld [vmem:[%s9 + $0x160] sm:$0xff]
        %v5003 = vld [vmem:[%s9 + $0x168] sm:$0xff]
        %v5004 = vld [vmem:[%s9 + $0x170] sm:$0xff]
        %v5005 = vld [vmem:[%s9 + $0x178] sm:$0xff]
        %v5006 = vld [vmem:[%s9 + $0x180] sm:$0xff]
        %v5007 = vld [vmem:[%s9 + $0x188] sm:$0xff]
        %v5008 = vld [vmem:[%s9 + $0x190] sm:$0xff]
        %v5009 = vld [vmem:[%s9 + $0x198] sm:$0xff]
        %v5010 = vld [vmem:[%s9 + $0x1a0] sm:$0xff]
        %v5011 = vld [vmem:[%s9 + $0x1a8] sm:$0xff]
        %v5012 = vld [vmem:[%s9 + $0x1b0] sm:$0xff]
        %v5013 = vld [vmem:[%s9 + $0x1b8] sm:$0xff]
        %v5014 = vld [vmem:[%s9 + $0x1c0] sm:$0xff]
        %v5015 = vld [vmem:[%s9 + $0x1c8] sm:$0xff]
        %v5016 = vld [vmem:[%s9 + $0x1d0] sm:$0xff]
        %v5017 = vld [vmem:[%s9 + $0x1d8] sm:$0xff]
        %v5018 = vld [vmem:[%s9 + $0x1e0] sm:$0xff]
        %v5019 = vld [vmem:[%s9 + $0x1e8] sm:$0xff]
        %v5020 = vld [vmem:[%s9 + $0x1f0] sm:$0xff]
        %v5021 = vld [vmem:[%s9 + $0x1f8] sm:$0xff]
        %v5022 = vld [vmem:[%s10] sm:$0xf]
        %v5024 = vlaneseq
        %v5025 = vshrl.u32 %v5024, 7
        %v5026 = vsub.s32 0, %v5025
        %v5027 = vrot.slane %v5022, %v5026
        %v5028 = vlaneseq
        %v5029 = vshrl.u32 %v5028, 7
        %v5030 = vsub.s32 1, %v5029
        %v5031 = vrot.slane %v5022, %v5030
        %v5032 = vlaneseq
        %v5033 = vshrl.u32 %v5032, 7
        %v5034 = vsub.s32 2, %v5033
        %v5035 = vrot.slane %v5022, %v5034
        %v5036 = vlaneseq
        %v5037 = vshrl.u32 %v5036, 7
        %v5038 = vsub.s32 3, %v5037
        %v5039 = vrot.slane %v5022, %v5038
        %5044 = vmatprep.subr.mxu0 %v5019
        %5045 = vmatpush1.msra.mxu0 %v5018
        %5046 = vmatprep.subr.mxu0 %v5015
        %5047 = vmatpush1.msra.mxu0 %v5014
        %5048 = vmatprep.subr.mxu0 %v5011
        %5049 = vmatpush1.msra.mxu0 %v5010
        %5050 = vmatprep.subr.mxu0 %v5007
        %5051 = vmatpush1.msra.mxu0 %v5006
        %5052 = vmatprep.subr.mxu0 %v5003
        %5053 = vmatpush1.msra.mxu0 %v5002
        %5054 = vmatprep.subr.mxu0 %v4999
        %5055 = vmatpush1.msra.mxu0 %v4998
        %5056 = vmatprep.subr.mxu0 %v4995
        %5057 = vmatpush1.msra.mxu0 %v4994
        %5058 = vmatprep.subr.mxu0 %v4991
        %5059 = vmatpush1.msra.mxu0 %v4990
        %5060 = vmatprep.subr.mxu0 %v4987
        %5061 = vmatpush1.msra.mxu0 %v4986
        %5062 = vmatprep.subr.mxu0 %v4983
        %5063 = vmatpush1.msra.mxu0 %v4982
        %5064 = vmatprep.subr.mxu0 %v4979
        %5065 = vmatpush1.msra.mxu0 %v4978
        %5066 = vmatprep.subr.mxu0 %v4975
        %5067 = vmatpush1.msra.mxu0 %v4974
        %5068 = vmatprep.subr.mxu0 %v4971
        %5069 = vmatpush1.msra.mxu0 %v4970
        %5070 = vmatprep.subr.mxu0 %v4967
        %5071 = vmatpush1.msra.mxu0 %v4966
        %5072 = vmatprep.subr.mxu0 %v4963
        %5073 = vmatpush1.msra.mxu0 %v4962
        %5074 = vmatprep.subr.mxu0 %v4959
        %5075 = vmatpush1.msra.mxu0 %v4958
        %5076 = vmatprep.subr.mxu0 0.0
        %5077 = vmatpush2.msra.mxu0 0.0
        %5078 = vmatprep.subr.mxu0 0.0
        %5079 = vmatpush2.msra.mxu0 0.0
        %5080 = vmatprep.subr.mxu0 0.0
        %5081 = vmatpush2.msra.mxu0 0.0
        %5082 = vmatprep.subr.mxu0 0.0
        %5083 = vmatpush2.msra.mxu0 0.0
        %5084 = vmatprep.subr.mxu0 0.0
        %5085 = vmatpush2.msra.mxu0 0.0
        %5086 = vmatprep.subr.mxu0 0.0
        %5087 = vmatpush2.msra.mxu0 0.0
        %5088 = vmatprep.subr.mxu0 0.0
        %5089 = vmatpush2.msra.mxu0 0.0
        %5090 = vmatprep.subr.mxu0 0.0
        %5091 = vmatpush2.msra.mxu0 0.0
        %5092 = vmatprep.subr.mxu0 0.0
        %5093 = vmatpush2.msra.mxu0 0.0
        %5094 = vmatprep.subr.mxu0 0.0
        %5095 = vmatpush2.msra.mxu0 0.0
        %5096 = vmatprep.subr.mxu0 0.0
        %5097 = vmatpush2.msra.mxu0 0.0
        %5098 = vmatprep.subr.mxu0 0.0
        %5099 = vmatpush2.msra.mxu0 0.0
        %5100 = vmatprep.subr.mxu0 0.0
        %5101 = vmatpush2.msra.mxu0 0.0
        %5102 = vmatprep.subr.mxu0 0.0
        %5103 = vmatpush2.msra.mxu0 0.0
        %5104 = vmatprep.subr.mxu0 0.0
        %5105 = vmatpush2.msra.mxu0 0.0
        %5106 = vmatprep.subr.mxu0 0.0
        %5107 = vmatpush2.msra.mxu0 0.0
        %5108 = vmatprep.mubr.f32.mxu0 0.0
        %5109 = vmatmul.mubr.f32.gmra.mxu0 %v4957
        %v5110 = vpop.f32.mrf.mxu0
        %v5111 = vadd.f32 %v5027, %v5110
        %v5112 = vpop.f32.mrf.mxu0
        %v5113 = vadd.f32 %v5031, %v5112
        %5114 = vdwg.mxu0
        %5115 = vmatprep.subr.mxu0 %v5021
        %5116 = vmatpush1.msra.mxu0 %v5020
        %5117 = vmatprep.subr.mxu0 %v5017
        %5118 = vmatpush1.msra.mxu0 %v5016
        %5119 = vmatprep.subr.mxu0 %v5013
        %5120 = vmatpush1.msra.mxu0 %v5012
        %5121 = vmatprep.subr.mxu0 %v5009
        %5122 = vmatpush1.msra.mxu0 %v5008
        %5123 = vmatprep.subr.mxu0 %v5005
        %5124 = vmatpush1.msra.mxu0 %v5004
        %5125 = vmatprep.subr.mxu0 %v5001
        %5126 = vmatpush1.msra.mxu0 %v5000
        %5127 = vmatprep.subr.mxu0 %v4997
        %5128 = vmatpush1.msra.mxu0 %v4996
        %5129 = vmatprep.subr.mxu0 %v4993
        %5130 = vmatpush1.msra.mxu0 %v4992
        %5131 = vmatprep.subr.mxu0 %v4989
        %5132 = vmatpush1.msra.mxu0 %v4988
        %5133 = vmatprep.subr.mxu0 %v4985
        %5134 = vmatpush1.msra.mxu0 %v4984
        %5135 = vmatprep.subr.mxu0 %v4981
        %5136 = vmatpush1.msra.mxu0 %v4980
        %5137 = vmatprep.subr.mxu0 %v4977
        %5138 = vmatpush1.msra.mxu0 %v4976
        %5139 = vmatprep.subr.mxu0 %v4973
        %5140 = vmatpush1.msra.mxu0 %v4972
        %5141 = vmatprep.subr.mxu0 %v4969
        %5142 = vmatpush1.msra.mxu0 %v4968
        %5143 = vmatprep.subr.mxu0 %v4965
        %5144 = vmatpush1.msra.mxu0 %v4964
        %5145 = vmatprep.subr.mxu0 %v4961
        %5146 = vmatpush1.msra.mxu0 %v4960
        %5147 = vmatprep.subr.mxu0 0.0
        %5148 = vmatpush2.msra.mxu0 0.0
        %5149 = vmatprep.subr.mxu0 0.0
        %5150 = vmatpush2.msra.mxu0 0.0
        %5151 = vmatprep.subr.mxu0 0.0
        %5152 = vmatpush2.msra.mxu0 0.0
        %5153 = vmatprep.subr.mxu0 0.0
        %5154 = vmatpush2.msra.mxu0 0.0
        %5155 = vmatprep.subr.mxu0 0.0
        %5156 = vmatpush2.msra.mxu0 0.0
        %5157 = vmatprep.subr.mxu0 0.0
        %5158 = vmatpush2.msra.mxu0 0.0
        %5159 = vmatprep.subr.mxu0 0.0
        %5160 = vmatpush2.msra.mxu0 0.0
        %5161 = vmatprep.subr.mxu0 0.0
        %5162 = vmatpush2.msra.mxu0 0.0
        %5163 = vmatprep.subr.mxu0 0.0
        %5164 = vmatpush2.msra.mxu0 0.0
        %5165 = vmatprep.subr.mxu0 0.0
        %5166 = vmatpush2.msra.mxu0 0.0
        %5167 = vmatprep.subr.mxu0 0.0
        %5168 = vmatpush2.msra.mxu0 0.0
        %5169 = vmatprep.subr.mxu0 0.0
        %5170 = vmatpush2.msra.mxu0 0.0
        %5171 = vmatprep.subr.mxu0 0.0
        %5172 = vmatpush2.msra.mxu0 0.0
        %5173 = vmatprep.subr.mxu0 0.0
        %5174 = vmatpush2.msra.mxu0 0.0
        %5175 = vmatprep.subr.mxu0 0.0
        %5176 = vmatpush2.msra.mxu0 0.0
        %5177 = vmatprep.subr.mxu0 0.0
        %5178 = vmatpush2.msra.mxu0 0.0
        %5179 = vmatprep.mubr.f32.mxu0 0.0
        %5180 = vmatmul.mubr.f32.gmra.mxu0 %v4957
        %v5181 = vpop.f32.mrf.mxu0
        %v5182 = vadd.f32 %v5035, %v5181
        %v5183 = vpop.f32.mrf.mxu0
        %v5184 = vadd.f32 %v5039, %v5183
        %5185 = vdwg.mxu0
        %v5186 = vmax.f32 %v5111, 0.0
        %v5187 = vmax.f32 %v5113, 0.0
        %v5188 = vmax.f32 %v5182, 0.0
        %v5189 = vmax.f32 %v5184, 0.0
        %v5190 = vld [vmem:[%s11] sm:$0xff]
        %v5191 = vld [vmem:[%s11 + $0x8] sm:$0xff]
        %v5192 = vld [vmem:[%s11 + $0x10] sm:$0xff]
        %v5193 = vld [vmem:[%s11 + $0x18] sm:$0xff]
        %v5194 = vld [vmem:[%s11 + $0x20] sm:$0xff]
        %v5195 = vld [vmem:[%s11 + $0x28] sm:$0xff]
        %v5196 = vld [vmem:[%s11 + $0x30] sm:$0xff]
        %v5197 = vld [vmem:[%s11 + $0x38] sm:$0xff]
        %v5198 = vld [vmem:[%s11 + $0x40] sm:$0xff]
        %v5199 = vld [vmem:[%s11 + $0x48] sm:$0xff]
        %v5200 = vld [vmem:[%s11 + $0x50] sm:$0xff]
        %v5201 = vld [vmem:[%s11 + $0x58] sm:$0xff]
        %v5202 = vld [vmem:[%s11 + $0x60] sm:$0xff]
        %v5203 = vld [vmem:[%s11 + $0x68] sm:$0xff]
        %v5204 = vld [vmem:[%s11 + $0x70] sm:$0xff]
        %v5205 = vld [vmem:[%s11 + $0x78] sm:$0xff]
        %v5206 = vld [vmem:[%s11 + $0x80] sm:$0xff]
        %v5207 = vld [vmem:[%s11 + $0x88] sm:$0xff]
        %v5208 = vld [vmem:[%s11 + $0x90] sm:$0xff]
        %v5209 = vld [vmem:[%s11 + $0x98] sm:$0xff]
        %v5210 = vld [vmem:[%s11 + $0xa0] sm:$0xff]
        %v5211 = vld [vmem:[%s11 + $0xa8] sm:$0xff]
        %v5212 = vld [vmem:[%s11 + $0xb0] sm:$0xff]
        %v5213 = vld [vmem:[%s11 + $0xb8] sm:$0xff]
        %v5214 = vld [vmem:[%s11 + $0xc0] sm:$0xff]
        %v5215 = vld [vmem:[%s11 + $0xc8] sm:$0xff]
        %v5216 = vld [vmem:[%s11 + $0xd0] sm:$0xff]
        %v5217 = vld [vmem:[%s11 + $0xd8] sm:$0xff]
        %v5218 = vld [vmem:[%s11 + $0xe0] sm:$0xff]
        %v5219 = vld [vmem:[%s11 + $0xe8] sm:$0xff]
        %v5220 = vld [vmem:[%s11 + $0xf0] sm:$0xff]
        %v5221 = vld [vmem:[%s11 + $0xf8] sm:$0xff]
        %v5222 = vld [vmem:[%s11 + $0x100] sm:$0xff]
        %v5223 = vld [vmem:[%s11 + $0x108] sm:$0xff]
        %v5224 = vld [vmem:[%s11 + $0x110] sm:$0xff]
        %v5225 = vld [vmem:[%s11 + $0x118] sm:$0xff]
        %v5226 = vld [vmem:[%s11 + $0x120] sm:$0xff]
        %v5227 = vld [vmem:[%s11 + $0x128] sm:$0xff]
        %v5228 = vld [vmem:[%s11 + $0x130] sm:$0xff]
        %v5229 = vld [vmem:[%s11 + $0x138] sm:$0xff]
        %v5230 = vld [vmem:[%s11 + $0x140] sm:$0xff]
        %v5231 = vld [vmem:[%s11 + $0x148] sm:$0xff]
        %v5232 = vld [vmem:[%s11 + $0x150] sm:$0xff]
        %v5233 = vld [vmem:[%s11 + $0x158] sm:$0xff]
        %v5234 = vld [vmem:[%s11 + $0x160] sm:$0xff]
        %v5235 = vld [vmem:[%s11 + $0x168] sm:$0xff]
        %v5236 = vld [vmem:[%s11 + $0x170] sm:$0xff]
        %v5237 = vld [vmem:[%s11 + $0x178] sm:$0xff]
        %v5238 = vld [vmem:[%s11 + $0x180] sm:$0xff]
        %v5239 = vld [vmem:[%s11 + $0x188] sm:$0xff]
        %v5240 = vld [vmem:[%s11 + $0x190] sm:$0xff]
        %v5241 = vld [vmem:[%s11 + $0x198] sm:$0xff]
        %v5242 = vld [vmem:[%s11 + $0x1a0] sm:$0xff]
        %v5243 = vld [vmem:[%s11 + $0x1a8] sm:$0xff]
        %v5244 = vld [vmem:[%s11 + $0x1b0] sm:$0xff]
        %v5245 = vld [vmem:[%s11 + $0x1b8] sm:$0xff]
        %v5246 = vld [vmem:[%s11 + $0x1c0] sm:$0xff]
        %v5247 = vld [vmem:[%s11 + $0x1c8] sm:$0xff]
        %v5248 = vld [vmem:[%s11 + $0x1d0] sm:$0xff]
        %v5249 = vld [vmem:[%s11 + $0x1d8] sm:$0xff]
        %v5250 = vld [vmem:[%s11 + $0x1e0] sm:$0xff]
        %v5251 = vld [vmem:[%s11 + $0x1e8] sm:$0xff]
        %v5252 = vld [vmem:[%s11 + $0x1f0] sm:$0xff]
        %v5253 = vld [vmem:[%s11 + $0x1f8] sm:$0xff]
        %v5254 = vld [vmem:[%s12] sm:$0x1]
        %5255 = vmatprep.subr.mxu0 0.0
        %5256 = vmatpush1.msra.mxu0 %v5205
        %5257 = vmatprep.subr.mxu0 0.0
        %5258 = vmatpush1.msra.mxu0 %v5204
        %5259 = vmatprep.subr.mxu0 0.0
        %5260 = vmatpush1.msra.mxu0 %v5203
        %5261 = vmatprep.subr.mxu0 0.0
        %5262 = vmatpush1.msra.mxu0 %v5202
        %5263 = vmatprep.subr.mxu0 0.0
        %5264 = vmatpush1.msra.mxu0 %v5201
        %5265 = vmatprep.subr.mxu0 0.0
        %5266 = vmatpush1.msra.mxu0 %v5200
        %5267 = vmatprep.subr.mxu0 0.0
        %5268 = vmatpush1.msra.mxu0 %v5199
        %5269 = vmatprep.subr.mxu0 0.0
        %5270 = vmatpush1.msra.mxu0 %v5198
        %5271 = vmatprep.subr.mxu0 0.0
        %5272 = vmatpush1.msra.mxu0 %v5197
        %5273 = vmatprep.subr.mxu0 0.0
        %5274 = vmatpush1.msra.mxu0 %v5196
        %5275 = vmatprep.subr.mxu0 0.0
        %5276 = vmatpush1.msra.mxu0 %v5195
        %5277 = vmatprep.subr.mxu0 0.0
        %5278 = vmatpush1.msra.mxu0 %v5194
        %5279 = vmatprep.subr.mxu0 0.0
        %5280 = vmatpush1.msra.mxu0 %v5193
        %5281 = vmatprep.subr.mxu0 0.0
        %5282 = vmatpush1.msra.mxu0 %v5192
        %5283 = vmatprep.subr.mxu0 0.0
        %5284 = vmatpush1.msra.mxu0 %v5191
        %5285 = vmatprep.subr.mxu0 0.0
        %5286 = vmatpush1.msra.mxu0 %v5190
        %5287 = vmatprep.subr.mxu0 0.0
        %5288 = vmatpush2.msra.mxu0 %v5221
        %5289 = vmatprep.subr.mxu0 0.0
        %5290 = vmatpush2.msra.mxu0 %v5220
        %5291 = vmatprep.subr.mxu0 0.0
        %5292 = vmatpush2.msra.mxu0 %v5219
        %5293 = vmatprep.subr.mxu0 0.0
        %5294 = vmatpush2.msra.mxu0 %v5218
        %5295 = vmatprep.subr.mxu0 0.0
        %5296 = vmatpush2.msra.mxu0 %v5217
        %5297 = vmatprep.subr.mxu0 0.0
        %5298 = vmatpush2.msra.mxu0 %v5216
        %5299 = vmatprep.subr.mxu0 0.0
        %5300 = vmatpush2.msra.mxu0 %v5215
        %5301 = vmatprep.subr.mxu0 0.0
        %5302 = vmatpush2.msra.mxu0 %v5214
        %5303 = vmatprep.subr.mxu0 0.0
        %5304 = vmatpush2.msra.mxu0 %v5213
        %5305 = vmatprep.subr.mxu0 0.0
        %5306 = vmatpush2.msra.mxu0 %v5212
        %5307 = vmatprep.subr.mxu0 0.0
        %5308 = vmatpush2.msra.mxu0 %v5211
        %5309 = vmatprep.subr.mxu0 0.0
        %5310 = vmatpush2.msra.mxu0 %v5210
        %5311 = vmatprep.subr.mxu0 0.0
        %5312 = vmatpush2.msra.mxu0 %v5209
        %5313 = vmatprep.subr.mxu0 0.0
        %5314 = vmatpush2.msra.mxu0 %v5208
        %5315 = vmatprep.subr.mxu0 0.0
        %5316 = vmatpush2.msra.mxu0 %v5207
        %5317 = vmatprep.subr.mxu0 0.0
        %5318 = vmatpush2.msra.mxu0 %v5206
        %5319 = vmatprep.mubr.f32.mxu0 %v5187
        %5320 = vmatmul.mubr.f32.gmra.mxu0 %v5186
        %v5321 = vpop.f32.mrf.mxu0
        %v5322 = vadd.f32 %v5254, %v5321
        %v5323 = vpop.f32.mrf.mxu0
        %5324 = vdwg.mxu0
        %5325 = vmatprep.subr.mxu0 0.0
        %5326 = vmatpush1.msra.mxu0 %v5237
        %5327 = vmatprep.subr.mxu0 0.0
        %5328 = vmatpush1.msra.mxu0 %v5236
        %5329 = vmatprep.subr.mxu0 0.0
        %5330 = vmatpush1.msra.mxu0 %v5235
        %5331 = vmatprep.subr.mxu0 0.0
        %5332 = vmatpush1.msra.mxu0 %v5234
        %5333 = vmatprep.subr.mxu0 0.0
        %5334 = vmatpush1.msra.mxu0 %v5233
        %5335 = vmatprep.subr.mxu0 0.0
        %5336 = vmatpush1.msra.mxu0 %v5232
        %5337 = vmatprep.subr.mxu0 0.0
        %5338 = vmatpush1.msra.mxu0 %v5231
        %5339 = vmatprep.subr.mxu0 0.0
        %5340 = vmatpush1.msra.mxu0 %v5230
        %5341 = vmatprep.subr.mxu0 0.0
        %5342 = vmatpush1.msra.mxu0 %v5229
        %5343 = vmatprep.subr.mxu0 0.0
        %5344 = vmatpush1.msra.mxu0 %v5228
        %5345 = vmatprep.subr.mxu0 0.0
        %5346 = vmatpush1.msra.mxu0 %v5227
        %5347 = vmatprep.subr.mxu0 0.0
        %5348 = vmatpush1.msra.mxu0 %v5226
        %5349 = vmatprep.subr.mxu0 0.0
        %5350 = vmatpush1.msra.mxu0 %v5225
        %5351 = vmatprep.subr.mxu0 0.0
        %5352 = vmatpush1.msra.mxu0 %v5224
        %5353 = vmatprep.subr.mxu0 0.0
        %5354 = vmatpush1.msra.mxu0 %v5223
        %5355 = vmatprep.subr.mxu0 0.0
        %5356 = vmatpush1.msra.mxu0 %v5222
        %5357 = vmatprep.subr.mxu0 0.0
        %5358 = vmatpush2.msra.mxu0 %v5253
        %5359 = vmatprep.subr.mxu0 0.0
        %5360 = vmatpush2.msra.mxu0 %v5252
        %5361 = vmatprep.subr.mxu0 0.0
        %5362 = vmatpush2.msra.mxu0 %v5251
        %5363 = vmatprep.subr.mxu0 0.0
        %5364 = vmatpush2.msra.mxu0 %v5250
        %5365 = vmatprep.subr.mxu0 0.0
        %5366 = vmatpush2.msra.mxu0 %v5249
        %5367 = vmatprep.subr.mxu0 0.0
        %5368 = vmatpush2.msra.mxu0 %v5248
        %5369 = vmatprep.subr.mxu0 0.0
        %5370 = vmatpush2.msra.mxu0 %v5247
        %5371 = vmatprep.subr.mxu0 0.0
        %5372 = vmatpush2.msra.mxu0 %v5246
        %5373 = vmatprep.subr.mxu0 0.0
        %5374 = vmatpush2.msra.mxu0 %v5245
        %5375 = vmatprep.subr.mxu0 0.0
        %5376 = vmatpush2.msra.mxu0 %v5244
        %5377 = vmatprep.subr.mxu0 0.0
        %5378 = vmatpush2.msra.mxu0 %v5243
        %5379 = vmatprep.subr.mxu0 0.0
        %5380 = vmatpush2.msra.mxu0 %v5242
        %5381 = vmatprep.subr.mxu0 0.0
        %5382 = vmatpush2.msra.mxu0 %v5241
        %5383 = vmatprep.subr.mxu0 0.0
        %5384 = vmatpush2.msra.mxu0 %v5240
        %5385 = vmatprep.subr.mxu0 0.0
        %5386 = vmatpush2.msra.mxu0 %v5239
        %5387 = vmatprep.subr.mxu0 0.0
        %5388 = vmatpush2.msra.mxu0 %v5238
        %5389 = vmatprep.mubr.f32.mxu0 %v5189
        %5390 = vmatmul.mubr.f32.gmra.mxu0 %v5188
        %v5391 = vpop.f32.mrf.mxu0
        %v5392 = vadd.f32 %v5322, %v5391
        %v5393 = vpop.f32.mrf.mxu0
        %5394 = vdwg.mxu0
        %5395 = vst [vmem:[%s432] sm:$0x1] %v5392
        %s5396 = sand.u32 %s313, 1
        %s5397 = scalar_lea.sflag [#allocation3], %s5396
        %s5398 = sand.u32 %s313, 1
        %s5399 = scalar_lea.vmem [#allocation2], %s5398
        // Predicated region
        $region73: #{forward.1} parent=71 // pred_check
          %p5400 = pneg %p323
        $region74: #{forward.1} parent=71 // pred_check_branch
          %5402 = sbr.rel (%p5400) target = $region76
        $region75: #{forward.1} parent=71 // pred_region
          %s5404 = ssub.s32 16, 16
          %5405 = vsyncadd %s5397, %s5404
          %s5406 = smul.addr %s27, 16
          %s5407 = scalar_lea.hbm %s13, %s5406
          %s5409 = sshll.u32 %s5399, 4
          %s5410 = int_to_ptr.vmem [resolvable:$true] %s5409
          %5412 = dma.vmem_to_hbm [thread:$0]  %s5410, 16, %s5407, %s5397
        $region76: #{forward.1} parent=71 // pred_fallthru
          _
      $region72: #{forward.1} parent=5 // pred_fallthru
        _
      %p5413 = scmp.le.s32.totalorder 2, %s22
      // Predicated region
      $region77: #{forward.1} parent=5 // pred_check
        %p5414 = pneg %p5413
      $region78: #{forward.1} parent=5 // pred_check_branch
        %5416 = sbr.rel (%p5414) target = $region80
      $region79: #{forward.1} parent=5 // pred_region
        %s5417 = ssub.s32 %s22, 2
        // Predicated region
        $region81: #{forward.1} parent=79 // pred_check
          %p5418 = pneg %p329
        $region82: #{forward.1} parent=79 // pred_check_branch
          %5420 = sbr.rel (%p5418) target = $region84
        $region83: #{forward.1} parent=79 // pred_region
          %s5421 = sand.u32 %s314, 1
          %s5422 = scalar_lea.sflag [#allocation3], %s5421
          %s5423 = sand.u32 %s314, 1
          %s5424 = scalar_lea.vmem [#allocation2], %s5423
          %5425 = dma.done %s5422, 16
        $region84: #{forward.1} parent=79 // pred_fallthru
          _
      $region80: #{forward.1} parent=5 // pred_fallthru
        _
    $region6: #{forward.1} parent=1 // loop_footer
      %s26 = sadd.s32 1, %s22
    $region7: #{forward.1} parent=1 // loop_footer_branch
      %21 = sbr.rel target = $region3
    $region8: #{forward.1} parent=1 // loop_exit
      _
    %5426 = vsyncpa [#allocation3], 1
    %s5427 = scalar_lea.sflag [#allocation3], 1
    %5428 = vsyncpa %s5427, 1

</llo_original>
